<compile_context>
chip_gen: v6e
topology: v6e:2x2x1
jax: 0.10.0
libtpu: 0.0.40
codegen_flags: <defaults>
</compile_context>

<pallas_src>
import functools

import jax
import jax.numpy as jnp
from jax.experimental import pallas as pl
from jax.experimental.pallas import tpu as pltpu


def _erf_poly(x):
    # Abramowitz & Stegun 7.1.26 rational approximation, |abs err| <= 1.5e-7.
    # Uses only exp / mul / add / select -> safe for Mosaic lowering.
    a1 = jnp.float32(0.254829592)
    a2 = jnp.float32(-0.284496736)
    a3 = jnp.float32(1.421413741)
    a4 = jnp.float32(-1.453152027)
    a5 = jnp.float32(1.061405429)
    p = jnp.float32(0.3275911)
    ax = jnp.abs(x)
    t = 1.0 / (1.0 + p * ax)
    poly = ((((a5 * t + a4) * t + a3) * t + a2) * t + a1) * t
    y = 1.0 - poly * jnp.exp(-ax * ax)
    return jnp.where(x >= 0, y, -y)


def _gelu_exact(x):
    # PyTorch nn.GELU() default = exact erf-based GELU (computed in f32).
    inv_sqrt2 = jnp.float32(0.7071067811865476)
    return 0.5 * x * (1.0 + _erf_poly(x * inv_sqrt2))


def _round_up(x, m):
    return (x + m - 1) // m * m


def decoder_kernel(x_ref, w1_ref, b1_ref, w2_ref, b2_ref, w3_ref, b3_ref,
                   o_ref, h2_ref):
    # Layers 1-2 only once per batch tile (first out-feature tile).
    @pl.when(pl.program_id(1) == 0)
    def _():
        x = x_ref[...]
        h1 = jnp.dot(x, w1_ref[...],
                     preferred_element_type=jnp.float32) + b1_ref[...]
        h1 = _gelu_exact(h1).astype(jnp.bfloat16)
        h2 = jnp.dot(h1, w2_ref[...],
                     preferred_element_type=jnp.float32) + b2_ref[...]
        h2_ref[...] = _gelu_exact(h2).astype(jnp.bfloat16)

    # Hot path: stream one (1024, TN) slice of w3 per grid step.
    h3 = jnp.dot(h2_ref[...], w3_ref[...],
                 preferred_element_type=jnp.float32) + b3_ref[...]
    o_ref[...] = jax.nn.sigmoid(h3)


def image_decoder_forward(x, params, img_size, *, tb=128, tn=2048):
    """x: (B, embedding_dim) float32 -> (B, 3, H, W) float32."""
    w1, b1, w2, b2, w3, b3 = params
    B, K0 = x.shape
    H1 = w1.shape[1]
    H2 = w2.shape[1]
    OUT = w3.shape[1]

    # ---- tile sizes & padding (TB mult. of 16, TN mult. of 128) ---------
    B_pad = _round_up(max(B, 16), 16)
    TB = min(tb, B_pad)
    B_pad = _round_up(B_pad, TB)

    TN = min(tn, _round_up(OUT, 128))
    OUT_pad = _round_up(OUT, TN)

    # ---- dtype: bf16 weights/activations, f32 accum/bias/output ---------
    xb = jnp.pad(x.astype(jnp.bfloat16), ((0, B_pad - B), (0, 0)))
    w1b = w1.astype(jnp.bfloat16)
    w2b = w2.astype(jnp.bfloat16)
    w3b = jnp.pad(w3.astype(jnp.bfloat16), ((0, 0), (0, OUT_pad - OUT)))
    b1f = b1.astype(jnp.float32)
    b2f = b2.astype(jnp.float32)
    b3f = jnp.pad(b3.astype(jnp.float32), ((0, 0), (0, OUT_pad - OUT)))

    grid = (B_pad // TB, OUT_pad // TN)

    flops = 2 * B_pad * (K0 * H1 + H1 * H2 + H2 * OUT_pad)
    transcendentals = B_pad * (H1 + H2 + OUT_pad)
    bytes_accessed = (
        xb.size * 2 + w1b.size * 2 + w2b.size * 2
        + grid[0] * w3b.size * 2                      # w3 re-read per batch tile
        + (b1f.size + b2f.size + b3f.size) * 4
        + B_pad * OUT_pad * 4                         # f32 output
    )

    out_flat = pl.pallas_call(
        decoder_kernel,
        out_shape=jax.ShapeDtypeStruct((B_pad, OUT_pad), jnp.float32),
        grid_spec=pltpu.PrefetchScalarGridSpec(
            num_scalar_prefetch=0,
            grid=grid,
            in_specs=[
                pl.BlockSpec((TB, K0), lambda i, j: (i, 0)),   # x  (per batch tile)
                pl.BlockSpec((K0, H1), lambda i, j: (0, 0)),   # w1 (resident)
                pl.BlockSpec((1, H1), lambda i, j: (0, 0)),    # b1 (resident)
                pl.BlockSpec((H1, H2), lambda i, j: (0, 0)),   # w2 (resident)
                pl.BlockSpec((1, H2), lambda i, j: (0, 0)),    # b2 (resident)
                pl.BlockSpec((H2, TN), lambda i, j: (0, j)),   # w3 (streamed over j)
                pl.BlockSpec((1, TN), lambda i, j: (0, j)),    # b3 (streamed over j)
            ],
            out_specs=pl.BlockSpec((TB, TN), lambda i, j: (i, j)),
            scratch_shapes=[pltpu.VMEM((TB, H2), jnp.bfloat16)],
        ),
        compiler_params=pltpu.CompilerParams(
            dimension_semantics=("parallel", "arbitrary"),
            vmem_limit_bytes=32 * 1024 * 1024,
        ),
        cost_estimate=pl.CostEstimate(
            flops=flops,
            transcendentals=transcendentals,
            bytes_accessed=bytes_accessed,
        ),
    )(xb, w1b, b1f, w2b, b2f, w3b, b3f)

    # Slice off padding; matches PyTorch x.view(-1, 3, H, W) on row-major data.
    out = out_flat[:B, :OUT]
    return out.reshape(-1, 3, img_size[0], img_size[1])


def init_params(key, embedding_dim, img_size):
    """Deterministic synthetic init (shapes match the PyTorch module;
    weights stored as (in_features, out_features) = W_pt.T)."""
    h1, h2 = 512, 1024
    out_dim = img_size[0] * img_size[1] * 3
    k = jax.random.split(key, 6)
    scale = 0.02
    w1 = scale * jax.random.normal(k[0], (embedding_dim, h1), jnp.float32)
    b1 = scale * jax.random.normal(k[1], (1, h1), jnp.float32)
    w2 = scale * jax.random.normal(k[2], (h1, h2), jnp.float32)
    b2 = scale * jax.random.normal(k[3], (1, h2), jnp.float32)
    w3 = scale * jax.random.normal(k[4], (h2, out_dim), jnp.float32)
    b3 = scale * jax.random.normal(k[5], (1, out_dim), jnp.float32)
    return (w1, b1, w2, b2, w3, b3)


def reference_forward(x, params, img_size):
    """Pure-JAX reference following the same bf16-weight / f32-accum recipe
    as the kernel (PyTorch semantics modulo the intentional bf16 cast)."""
    w1, b1, w2, b2, w3, b3 = params
    h = jnp.dot(x.astype(jnp.bfloat16), w1.astype(jnp.bfloat16),
                preferred_element_type=jnp.float32) + b1
    h = _gelu_exact(h).astype(jnp.bfloat16)
    h = jnp.dot(h, w2.astype(jnp.bfloat16),
                preferred_element_type=jnp.float32) + b2
    h = _gelu_exact(h).astype(jnp.bfloat16)
    o = jnp.dot(h, w3.astype(jnp.bfloat16),
                preferred_element_type=jnp.float32) + b3
    o = jax.nn.sigmoid(o)
    return o.reshape(-1, 3, img_size[0], img_size[1])


if __name__ == "__main__":
    # Small shapes consistent with the module: embedding_dim=32, img_size=(16,16).
    batch = 2
    embedding_dim = 32
    img_size = (16, 16)

    key = jax.random.PRNGKey(0)
    kx, kp = jax.random.split(key)
    x = jax.random.normal(kx, (batch, embedding_dim), jnp.float32)
    params = init_params(kp, embedding_dim, img_size)

    fwd = jax.jit(functools.partial(image_decoder_forward, img_size=img_size))
    out = jax.block_until_ready(fwd(x, params))

    assert out.shape == (batch, 3, img_size[0], img_size[1]), out.shape

    ref = reference_forward(x, params, img_size)
    # bf16 weights/activations => relaxed tolerance vs the exact-f32 module.
    assert jnp.allclose(out, ref, atol=2e-2, rtol=2e-2), "mismatch vs reference"

    print("KERNEL_OK")
</pallas_src>

<mosaic_0001>
module attributes {stable_mosaic.version = 11 : i64} {
  func.func @decoder_kernel(%arg0: i32, %arg1: i32, %arg2: memref<16x32xbf16, #tpu.memory_space<vmem>>, %arg3: memref<32x512xbf16, #tpu.memory_space<vmem>>, %arg4: memref<1x512xf32, #tpu.memory_space<vmem>>, %arg5: memref<512x1024xbf16, #tpu.memory_space<vmem>>, %arg6: memref<1x1024xf32, #tpu.memory_space<vmem>>, %arg7: memref<1024x768xbf16, #tpu.memory_space<vmem>>, %arg8: memref<1x768xf32, #tpu.memory_space<vmem>>, %arg9: memref<16x768xf32, #tpu.memory_space<vmem>>, %arg10: memref<16x1024xbf16, #tpu.memory_space<vmem>>) attributes {dimension_semantics = [#tpu.dimension_semantics<parallel>, #tpu.dimension_semantics<arbitrary>], iteration_bounds = array<i64: 1, 1>, scalar_prefetch = 0 : i64, scratch_operands = 1 : i64, tpu.core_type = #tpu.core_type<tc>, window_params = [{transform_indices = @transform_0, window_bounds = array<i64: 16, 32>}, {pipeline_mode = #tpu.pipeline_mode<synchronous>, transform_indices = @transform_1, window_bounds = array<i64: 32, 512>}, {pipeline_mode = #tpu.pipeline_mode<synchronous>, transform_indices = @transform_2, window_bounds = array<i64: 1, 512>}, {pipeline_mode = #tpu.pipeline_mode<synchronous>, transform_indices = @transform_3, window_bounds = array<i64: 512, 1024>}, {pipeline_mode = #tpu.pipeline_mode<synchronous>, transform_indices = @transform_4, window_bounds = array<i64: 1, 1024>}, {transform_indices = @transform_5, window_bounds = array<i64: 1024, 768>}, {transform_indices = @transform_6, window_bounds = array<i64: 1, 768>}, {transform_indices = @transform_7, window_bounds = array<i64: 16, 768>}]} {
    %c0_i32 = arith.constant 0 : i32
    %0 = arith.cmpi eq, %arg1, %c0_i32 : i32
    %1 = arith.extui %0 : i1 to i32
    %c0_i32_0 = arith.constant 0 : i32
    %2 = arith.cmpi ne, %1, %c0_i32_0 : i32
    scf.if %2 {
      %c0_9 = arith.constant 0 : index
      %c0_10 = arith.constant 0 : index
      %15 = vector.load %arg2[%c0_9, %c0_10] : memref<16x32xbf16, #tpu.memory_space<vmem>>, vector<16x32xbf16>
      %c0_11 = arith.constant 0 : index
      %c0_12 = arith.constant 0 : index
      %16 = vector.load %arg3[%c0_11, %c0_12] : memref<32x512xbf16, #tpu.memory_space<vmem>>, vector<32x512xbf16>
      %cst_13 = arith.constant dense<0.000000e+00> : vector<16x512xf32>
      %17 = tpu.matmul %15, %16, %cst_13 {dimension_numbers = #tpu.dot_dimension_numbers<[1], [0], [0], [1], [0, 0, 1, 1], [], []>} : vector<16x32xbf16>, vector<32x512xbf16>, vector<16x512xf32> -> vector<16x512xf32>
      %c0_14 = arith.constant 0 : index
      %c0_15 = arith.constant 0 : index
      %18 = vector.load %arg4[%c0_14, %c0_15] : memref<1x512xf32, #tpu.memory_space<vmem>>, vector<1x512xf32>
      %19 = vector.broadcast %18 : vector<1x512xf32> to vector<16x512xf32>
      %20 = arith.addf %17, %19 : vector<16x512xf32>
      %cst_16 = arith.constant 5.000000e-01 : f32
      %21 = vector.broadcast %cst_16 : f32 to vector<16x512xf32>
      %22 = arith.mulf %21, %20 : vector<16x512xf32>
      %cst_17 = arith.constant 0.707106769 : f32
      %23 = vector.broadcast %cst_17 : f32 to vector<16x512xf32>
      %24 = arith.mulf %20, %23 : vector<16x512xf32>
      %25 = math.absf %24 : vector<16x512xf32>
      %cst_18 = arith.constant 0.327591091 : f32
      %26 = vector.broadcast %cst_18 : f32 to vector<16x512xf32>
      %27 = arith.mulf %26, %25 : vector<16x512xf32>
      %cst_19 = arith.constant 1.000000e+00 : f32
      %28 = vector.broadcast %cst_19 : f32 to vector<16x512xf32>
      %29 = arith.addf %28, %27 : vector<16x512xf32>
      %cst_20 = arith.constant 1.000000e+00 : f32
      %30 = vector.broadcast %cst_20 : f32 to vector<16x512xf32>
      %31 = arith.divf %30, %29 : vector<16x512xf32>
      %cst_21 = arith.constant 1.06140542 : f32
      %32 = vector.broadcast %cst_21 : f32 to vector<16x512xf32>
      %33 = arith.mulf %32, %31 : vector<16x512xf32>
      %cst_22 = arith.constant -1.45315206 : f32
      %34 = vector.broadcast %cst_22 : f32 to vector<16x512xf32>
      %35 = arith.addf %33, %34 : vector<16x512xf32>
      %36 = arith.mulf %35, %31 : vector<16x512xf32>
      %cst_23 = arith.constant 1.42141378 : f32
      %37 = vector.broadcast %cst_23 : f32 to vector<16x512xf32>
      %38 = arith.addf %36, %37 : vector<16x512xf32>
      %39 = arith.mulf %38, %31 : vector<16x512xf32>
      %cst_24 = arith.constant -0.284496725 : f32
      %40 = vector.broadcast %cst_24 : f32 to vector<16x512xf32>
      %41 = arith.addf %39, %40 : vector<16x512xf32>
      %42 = arith.mulf %41, %31 : vector<16x512xf32>
      %cst_25 = arith.constant 0.254829586 : f32
      %43 = vector.broadcast %cst_25 : f32 to vector<16x512xf32>
      %44 = arith.addf %42, %43 : vector<16x512xf32>
      %45 = arith.mulf %44, %31 : vector<16x512xf32>
      %cst_26 = arith.constant 0.000000e+00 : f32
      %46 = vector.broadcast %cst_26 : f32 to vector<16x512xf32>
      %47 = arith.subf %46, %25 : vector<16x512xf32>
      %48 = arith.mulf %47, %25 : vector<16x512xf32>
      %49 = math.exp %48 : vector<16x512xf32>
      %50 = arith.mulf %45, %49 : vector<16x512xf32>
      %cst_27 = arith.constant 1.000000e+00 : f32
      %51 = vector.broadcast %cst_27 : f32 to vector<16x512xf32>
      %52 = arith.subf %51, %50 : vector<16x512xf32>
      %cst_28 = arith.constant 0.000000e+00 : f32
      %53 = vector.broadcast %cst_28 : f32 to vector<16x512xf32>
      %54 = arith.cmpf oge, %24, %53 : vector<16x512xf32>
      %cst_29 = arith.constant 0.000000e+00 : f32
      %55 = vector.broadcast %cst_29 : f32 to vector<16x512xf32>
      %56 = arith.subf %55, %52 : vector<16x512xf32>
      %57 = arith.select %54, %52, %56 : vector<16x512xi1>, vector<16x512xf32>
      %cst_30 = arith.constant 1.000000e+00 : f32
      %58 = vector.broadcast %cst_30 : f32 to vector<16x512xf32>
      %59 = arith.addf %58, %57 : vector<16x512xf32>
      %60 = arith.mulf %22, %59 : vector<16x512xf32>
      %61 = arith.truncf %60 : vector<16x512xf32> to vector<16x512xbf16>
      %c0_31 = arith.constant 0 : index
      %c0_32 = arith.constant 0 : index
      %62 = vector.load %arg5[%c0_31, %c0_32] : memref<512x1024xbf16, #tpu.memory_space<vmem>>, vector<512x1024xbf16>
      %cst_33 = arith.constant dense<0.000000e+00> : vector<16x1024xf32>
      %63 = tpu.matmul %61, %62, %cst_33 {dimension_numbers = #tpu.dot_dimension_numbers<[1], [0], [0], [1], [0, 0, 1, 1], [], []>} : vector<16x512xbf16>, vector<512x1024xbf16>, vector<16x1024xf32> -> vector<16x1024xf32>
      %c0_34 = arith.constant 0 : index
      %c0_35 = arith.constant 0 : index
      %64 = vector.load %arg6[%c0_34, %c0_35] : memref<1x1024xf32, #tpu.memory_space<vmem>>, vector<1x1024xf32>
      %65 = vector.broadcast %64 : vector<1x1024xf32> to vector<16x1024xf32>
      %66 = arith.addf %63, %65 : vector<16x1024xf32>
      %cst_36 = arith.constant 5.000000e-01 : f32
      %67 = vector.broadcast %cst_36 : f32 to vector<16x1024xf32>
      %68 = arith.mulf %67, %66 : vector<16x1024xf32>
      %cst_37 = arith.constant 0.707106769 : f32
      %69 = vector.broadcast %cst_37 : f32 to vector<16x1024xf32>
      %70 = arith.mulf %66, %69 : vector<16x1024xf32>
      %71 = math.absf %70 : vector<16x1024xf32>
      %cst_38 = arith.constant 0.327591091 : f32
      %72 = vector.broadcast %cst_38 : f32 to vector<16x1024xf32>
      %73 = arith.mulf %72, %71 : vector<16x1024xf32>
      %cst_39 = arith.constant 1.000000e+00 : f32
      %74 = vector.broadcast %cst_39 : f32 to vector<16x1024xf32>
      %75 = arith.addf %74, %73 : vector<16x1024xf32>
      %cst_40 = arith.constant 1.000000e+00 : f32
      %76 = vector.broadcast %cst_40 : f32 to vector<16x1024xf32>
      %77 = arith.divf %76, %75 : vector<16x1024xf32>
      %cst_41 = arith.constant 1.06140542 : f32
      %78 = vector.broadcast %cst_41 : f32 to vector<16x1024xf32>
      %79 = arith.mulf %78, %77 : vector<16x1024xf32>
      %cst_42 = arith.constant -1.45315206 : f32
      %80 = vector.broadcast %cst_42 : f32 to vector<16x1024xf32>
      %81 = arith.addf %79, %80 : vector<16x1024xf32>
      %82 = arith.mulf %81, %77 : vector<16x1024xf32>
      %cst_43 = arith.constant 1.42141378 : f32
      %83 = vector.broadcast %cst_43 : f32 to vector<16x1024xf32>
      %84 = arith.addf %82, %83 : vector<16x1024xf32>
      %85 = arith.mulf %84, %77 : vector<16x1024xf32>
      %cst_44 = arith.constant -0.284496725 : f32
      %86 = vector.broadcast %cst_44 : f32 to vector<16x1024xf32>
      %87 = arith.addf %85, %86 : vector<16x1024xf32>
      %88 = arith.mulf %87, %77 : vector<16x1024xf32>
      %cst_45 = arith.constant 0.254829586 : f32
      %89 = vector.broadcast %cst_45 : f32 to vector<16x1024xf32>
      %90 = arith.addf %88, %89 : vector<16x1024xf32>
      %91 = arith.mulf %90, %77 : vector<16x1024xf32>
      %cst_46 = arith.constant 0.000000e+00 : f32
      %92 = vector.broadcast %cst_46 : f32 to vector<16x1024xf32>
      %93 = arith.subf %92, %71 : vector<16x1024xf32>
      %94 = arith.mulf %93, %71 : vector<16x1024xf32>
      %95 = math.exp %94 : vector<16x1024xf32>
      %96 = arith.mulf %91, %95 : vector<16x1024xf32>
      %cst_47 = arith.constant 1.000000e+00 : f32
      %97 = vector.broadcast %cst_47 : f32 to vector<16x1024xf32>
      %98 = arith.subf %97, %96 : vector<16x1024xf32>
      %cst_48 = arith.constant 0.000000e+00 : f32
      %99 = vector.broadcast %cst_48 : f32 to vector<16x1024xf32>
      %100 = arith.cmpf oge, %70, %99 : vector<16x1024xf32>
      %cst_49 = arith.constant 0.000000e+00 : f32
      %101 = vector.broadcast %cst_49 : f32 to vector<16x1024xf32>
      %102 = arith.subf %101, %98 : vector<16x1024xf32>
      %103 = arith.select %100, %98, %102 : vector<16x1024xi1>, vector<16x1024xf32>
      %cst_50 = arith.constant 1.000000e+00 : f32
      %104 = vector.broadcast %cst_50 : f32 to vector<16x1024xf32>
      %105 = arith.addf %104, %103 : vector<16x1024xf32>
      %106 = arith.mulf %68, %105 : vector<16x1024xf32>
      %107 = arith.truncf %106 : vector<16x1024xf32> to vector<16x1024xbf16>
      %c0_51 = arith.constant 0 : index
      %c0_52 = arith.constant 0 : index
      %108 = vector.load %arg10[%c0_51, %c0_52] : memref<16x1024xbf16, #tpu.memory_space<vmem>>, vector<16x1024xbf16>
      tpu.vector_store %arg10[%c0_51, %c0_52], %107 {strides = array<i32>} : memref<16x1024xbf16, #tpu.memory_space<vmem>>, vector<16x1024xbf16>,
    } else {
    }
    %c0 = arith.constant 0 : index
    %c0_1 = arith.constant 0 : index
    %3 = vector.load %arg10[%c0, %c0_1] : memref<16x1024xbf16, #tpu.memory_space<vmem>>, vector<16x1024xbf16>
    %c0_2 = arith.constant 0 : index
    %c0_3 = arith.constant 0 : index
    %4 = vector.load %arg7[%c0_2, %c0_3] : memref<1024x768xbf16, #tpu.memory_space<vmem>>, vector<1024x768xbf16>
    %cst = arith.constant dense<0.000000e+00> : vector<16x768xf32>
    %5 = tpu.matmul %3, %4, %cst {dimension_numbers = #tpu.dot_dimension_numbers<[1], [0], [0], [1], [0, 0, 1, 1], [], []>} : vector<16x1024xbf16>, vector<1024x768xbf16>, vector<16x768xf32> -> vector<16x768xf32>
    %c0_4 = arith.constant 0 : index
    %c0_5 = arith.constant 0 : index
    %6 = vector.load %arg8[%c0_4, %c0_5] : memref<1x768xf32, #tpu.memory_space<vmem>>, vector<1x768xf32>
    %7 = vector.broadcast %6 : vector<1x768xf32> to vector<16x768xf32>
    %8 = arith.addf %5, %7 : vector<16x768xf32>
    %9 = arith.negf %8 : vector<16x768xf32>
    %10 = math.exp %9 : vector<16x768xf32>
    %cst_6 = arith.constant 1.000000e+00 : f32
    %11 = vector.broadcast %cst_6 : f32 to vector<16x768xf32>
    %12 = arith.addf %11, %10 : vector<16x768xf32>
    %13 = arith.divf %11, %12 : vector<16x768xf32>
    %c0_7 = arith.constant 0 : index
    %c0_8 = arith.constant 0 : index
    %14 = vector.load %arg9[%c0_7, %c0_8] : memref<16x768xf32, #tpu.memory_space<vmem>>, vector<16x768xf32>
    tpu.vector_store %arg9[%c0_7, %c0_8], %13 {strides = array<i32>} : memref<16x768xf32, #tpu.memory_space<vmem>>, vector<16x768xf32>,
    return
  }
  func.func @transform_0(%arg0: i32, %arg1: i32) -> (i32, i32) {
    %c0_i32 = arith.constant 0 : i32
    %c0_i32_0 = arith.constant 0 : i32
    return %arg0, %c0_i32 : i32, i32
  }
  func.func @transform_1(%arg0: i32, %arg1: i32) -> (i32, i32) {
    %c0_i32 = arith.constant 0 : i32
    %c0_i32_0 = arith.constant 0 : i32
    %c0_i32_1 = arith.constant 0 : i32
    return %c0_i32, %c0_i32_0 : i32, i32
  }
  func.func @transform_2(%arg0: i32, %arg1: i32) -> (i32, i32) {
    %c0_i32 = arith.constant 0 : i32
    %c0_i32_0 = arith.constant 0 : i32
    %c0_i32_1 = arith.constant 0 : i32
    return %c0_i32, %c0_i32_0 : i32, i32
  }
  func.func @transform_3(%arg0: i32, %arg1: i32) -> (i32, i32) {
    %c0_i32 = arith.constant 0 : i32
    %c0_i32_0 = arith.constant 0 : i32
    %c0_i32_1 = arith.constant 0 : i32
    return %c0_i32, %c0_i32_0 : i32, i32
  }
  func.func @transform_4(%arg0: i32, %arg1: i32) -> (i32, i32) {
    %c0_i32 = arith.constant 0 : i32
    %c0_i32_0 = arith.constant 0 : i32
    %c0_i32_1 = arith.constant 0 : i32
    return %c0_i32, %c0_i32_0 : i32, i32
  }
  func.func @transform_5(%arg0: i32, %arg1: i32) -> (i32, i32) {
    %c0_i32 = arith.constant 0 : i32
    %c0_i32_0 = arith.constant 0 : i32
    return %c0_i32, %arg1 : i32, i32
  }
  func.func @transform_6(%arg0: i32, %arg1: i32) -> (i32, i32) {
    %c0_i32 = arith.constant 0 : i32
    %c0_i32_0 = arith.constant 0 : i32
    return %c0_i32, %arg1 : i32, i32
  }
  func.func @transform_7(%arg0: i32, %arg1: i32) -> (i32, i32) {
    %c0_i32 = arith.constant 0 : i32
    return %arg0, %arg1 : i32, i32
  }
}

</mosaic_0001>

<llo_original>
// kernel: image_decoder_forward.1
$region0: #{image_decoder_forward.1}
  #allocation0 [shape = 'u32[]', space=smem, size = 0x4, offset = 0x4, fixed_abs, tag = 'smem constant byte address 0x4 - core index']
  #allocation1 [shape = 'u32[144,128]{1,0:T(1,128)}', space=vmem, size = 0x12000, scoped, tag = 'internal scratch']
  #allocation2 [shape = 'bf16[16,1024]{1,0:T(8,128)(2,1)}', space=vmem, size = 0x8000, scoped, tag = 'scratch operand']
  %s0 = inlined_call_operand.vmem [shape: bf16[16,32], index: 0, kind: input, shape index: {}]
  %s1 = inlined_call_operand.vmem [shape: bf16[32,512], index: 1, kind: input, shape index: {}]
  %s2 = inlined_call_operand.vmem [shape: f32[1,512], index: 2, kind: input, shape index: {}]
  %s3 = inlined_call_operand.vmem [shape: bf16[512,1024], index: 3, kind: input, shape index: {}]
  %s4 = inlined_call_operand.vmem [shape: f32[1,1024], index: 4, kind: input, shape index: {}]
  %s5 = inlined_call_operand.vmem [shape: bf16[1024,768], index: 5, kind: input, shape index: {}]
  %s6 = inlined_call_operand.vmem [shape: f32[1,768], index: 6, kind: input, shape index: {}]
  %s7 = inlined_call_operand.vmem [shape: f32[16,768], index: 7, kind: output, shape index: {}]
  %s8 = sld [smem:[#allocation0]]
  $region42: #{image_decoder_forward.1} parent=0
    _
  %s10 = ssub.s32 1, %s8
  %s11 = scalar_select 0, %s10, %s8
  // Predicated region
  $region2: #{image_decoder_forward.1} parent=0 // pred_check
    _
  $region3: #{image_decoder_forward.1} parent=0 // pred_check_branch
    %13 = sbr.rel (0) target = $region5
  $region4: #{image_decoder_forward.1} parent=0 // pred_region
    _
  $region5: #{image_decoder_forward.1} parent=0 // pred_fallthru
    _
  // Predicated region
  $region6: #{image_decoder_forward.1} parent=0 // pred_check
    _
  $region7: #{image_decoder_forward.1} parent=0 // pred_check_branch
    %15 = sbr.rel (0) target = $region9
  $region8: #{image_decoder_forward.1} parent=0 // pred_region
    _
  $region9: #{image_decoder_forward.1} parent=0 // pred_fallthru
    _
  // Predicated region
  $region10: #{image_decoder_forward.1} parent=0 // pred_check
    _
  $region11: #{image_decoder_forward.1} parent=0 // pred_check_branch
    %17 = sbr.rel (0) target = $region13
  $region12: #{image_decoder_forward.1} parent=0 // pred_region
    _
  $region13: #{image_decoder_forward.1} parent=0 // pred_fallthru
    _
  // Predicated region
  $region14: #{image_decoder_forward.1} parent=0 // pred_check
    _
  $region15: #{image_decoder_forward.1} parent=0 // pred_check_branch
    %19 = sbr.rel (0) target = $region17
  $region16: #{image_decoder_forward.1} parent=0 // pred_region
    _
  $region17: #{image_decoder_forward.1} parent=0 // pred_fallthru
    _
  // Predicated region
  $region18: #{image_decoder_forward.1} parent=0 // pred_check
    _
  $region19: #{image_decoder_forward.1} parent=0 // pred_check_branch
    %21 = sbr.rel (0) target = $region21
  $region20: #{image_decoder_forward.1} parent=0 // pred_region
    _
  $region21: #{image_decoder_forward.1} parent=0 // pred_fallthru
    _
  // Predicated region
  $region22: #{image_decoder_forward.1} parent=0 // pred_check
    _
  $region23: #{image_decoder_forward.1} parent=0 // pred_check_branch
    %23 = sbr.rel (0) target = $region25
  $region24: #{image_decoder_forward.1} parent=0 // pred_region
    _
  $region25: #{image_decoder_forward.1} parent=0 // pred_fallthru
    _
  // Predicated region
  $region26: #{image_decoder_forward.1} parent=0 // pred_check
    _
  $region27: #{image_decoder_forward.1} parent=0 // pred_check_branch
    %25 = sbr.rel (0) target = $region29
  $region28: #{image_decoder_forward.1} parent=0 // pred_region
    _
  $region29: #{image_decoder_forward.1} parent=0 // pred_fallthru
    _
  %p27 = scmp.eq.s32.totalorder 0, 0
  // Predicated region
  $region30: #{image_decoder_forward.1} parent=0 // pred_check
    %p28 = pneg %p27
  $region31: #{image_decoder_forward.1} parent=0 // pred_check_branch
    %30 = sbr.rel (%p28) target = $region33
  $region32: #{image_decoder_forward.1} parent=0 // pred_region
    %v31 = vld [vmem:[%s0] sm:$0xf]
    %v32 = vld [vmem:[%s0 + $0x4] sm:$0xf]
    %v33 = vld [vmem:[%s1] sm:$0xff]
    %v34 = vld [vmem:[%s1 + $0x8] sm:$0xff]
    %v35 = vld [vmem:[%s1 + $0x10] sm:$0xff]
    %v36 = vld [vmem:[%s1 + $0x18] sm:$0xff]
    %v37 = vld [vmem:[%s1 + $0x20] sm:$0xff]
    %v38 = vld [vmem:[%s1 + $0x28] sm:$0xff]
    %v39 = vld [vmem:[%s1 + $0x30] sm:$0xff]
    %v40 = vld [vmem:[%s1 + $0x38] sm:$0xff]
    %v41 = vld [vmem:[%s2] sm:$0xf]
    %v43 = vlaneseq
    %v44 = vshrl.u32 %v43, 7
    %v45 = vsub.s32 0, %v44
    %v46 = vrot.slane %v41, %v45
    %v47 = vlaneseq
    %v48 = vshrl.u32 %v47, 7
    %v49 = vsub.s32 1, %v48
    %v50 = vrot.slane %v41, %v49
    %v51 = vlaneseq
    %v52 = vshrl.u32 %v51, 7
    %v53 = vsub.s32 2, %v52
    %v54 = vrot.slane %v41, %v53
    %v55 = vlaneseq
    %v56 = vshrl.u32 %v55, 7
    %v57 = vsub.s32 3, %v56
    %v58 = vrot.slane %v41, %v57
    %v65 = vunpack.c.l.b16 %v31
    %v66 = vunpack.c.l.b16 %v32
    %v67 = vpack.c.b16 %v66, %v65
    %v76 = vunpack.c.l.b16 %v33
    %v77 = vunpack.c.h.b16 %v33
    %v78 = vunpack.c.l.b16 %v34
    %v79 = vunpack.c.h.b16 %v34
    %v80 = vunpack.c.l.b16 %v35
    %v81 = vunpack.c.h.b16 %v35
    %v82 = vunpack.c.l.b16 %v36
    %v83 = vunpack.c.h.b16 %v36
    %v84 = vunpack.c.l.b16 %v37
    %v85 = vunpack.c.h.b16 %v37
    %v86 = vunpack.c.l.b16 %v38
    %v87 = vunpack.c.h.b16 %v38
    %v88 = vunpack.c.l.b16 %v39
    %v89 = vunpack.c.h.b16 %v39
    %v90 = vunpack.c.l.b16 %v40
    %v91 = vunpack.c.h.b16 %v40
    %v92 = vpack.c.b16 %v80, %v76
    %v93 = vpack.c.b16 %v81, %v77
    %v94 = vpack.c.b16 %v82, %v78
    %v95 = vpack.c.b16 %v83, %v79
    %v96 = vpack.c.b16 %v88, %v84
    %v97 = vpack.c.b16 %v89, %v85
    %v98 = vpack.c.b16 %v90, %v86
    %v99 = vpack.c.b16 %v91, %v87
    %vm108 = vcmask 261120
    %v110 = vsel %vm108, %v67, 0
    %112 = vmatprep.subr.bf16.mxu0 0
    %113 = vmatpush1.bf16.msra.mxu0 0
    %114 = vmatprep.subr.bf16.mxu0 0
    %115 = vmatpush1.bf16.msra.mxu0 0
    %116 = vmatprep.subr.bf16.mxu0 0
    %117 = vmatpush1.bf16.msra.mxu0 0
    %118 = vmatprep.subr.bf16.mxu0 0
    %119 = vmatpush1.bf16.msra.mxu0 0
    %120 = vmatprep.subr.bf16.mxu0 0
    %121 = vmatpush1.bf16.msra.mxu0 0
    %122 = vmatprep.subr.bf16.mxu0 0
    %123 = vmatpush1.bf16.msra.mxu0 0
    %124 = vmatprep.subr.bf16.mxu0 %v97
    %125 = vmatpush1.bf16.msra.mxu0 %v96
    %126 = vmatprep.subr.bf16.mxu0 %v93
    %127 = vmatpush1.bf16.msra.mxu0 %v92
    %128 = vmatprep.subr.bf16.mxu0 0
    %129 = vmatpush2.bf16.msra.mxu0 0
    %130 = vmatprep.subr.bf16.mxu0 0
    %131 = vmatpush2.bf16.msra.mxu0 0
    %132 = vmatprep.subr.bf16.mxu0 0
    %133 = vmatpush2.bf16.msra.mxu0 0
    %134 = vmatprep.subr.bf16.mxu0 0
    %135 = vmatpush2.bf16.msra.mxu0 0
    %136 = vmatprep.subr.bf16.mxu0 0
    %137 = vmatpush2.bf16.msra.mxu0 0
    %138 = vmatprep.subr.bf16.mxu0 0
    %139 = vmatpush2.bf16.msra.mxu0 0
    %140 = vmatprep.subr.bf16.mxu0 0
    %141 = vmatpush2.bf16.msra.mxu0 0
    %142 = vmatprep.subr.bf16.mxu0 0
    %143 = vmatpush2.bf16.msra.mxu0 0
    %144 = vmatprep.mubr.bf16.mxu0 0
    %145 = vmatmul.mubr.bf16.gmra.mxu0 %v110
    %v146 = vpop.f32.mrf.mxu0
    %v147 = vadd.f32 %v46, %v146
    %v148 = vpop.f32.mrf.mxu0
    %v149 = vadd.f32 %v50, %v148
    %v150 = vpop.f32.mrf.mxu0
    %v151 = vadd.f32 %v46, %v150
    %v152 = vpop.f32.mrf.mxu0
    %v153 = vadd.f32 %v50, %v152
    %154 = vdwg.mxu0
    %155 = vmatprep.subr.bf16.mxu0 0
    %156 = vmatpush1.bf16.msra.mxu0 0
    %157 = vmatprep.subr.bf16.mxu0 0
    %158 = vmatpush1.bf16.msra.mxu0 0
    %159 = vmatprep.subr.bf16.mxu0 0
    %160 = vmatpush1.bf16.msra.mxu0 0
    %161 = vmatprep.subr.bf16.mxu0 0
    %162 = vmatpush1.bf16.msra.mxu0 0
    %163 = vmatprep.subr.bf16.mxu0 0
    %164 = vmatpush1.bf16.msra.mxu0 0
    %165 = vmatprep.subr.bf16.mxu0 0
    %166 = vmatpush1.bf16.msra.mxu0 0
    %167 = vmatprep.subr.bf16.mxu0 %v99
    %168 = vmatpush1.bf16.msra.mxu0 %v98
    %169 = vmatprep.subr.bf16.mxu0 %v95
    %170 = vmatpush1.bf16.msra.mxu0 %v94
    %171 = vmatprep.subr.bf16.mxu0 0
    %172 = vmatpush2.bf16.msra.mxu0 0
    %173 = vmatprep.subr.bf16.mxu0 0
    %174 = vmatpush2.bf16.msra.mxu0 0
    %175 = vmatprep.subr.bf16.mxu0 0
    %176 = vmatpush2.bf16.msra.mxu0 0
    %177 = vmatprep.subr.bf16.mxu0 0
    %178 = vmatpush2.bf16.msra.mxu0 0
    %179 = vmatprep.subr.bf16.mxu0 0
    %180 = vmatpush2.bf16.msra.mxu0 0
    %181 = vmatprep.subr.bf16.mxu0 0
    %182 = vmatpush2.bf16.msra.mxu0 0
    %183 = vmatprep.subr.bf16.mxu0 0
    %184 = vmatpush2.bf16.msra.mxu0 0
    %185 = vmatprep.subr.bf16.mxu0 0
    %186 = vmatpush2.bf16.msra.mxu0 0
    %187 = vmatprep.mubr.bf16.mxu0 0
    %188 = vmatmul.mubr.bf16.gmra.mxu0 %v110
    %v189 = vpop.f32.mrf.mxu0
    %v190 = vadd.f32 %v54, %v189
    %v191 = vpop.f32.mrf.mxu0
    %v192 = vadd.f32 %v58, %v191
    %v193 = vpop.f32.mrf.mxu0
    %v194 = vadd.f32 %v54, %v193
    %v195 = vpop.f32.mrf.mxu0
    %v196 = vadd.f32 %v58, %v195
    %197 = vdwg.mxu0
    %v198 = vmul.f32 %v147, 0.5
    %v199 = vmul.f32 %v149, 0.5
    %v200 = vmul.f32 %v190, 0.5
    %v201 = vmul.f32 %v192, 0.5
    %v202 = vmul.f32 %v151, 0.5
    %v203 = vmul.f32 %v153, 0.5
    %v204 = vmul.f32 %v194, 0.5
    %v205 = vmul.f32 %v196, 0.5
    %v206 = vmul.f32 %v147, 0.70710677
    %v207 = vmul.f32 %v149, 0.70710677
    %v208 = vmul.f32 %v190, 0.70710677
    %v209 = vmul.f32 %v192, 0.70710677
    %v210 = vmul.f32 %v151, 0.70710677
    %v211 = vmul.f32 %v153, 0.70710677
    %v212 = vmul.f32 %v194, 0.70710677
    %v213 = vmul.f32 %v196, 0.70710677
    %v214 = vand.u32 2147483647, %v206
    %v215 = vand.u32 2147483647, %v207
    %v216 = vand.u32 2147483647, %v208
    %v217 = vand.u32 2147483647, %v209
    %v218 = vand.u32 2147483647, %v210
    %v219 = vand.u32 2147483647, %v211
    %v220 = vand.u32 2147483647, %v212
    %v221 = vand.u32 2147483647, %v213
    %v222 = vmul.f32 %v214, 0.3275911
    %v223 = vmul.f32 %v215, 0.3275911
    %v224 = vmul.f32 %v216, 0.3275911
    %v225 = vmul.f32 %v217, 0.3275911
    %v226 = vmul.f32 %v218, 0.3275911
    %v227 = vmul.f32 %v219, 0.3275911
    %v228 = vmul.f32 %v220, 0.3275911
    %v229 = vmul.f32 %v221, 0.3275911
    %v230 = vadd.f32 %v222, 1.0
    %v231 = vadd.f32 %v223, 1.0
    %v232 = vadd.f32 %v224, 1.0
    %v233 = vadd.f32 %v225, 1.0
    %v234 = vadd.f32 %v226, 1.0
    %v235 = vadd.f32 %v227, 1.0
    %v236 = vadd.f32 %v228, 1.0
    %v237 = vadd.f32 %v229, 1.0
    %v238 = vrcp.pop %v230
    %v239 = vmul.f32 1.0, %v238
    %v240 = vrcp.pop %v231
    %v241 = vmul.f32 1.0, %v240
    %v242 = vrcp.pop %v232
    %v243 = vmul.f32 1.0, %v242
    %v244 = vrcp.pop %v233
    %v245 = vmul.f32 1.0, %v244
    %v246 = vrcp.pop %v234
    %v247 = vmul.f32 1.0, %v246
    %v248 = vrcp.pop %v235
    %v249 = vmul.f32 1.0, %v248
    %v250 = vrcp.pop %v236
    %v251 = vmul.f32 1.0, %v250
    %v252 = vrcp.pop %v237
    %v253 = vmul.f32 1.0, %v252
    %v254 = vmul.f32 %v239, 1.0614054
    %v255 = vmul.f32 %v241, 1.0614054
    %v256 = vmul.f32 %v243, 1.0614054
    %v257 = vmul.f32 %v245, 1.0614054
    %v258 = vmul.f32 %v247, 1.0614054
    %v259 = vmul.f32 %v249, 1.0614054
    %v260 = vmul.f32 %v251, 1.0614054
    %v261 = vmul.f32 %v253, 1.0614054
    %v262 = vadd.f32 %v254, -1.4531521
    %v263 = vadd.f32 %v255, -1.4531521
    %v264 = vadd.f32 %v256, -1.4531521
    %v265 = vadd.f32 %v257, -1.4531521
    %v266 = vadd.f32 %v258, -1.4531521
    %v267 = vadd.f32 %v259, -1.4531521
    %v268 = vadd.f32 %v260, -1.4531521
    %v269 = vadd.f32 %v261, -1.4531521
    %v270 = vmul.f32 %v262, %v239
    %v271 = vmul.f32 %v263, %v241
    %v272 = vmul.f32 %v264, %v243
    %v273 = vmul.f32 %v265, %v245
    %v274 = vmul.f32 %v266, %v247
    %v275 = vmul.f32 %v267, %v249
    %v276 = vmul.f32 %v268, %v251
    %v277 = vmul.f32 %v269, %v253
    %v278 = vadd.f32 %v270, 1.4214138
    %v279 = vadd.f32 %v271, 1.4214138
    %v280 = vadd.f32 %v272, 1.4214138
    %v281 = vadd.f32 %v273, 1.4214138
    %v282 = vadd.f32 %v274, 1.4214138
    %v283 = vadd.f32 %v275, 1.4214138
    %v284 = vadd.f32 %v276, 1.4214138
    %v285 = vadd.f32 %v277, 1.4214138
    %v286 = vmul.f32 %v278, %v239
    %v287 = vmul.f32 %v279, %v241
    %v288 = vmul.f32 %v280, %v243
    %v289 = vmul.f32 %v281, %v245
    %v290 = vmul.f32 %v282, %v247
    %v291 = vmul.f32 %v283, %v249
    %v292 = vmul.f32 %v284, %v251
    %v293 = vmul.f32 %v285, %v253
    %v294 = vadd.f32 %v286, -0.28449672
    %v295 = vadd.f32 %v287, -0.28449672
    %v296 = vadd.f32 %v288, -0.28449672
    %v297 = vadd.f32 %v289, -0.28449672
    %v298 = vadd.f32 %v290, -0.28449672
    %v299 = vadd.f32 %v291, -0.28449672
    %v300 = vadd.f32 %v292, -0.28449672
    %v301 = vadd.f32 %v293, -0.28449672
    %v302 = vmul.f32 %v294, %v239
    %v303 = vmul.f32 %v295, %v241
    %v304 = vmul.f32 %v296, %v243
    %v305 = vmul.f32 %v297, %v245
    %v306 = vmul.f32 %v298, %v247
    %v307 = vmul.f32 %v299, %v249
    %v308 = vmul.f32 %v300, %v251
    %v309 = vmul.f32 %v301, %v253
    %v310 = vadd.f32 %v302, 0.2548296
    %v311 = vadd.f32 %v303, 0.2548296
    %v312 = vadd.f32 %v304, 0.2548296
    %v313 = vadd.f32 %v305, 0.2548296
    %v314 = vadd.f32 %v306, 0.2548296
    %v315 = vadd.f32 %v307, 0.2548296
    %v316 = vadd.f32 %v308, 0.2548296
    %v317 = vadd.f32 %v309, 0.2548296
    %v318 = vmul.f32 %v310, %v239
    %v319 = vmul.f32 %v311, %v241
    %v320 = vmul.f32 %v312, %v243
    %v321 = vmul.f32 %v313, %v245
    %v322 = vmul.f32 %v314, %v247
    %v323 = vmul.f32 %v315, %v249
    %v324 = vmul.f32 %v316, %v251
    %v325 = vmul.f32 %v317, %v253
    %v326 = vsub.f32 0.0, %v214
    %v327 = vsub.f32 0.0, %v215
    %v328 = vsub.f32 0.0, %v216
    %v329 = vsub.f32 0.0, %v217
    %v330 = vsub.f32 0.0, %v218
    %v331 = vsub.f32 0.0, %v219
    %v332 = vsub.f32 0.0, %v220
    %v333 = vsub.f32 0.0, %v221
    %v334 = vmul.f32 %v326, %v214
    %v335 = vmul.f32 %v327, %v215
    %v336 = vmul.f32 %v328, %v216
    %v337 = vmul.f32 %v329, %v217
    %v338 = vmul.f32 %v330, %v218
    %v339 = vmul.f32 %v331, %v219
    %v340 = vmul.f32 %v332, %v220
    %v341 = vmul.f32 %v333, %v221
    %v342 = vmul.f32 %v334, 1.442695
    %v343 = vpow.pop %v342
    %v344 = vmul.f32 %v335, 1.442695
    %v345 = vpow.pop %v344
    %v346 = vmul.f32 %v336, 1.442695
    %v347 = vpow.pop %v346
    %v348 = vmul.f32 %v337, 1.442695
    %v349 = vpow.pop %v348
    %v350 = vmul.f32 %v338, 1.442695
    %v351 = vpow.pop %v350
    %v352 = vmul.f32 %v339, 1.442695
    %v353 = vpow.pop %v352
    %v354 = vmul.f32 %v340, 1.442695
    %v355 = vpow.pop %v354
    %v356 = vmul.f32 %v341, 1.442695
    %v357 = vpow.pop %v356
    %v358 = vmul.f32 %v318, %v343
    %v359 = vmul.f32 %v319, %v345
    %v360 = vmul.f32 %v320, %v347
    %v361 = vmul.f32 %v321, %v349
    %v362 = vmul.f32 %v322, %v351
    %v363 = vmul.f32 %v323, %v353
    %v364 = vmul.f32 %v324, %v355
    %v365 = vmul.f32 %v325, %v357
    %v366 = vsub.f32 1.0, %v358
    %v367 = vsub.f32 1.0, %v359
    %v368 = vsub.f32 1.0, %v360
    %v369 = vsub.f32 1.0, %v361
    %v370 = vsub.f32 1.0, %v362
    %v371 = vsub.f32 1.0, %v363
    %v372 = vsub.f32 1.0, %v364
    %v373 = vsub.f32 1.0, %v365
    %vm374 = vcmp.ge.f32.partialorder %v206, 0.0
    %vm375 = vcmp.ge.f32.partialorder %v207, 0.0
    %vm376 = vcmp.ge.f32.partialorder %v208, 0.0
    %vm377 = vcmp.ge.f32.partialorder %v209, 0.0
    %vm378 = vcmp.ge.f32.partialorder %v210, 0.0
    %vm379 = vcmp.ge.f32.partialorder %v211, 0.0
    %vm380 = vcmp.ge.f32.partialorder %v212, 0.0
    %vm381 = vcmp.ge.f32.partialorder %v213, 0.0
    %v382 = vsub.f32 0.0, %v366
    %v383 = vsub.f32 0.0, %v367
    %v384 = vsub.f32 0.0, %v368
    %v385 = vsub.f32 0.0, %v369
    %v386 = vsub.f32 0.0, %v370
    %v387 = vsub.f32 0.0, %v371
    %v388 = vsub.f32 0.0, %v372
    %v389 = vsub.f32 0.0, %v373
    %v390 = vsel %vm374, %v366, %v382
    %v391 = vsel %vm375, %v367, %v383
    %v392 = vsel %vm376, %v368, %v384
    %v393 = vsel %vm377, %v369, %v385
    %v394 = vsel %vm378, %v370, %v386
    %v395 = vsel %vm379, %v371, %v387
    %v396 = vsel %vm380, %v372, %v388
    %v397 = vsel %vm381, %v373, %v389
    %v398 = vadd.f32 %v390, 1.0
    %v399 = vadd.f32 %v391, 1.0
    %v400 = vadd.f32 %v392, 1.0
    %v401 = vadd.f32 %v393, 1.0
    %v402 = vadd.f32 %v394, 1.0
    %v403 = vadd.f32 %v395, 1.0
    %v404 = vadd.f32 %v396, 1.0
    %v405 = vadd.f32 %v397, 1.0
    %v406 = vmul.f32 %v198, %v398
    %v407 = vmul.f32 %v199, %v399
    %v408 = vmul.f32 %v200, %v400
    %v409 = vmul.f32 %v201, %v401
    %v410 = vmul.f32 %v202, %v402
    %v411 = vmul.f32 %v203, %v403
    %v412 = vmul.f32 %v204, %v404
    %v413 = vmul.f32 %v205, %v405
    %v414 = vpack.c.bf16 %v410, %v406
    %v415 = vpack.c.bf16 %v411, %v407
    %v416 = vpack.c.bf16 %v412, %v408
    %v417 = vpack.c.bf16 %v413, %v409
    %v418 = vld [vmem:[%s3] sm:$0xff]
    %v419 = vld [vmem:[%s3 + $0x8] sm:$0xff]
    %v420 = vld [vmem:[%s3 + $0x10] sm:$0xff]
    %v421 = vld [vmem:[%s3 + $0x18] sm:$0xff]
    %v422 = vld [vmem:[%s3 + $0x20] sm:$0xff]
    %v423 = vld [vmem:[%s3 + $0x28] sm:$0xff]
    %v424 = vld [vmem:[%s3 + $0x30] sm:$0xff]
    %v425 = vld [vmem:[%s3 + $0x38] sm:$0xff]
    %v426 = vld [vmem:[%s3 + $0x40] sm:$0xff]
    %v427 = vld [vmem:[%s3 + $0x48] sm:$0xff]
    %v428 = vld [vmem:[%s3 + $0x50] sm:$0xff]
    %v429 = vld [vmem:[%s3 + $0x58] sm:$0xff]
    %v430 = vld [vmem:[%s3 + $0x60] sm:$0xff]
    %v431 = vld [vmem:[%s3 + $0x68] sm:$0xff]
    %v432 = vld [vmem:[%s3 + $0x70] sm:$0xff]
    %v433 = vld [vmem:[%s3 + $0x78] sm:$0xff]
    %v434 = vld [vmem:[%s3 + $0x80] sm:$0xff]
    %v435 = vld [vmem:[%s3 + $0x88] sm:$0xff]
    %v436 = vld [vmem:[%s3 + $0x90] sm:$0xff]
    %v437 = vld [vmem:[%s3 + $0x98] sm:$0xff]
    %v438 = vld [vmem:[%s3 + $0xa0] sm:$0xff]
    %v439 = vld [vmem:[%s3 + $0xa8] sm:$0xff]
    %v440 = vld [vmem:[%s3 + $0xb0] sm:$0xff]
    %v441 = vld [vmem:[%s3 + $0xb8] sm:$0xff]
    %v442 = vld [vmem:[%s3 + $0xc0] sm:$0xff]
    %v443 = vld [vmem:[%s3 + $0xc8] sm:$0xff]
    %v444 = vld [vmem:[%s3 + $0xd0] sm:$0xff]
    %v445 = vld [vmem:[%s3 + $0xd8] sm:$0xff]
    %v446 = vld [vmem:[%s3 + $0xe0] sm:$0xff]
    %v447 = vld [vmem:[%s3 + $0xe8] sm:$0xff]
    %v448 = vld [vmem:[%s3 + $0xf0] sm:$0xff]
    %v449 = vld [vmem:[%s3 + $0xf8] sm:$0xff]
    %v450 = vld [vmem:[%s3 + $0x100] sm:$0xff]
    %v451 = vld [vmem:[%s3 + $0x108] sm:$0xff]
    %v452 = vld [vmem:[%s3 + $0x110] sm:$0xff]
    %v453 = vld [vmem:[%s3 + $0x118] sm:$0xff]
    %v454 = vld [vmem:[%s3 + $0x120] sm:$0xff]
    %v455 = vld [vmem:[%s3 + $0x128] sm:$0xff]
    %v456 = vld [vmem:[%s3 + $0x130] sm:$0xff]
    %v457 = vld [vmem:[%s3 + $0x138] sm:$0xff]
    %v458 = vld [vmem:[%s3 + $0x140] sm:$0xff]
    %v459 = vld [vmem:[%s3 + $0x148] sm:$0xff]
    %v460 = vld [vmem:[%s3 + $0x150] sm:$0xff]
    %v461 = vld [vmem:[%s3 + $0x158] sm:$0xff]
    %v462 = vld [vmem:[%s3 + $0x160] sm:$0xff]
    %v463 = vld [vmem:[%s3 + $0x168] sm:$0xff]
    %v464 = vld [vmem:[%s3 + $0x170] sm:$0xff]
    %v465 = vld [vmem:[%s3 + $0x178] sm:$0xff]
    %v466 = vld [vmem:[%s3 + $0x180] sm:$0xff]
    %v467 = vld [vmem:[%s3 + $0x188] sm:$0xff]
    %v468 = vld [vmem:[%s3 + $0x190] sm:$0xff]
    %v469 = vld [vmem:[%s3 + $0x198] sm:$0xff]
    %v470 = vld [vmem:[%s3 + $0x1a0] sm:$0xff]
    %v471 = vld [vmem:[%s3 + $0x1a8] sm:$0xff]
    %v472 = vld [vmem:[%s3 + $0x1b0] sm:$0xff]
    %v473 = vld [vmem:[%s3 + $0x1b8] sm:$0xff]
    %v474 = vld [vmem:[%s3 + $0x1c0] sm:$0xff]
    %v475 = vld [vmem:[%s3 + $0x1c8] sm:$0xff]
    %v476 = vld [vmem:[%s3 + $0x1d0] sm:$0xff]
    %v477 = vld [vmem:[%s3 + $0x1d8] sm:$0xff]
    %v478 = vld [vmem:[%s3 + $0x1e0] sm:$0xff]
    %v479 = vld [vmem:[%s3 + $0x1e8] sm:$0xff]
    %v480 = vld [vmem:[%s3 + $0x1f0] sm:$0xff]
    %v481 = vld [vmem:[%s3 + $0x1f8] sm:$0xff]
    %v482 = vld [vmem:[%s3 + $0x200] sm:$0xff]
    %v483 = vld [vmem:[%s3 + $0x208] sm:$0xff]
    %v484 = vld [vmem:[%s3 + $0x210] sm:$0xff]
    %v485 = vld [vmem:[%s3 + $0x218] sm:$0xff]
    %v486 = vld [vmem:[%s3 + $0x220] sm:$0xff]
    %v487 = vld [vmem:[%s3 + $0x228] sm:$0xff]
    %v488 = vld [vmem:[%s3 + $0x230] sm:$0xff]
    %v489 = vld [vmem:[%s3 + $0x238] sm:$0xff]
    %v490 = vld [vmem:[%s3 + $0x240] sm:$0xff]
    %v491 = vld [vmem:[%s3 + $0x248] sm:$0xff]
    %v492 = vld [vmem:[%s3 + $0x250] sm:$0xff]
    %v493 = vld [vmem:[%s3 + $0x258] sm:$0xff]
    %v494 = vld [vmem:[%s3 + $0x260] sm:$0xff]
    %v495 = vld [vmem:[%s3 + $0x268] sm:$0xff]
    %v496 = vld [vmem:[%s3 + $0x270] sm:$0xff]
    %v497 = vld [vmem:[%s3 + $0x278] sm:$0xff]
    %v498 = vld [vmem:[%s3 + $0x280] sm:$0xff]
    %v499 = vld [vmem:[%s3 + $0x288] sm:$0xff]
    %v500 = vld [vmem:[%s3 + $0x290] sm:$0xff]
    %v501 = vld [vmem:[%s3 + $0x298] sm:$0xff]
    %v502 = vld [vmem:[%s3 + $0x2a0] sm:$0xff]
    %v503 = vld [vmem:[%s3 + $0x2a8] sm:$0xff]
    %v504 = vld [vmem:[%s3 + $0x2b0] sm:$0xff]
    %v505 = vld [vmem:[%s3 + $0x2b8] sm:$0xff]
    %v506 = vld [vmem:[%s3 + $0x2c0] sm:$0xff]
    %v507 = vld [vmem:[%s3 + $0x2c8] sm:$0xff]
    %v508 = vld [vmem:[%s3 + $0x2d0] sm:$0xff]
    %v509 = vld [vmem:[%s3 + $0x2d8] sm:$0xff]
    %v510 = vld [vmem:[%s3 + $0x2e0] sm:$0xff]
    %v511 = vld [vmem:[%s3 + $0x2e8] sm:$0xff]
    %v512 = vld [vmem:[%s3 + $0x2f0] sm:$0xff]
    %v513 = vld [vmem:[%s3 + $0x2f8] sm:$0xff]
    %v514 = vld [vmem:[%s3 + $0x300] sm:$0xff]
    %v515 = vld [vmem:[%s3 + $0x308] sm:$0xff]
    %v516 = vld [vmem:[%s3 + $0x310] sm:$0xff]
    %v517 = vld [vmem:[%s3 + $0x318] sm:$0xff]
    %v518 = vld [vmem:[%s3 + $0x320] sm:$0xff]
    %v519 = vld [vmem:[%s3 + $0x328] sm:$0xff]
    %v520 = vld [vmem:[%s3 + $0x330] sm:$0xff]
    %v521 = vld [vmem:[%s3 + $0x338] sm:$0xff]
    %v522 = vld [vmem:[%s3 + $0x340] sm:$0xff]
    %v523 = vld [vmem:[%s3 + $0x348] sm:$0xff]
    %v524 = vld [vmem:[%s3 + $0x350] sm:$0xff]
    %v525 = vld [vmem:[%s3 + $0x358] sm:$0xff]
    %v526 = vld [vmem:[%s3 + $0x360] sm:$0xff]
    %v527 = vld [vmem:[%s3 + $0x368] sm:$0xff]
    %v528 = vld [vmem:[%s3 + $0x370] sm:$0xff]
    %v529 = vld [vmem:[%s3 + $0x378] sm:$0xff]
    %v530 = vld [vmem:[%s3 + $0x380] sm:$0xff]
    %v531 = vld [vmem:[%s3 + $0x388] sm:$0xff]
    %v532 = vld [vmem:[%s3 + $0x390] sm:$0xff]
    %v533 = vld [vmem:[%s3 + $0x398] sm:$0xff]
    %v534 = vld [vmem:[%s3 + $0x3a0] sm:$0xff]
    %v535 = vld [vmem:[%s3 + $0x3a8] sm:$0xff]
    %v536 = vld [vmem:[%s3 + $0x3b0] sm:$0xff]
    %v537 = vld [vmem:[%s3 + $0x3b8] sm:$0xff]
    %v538 = vld [vmem:[%s3 + $0x3c0] sm:$0xff]
    %v539 = vld [vmem:[%s3 + $0x3c8] sm:$0xff]
    %v540 = vld [vmem:[%s3 + $0x3d0] sm:$0xff]
    %v541 = vld [vmem:[%s3 + $0x3d8] sm:$0xff]
    %v542 = vld [vmem:[%s3 + $0x3e0] sm:$0xff]
    %v543 = vld [vmem:[%s3 + $0x3e8] sm:$0xff]
    %v544 = vld [vmem:[%s3 + $0x3f0] sm:$0xff]
    %v545 = vld [vmem:[%s3 + $0x3f8] sm:$0xff]
    %v546 = vld [vmem:[%s3 + $0x400] sm:$0xff]
    %v547 = vld [vmem:[%s3 + $0x408] sm:$0xff]
    %v548 = vld [vmem:[%s3 + $0x410] sm:$0xff]
    %v549 = vld [vmem:[%s3 + $0x418] sm:$0xff]
    %v550 = vld [vmem:[%s3 + $0x420] sm:$0xff]
    %v551 = vld [vmem:[%s3 + $0x428] sm:$0xff]
    %v552 = vld [vmem:[%s3 + $0x430] sm:$0xff]
    %v553 = vld [vmem:[%s3 + $0x438] sm:$0xff]
    %v554 = vld [vmem:[%s3 + $0x440] sm:$0xff]
    %v555 = vld [vmem:[%s3 + $0x448] sm:$0xff]
    %v556 = vld [vmem:[%s3 + $0x450] sm:$0xff]
    %v557 = vld [vmem:[%s3 + $0x458] sm:$0xff]
    %v558 = vld [vmem:[%s3 + $0x460] sm:$0xff]
    %v559 = vld [vmem:[%s3 + $0x468] sm:$0xff]
    %v560 = vld [vmem:[%s3 + $0x470] sm:$0xff]
    %v561 = vld [vmem:[%s3 + $0x478] sm:$0xff]
    %v562 = vld [vmem:[%s3 + $0x480] sm:$0xff]
    %v563 = vld [vmem:[%s3 + $0x488] sm:$0xff]
    %v564 = vld [vmem:[%s3 + $0x490] sm:$0xff]
    %v565 = vld [vmem:[%s3 + $0x498] sm:$0xff]
    %v566 = vld [vmem:[%s3 + $0x4a0] sm:$0xff]
    %v567 = vld [vmem:[%s3 + $0x4a8] sm:$0xff]
    %v568 = vld [vmem:[%s3 + $0x4b0] sm:$0xff]
    %v569 = vld [vmem:[%s3 + $0x4b8] sm:$0xff]
    %v570 = vld [vmem:[%s3 + $0x4c0] sm:$0xff]
    %v571 = vld [vmem:[%s3 + $0x4c8] sm:$0xff]
    %v572 = vld [vmem:[%s3 + $0x4d0] sm:$0xff]
    %v573 = vld [vmem:[%s3 + $0x4d8] sm:$0xff]
    %v574 = vld [vmem:[%s3 + $0x4e0] sm:$0xff]
    %v575 = vld [vmem:[%s3 + $0x4e8] sm:$0xff]
    %v576 = vld [vmem:[%s3 + $0x4f0] sm:$0xff]
    %v577 = vld [vmem:[%s3 + $0x4f8] sm:$0xff]
    %v578 = vld [vmem:[%s3 + $0x500] sm:$0xff]
    %v579 = vld [vmem:[%s3 + $0x508] sm:$0xff]
    %v580 = vld [vmem:[%s3 + $0x510] sm:$0xff]
    %v581 = vld [vmem:[%s3 + $0x518] sm:$0xff]
    %v582 = vld [vmem:[%s3 + $0x520] sm:$0xff]
    %v583 = vld [vmem:[%s3 + $0x528] sm:$0xff]
    %v584 = vld [vmem:[%s3 + $0x530] sm:$0xff]
    %v585 = vld [vmem:[%s3 + $0x538] sm:$0xff]
    %v586 = vld [vmem:[%s3 + $0x540] sm:$0xff]
    %v587 = vld [vmem:[%s3 + $0x548] sm:$0xff]
    %v588 = vld [vmem:[%s3 + $0x550] sm:$0xff]
    %v589 = vld [vmem:[%s3 + $0x558] sm:$0xff]
    %v590 = vld [vmem:[%s3 + $0x560] sm:$0xff]
    %v591 = vld [vmem:[%s3 + $0x568] sm:$0xff]
    %v592 = vld [vmem:[%s3 + $0x570] sm:$0xff]
    %v593 = vld [vmem:[%s3 + $0x578] sm:$0xff]
    %v594 = vld [vmem:[%s3 + $0x580] sm:$0xff]
    %v595 = vld [vmem:[%s3 + $0x588] sm:$0xff]
    %v596 = vld [vmem:[%s3 + $0x590] sm:$0xff]
    %v597 = vld [vmem:[%s3 + $0x598] sm:$0xff]
    %v598 = vld [vmem:[%s3 + $0x5a0] sm:$0xff]
    %v599 = vld [vmem:[%s3 + $0x5a8] sm:$0xff]
    %v600 = vld [vmem:[%s3 + $0x5b0] sm:$0xff]
    %v601 = vld [vmem:[%s3 + $0x5b8] sm:$0xff]
    %v602 = vld [vmem:[%s3 + $0x5c0] sm:$0xff]
    %v603 = vld [vmem:[%s3 + $0x5c8] sm:$0xff]
    %v604 = vld [vmem:[%s3 + $0x5d0] sm:$0xff]
    %v605 = vld [vmem:[%s3 + $0x5d8] sm:$0xff]
    %v606 = vld [vmem:[%s3 + $0x5e0] sm:$0xff]
    %v607 = vld [vmem:[%s3 + $0x5e8] sm:$0xff]
    %v608 = vld [vmem:[%s3 + $0x5f0] sm:$0xff]
    %v609 = vld [vmem:[%s3 + $0x5f8] sm:$0xff]
    %v610 = vld [vmem:[%s3 + $0x600] sm:$0xff]
    %v611 = vld [vmem:[%s3 + $0x608] sm:$0xff]
    %v612 = vld [vmem:[%s3 + $0x610] sm:$0xff]
    %v613 = vld [vmem:[%s3 + $0x618] sm:$0xff]
    %v614 = vld [vmem:[%s3 + $0x620] sm:$0xff]
    %v615 = vld [vmem:[%s3 + $0x628] sm:$0xff]
    %v616 = vld [vmem:[%s3 + $0x630] sm:$0xff]
    %v617 = vld [vmem:[%s3 + $0x638] sm:$0xff]
    %v618 = vld [vmem:[%s3 + $0x640] sm:$0xff]
    %v619 = vld [vmem:[%s3 + $0x648] sm:$0xff]
    %v620 = vld [vmem:[%s3 + $0x650] sm:$0xff]
    %v621 = vld [vmem:[%s3 + $0x658] sm:$0xff]
    %v622 = vld [vmem:[%s3 + $0x660] sm:$0xff]
    %v623 = vld [vmem:[%s3 + $0x668] sm:$0xff]
    %v624 = vld [vmem:[%s3 + $0x670] sm:$0xff]
    %v625 = vld [vmem:[%s3 + $0x678] sm:$0xff]
    %v626 = vld [vmem:[%s3 + $0x680] sm:$0xff]
    %v627 = vld [vmem:[%s3 + $0x688] sm:$0xff]
    %v628 = vld [vmem:[%s3 + $0x690] sm:$0xff]
    %v629 = vld [vmem:[%s3 + $0x698] sm:$0xff]
    %v630 = vld [vmem:[%s3 + $0x6a0] sm:$0xff]
    %v631 = vld [vmem:[%s3 + $0x6a8] sm:$0xff]
    %v632 = vld [vmem:[%s3 + $0x6b0] sm:$0xff]
    %v633 = vld [vmem:[%s3 + $0x6b8] sm:$0xff]
    %v634 = vld [vmem:[%s3 + $0x6c0] sm:$0xff]
    %v635 = vld [vmem:[%s3 + $0x6c8] sm:$0xff]
    %v636 = vld [vmem:[%s3 + $0x6d0] sm:$0xff]
    %v637 = vld [vmem:[%s3 + $0x6d8] sm:$0xff]
    %v638 = vld [vmem:[%s3 + $0x6e0] sm:$0xff]
    %v639 = vld [vmem:[%s3 + $0x6e8] sm:$0xff]
    %v640 = vld [vmem:[%s3 + $0x6f0] sm:$0xff]
    %v641 = vld [vmem:[%s3 + $0x6f8] sm:$0xff]
    %v642 = vld [vmem:[%s3 + $0x700] sm:$0xff]
    %v643 = vld [vmem:[%s3 + $0x708] sm:$0xff]
    %v644 = vld [vmem:[%s3 + $0x710] sm:$0xff]
    %v645 = vld [vmem:[%s3 + $0x718] sm:$0xff]
    %v646 = vld [vmem:[%s3 + $0x720] sm:$0xff]
    %v647 = vld [vmem:[%s3 + $0x728] sm:$0xff]
    %v648 = vld [vmem:[%s3 + $0x730] sm:$0xff]
    %v649 = vld [vmem:[%s3 + $0x738] sm:$0xff]
    %v650 = vld [vmem:[%s3 + $0x740] sm:$0xff]
    %v651 = vld [vmem:[%s3 + $0x748] sm:$0xff]
    %v652 = vld [vmem:[%s3 + $0x750] sm:$0xff]
    %v653 = vld [vmem:[%s3 + $0x758] sm:$0xff]
    %v654 = vld [vmem:[%s3 + $0x760] sm:$0xff]
    %v655 = vld [vmem:[%s3 + $0x768] sm:$0xff]
    %v656 = vld [vmem:[%s3 + $0x770] sm:$0xff]
    %v657 = vld [vmem:[%s3 + $0x778] sm:$0xff]
    %v658 = vld [vmem:[%s3 + $0x780] sm:$0xff]
    %v659 = vld [vmem:[%s3 + $0x788] sm:$0xff]
    %v660 = vld [vmem:[%s3 + $0x790] sm:$0xff]
    %v661 = vld [vmem:[%s3 + $0x798] sm:$0xff]
    %v662 = vld [vmem:[%s3 + $0x7a0] sm:$0xff]
    %v663 = vld [vmem:[%s3 + $0x7a8] sm:$0xff]
    %v664 = vld [vmem:[%s3 + $0x7b0] sm:$0xff]
    %v665 = vld [vmem:[%s3 + $0x7b8] sm:$0xff]
    %v666 = vld [vmem:[%s3 + $0x7c0] sm:$0xff]
    %v667 = vld [vmem:[%s3 + $0x7c8] sm:$0xff]
    %v668 = vld [vmem:[%s3 + $0x7d0] sm:$0xff]
    %v669 = vld [vmem:[%s3 + $0x7d8] sm:$0xff]
    %v670 = vld [vmem:[%s3 + $0x7e0] sm:$0xff]
    %v671 = vld [vmem:[%s3 + $0x7e8] sm:$0xff]
    %v672 = vld [vmem:[%s3 + $0x7f0] sm:$0xff]
    %v673 = vld [vmem:[%s3 + $0x7f8] sm:$0xff]
    %v674 = vld [vmem:[%s4] sm:$0xff]
    %v676 = vlaneseq
    %v677 = vshrl.u32 %v676, 7
    %v678 = vsub.s32 0, %v677
    %v679 = vrot.slane %v674, %v678
    %v680 = vlaneseq
    %v681 = vshrl.u32 %v680, 7
    %v682 = vsub.s32 1, %v681
    %v683 = vrot.slane %v674, %v682
    %v684 = vlaneseq
    %v685 = vshrl.u32 %v684, 7
    %v686 = vsub.s32 2, %v685
    %v687 = vrot.slane %v674, %v686
    %v688 = vlaneseq
    %v689 = vshrl.u32 %v688, 7
    %v690 = vsub.s32 3, %v689
    %v691 = vrot.slane %v674, %v690
    %v692 = vlaneseq
    %v693 = vshrl.u32 %v692, 7
    %v694 = vsub.s32 4, %v693
    %v695 = vrot.slane %v674, %v694
    %v696 = vlaneseq
    %v697 = vshrl.u32 %v696, 7
    %v698 = vsub.s32 5, %v697
    %v699 = vrot.slane %v674, %v698
    %v700 = vlaneseq
    %v701 = vshrl.u32 %v700, 7
    %v702 = vsub.s32 6, %v701
    %v703 = vrot.slane %v674, %v702
    %v704 = vlaneseq
    %v705 = vshrl.u32 %v704, 7
    %v706 = vsub.s32 7, %v705
    %v707 = vrot.slane %v674, %v706
    %v972 = vunpack.c.l.b16 %v418
    %v973 = vunpack.c.h.b16 %v418
    %v974 = vunpack.c.l.b16 %v419
    %v975 = vunpack.c.h.b16 %v419
    %v976 = vunpack.c.l.b16 %v420
    %v977 = vunpack.c.h.b16 %v420
    %v978 = vunpack.c.l.b16 %v421
    %v979 = vunpack.c.h.b16 %v421
    %v980 = vunpack.c.l.b16 %v422
    %v981 = vunpack.c.h.b16 %v422
    %v982 = vunpack.c.l.b16 %v423
    %v983 = vunpack.c.h.b16 %v423
    %v984 = vunpack.c.l.b16 %v424
    %v985 = vunpack.c.h.b16 %v424
    %v986 = vunpack.c.l.b16 %v425
    %v987 = vunpack.c.h.b16 %v425
    %v988 = vunpack.c.l.b16 %v426
    %v989 = vunpack.c.h.b16 %v426
    %v990 = vunpack.c.l.b16 %v427
    %v991 = vunpack.c.h.b16 %v427
    %v992 = vunpack.c.l.b16 %v428
    %v993 = vunpack.c.h.b16 %v428
    %v994 = vunpack.c.l.b16 %v429
    %v995 = vunpack.c.h.b16 %v429
    %v996 = vunpack.c.l.b16 %v430
    %v997 = vunpack.c.h.b16 %v430
    %v998 = vunpack.c.l.b16 %v431
    %v999 = vunpack.c.h.b16 %v431
    %v1000 = vunpack.c.l.b16 %v432
    %v1001 = vunpack.c.h.b16 %v432
    %v1002 = vunpack.c.l.b16 %v433
    %v1003 = vunpack.c.h.b16 %v433
    %v1004 = vunpack.c.l.b16 %v434
    %v1005 = vunpack.c.h.b16 %v434
    %v1006 = vunpack.c.l.b16 %v435
    %v1007 = vunpack.c.h.b16 %v435
    %v1008 = vunpack.c.l.b16 %v436
    %v1009 = vunpack.c.h.b16 %v436
    %v1010 = vunpack.c.l.b16 %v437
    %v1011 = vunpack.c.h.b16 %v437
    %v1012 = vunpack.c.l.b16 %v438
    %v1013 = vunpack.c.h.b16 %v438
    %v1014 = vunpack.c.l.b16 %v439
    %v1015 = vunpack.c.h.b16 %v439
    %v1016 = vunpack.c.l.b16 %v440
    %v1017 = vunpack.c.h.b16 %v440
    %v1018 = vunpack.c.l.b16 %v441
    %v1019 = vunpack.c.h.b16 %v441
    %v1020 = vunpack.c.l.b16 %v442
    %v1021 = vunpack.c.h.b16 %v442
    %v1022 = vunpack.c.l.b16 %v443
    %v1023 = vunpack.c.h.b16 %v443
    %v1024 = vunpack.c.l.b16 %v444
    %v1025 = vunpack.c.h.b16 %v444
    %v1026 = vunpack.c.l.b16 %v445
    %v1027 = vunpack.c.h.b16 %v445
    %v1028 = vunpack.c.l.b16 %v446
    %v1029 = vunpack.c.h.b16 %v446
    %v1030 = vunpack.c.l.b16 %v447
    %v1031 = vunpack.c.h.b16 %v447
    %v1032 = vunpack.c.l.b16 %v448
    %v1033 = vunpack.c.h.b16 %v448
    %v1034 = vunpack.c.l.b16 %v449
    %v1035 = vunpack.c.h.b16 %v449
    %v1036 = vunpack.c.l.b16 %v450
    %v1037 = vunpack.c.h.b16 %v450
    %v1038 = vunpack.c.l.b16 %v451
    %v1039 = vunpack.c.h.b16 %v451
    %v1040 = vunpack.c.l.b16 %v452
    %v1041 = vunpack.c.h.b16 %v452
    %v1042 = vunpack.c.l.b16 %v453
    %v1043 = vunpack.c.h.b16 %v453
    %v1044 = vunpack.c.l.b16 %v454
    %v1045 = vunpack.c.h.b16 %v454
    %v1046 = vunpack.c.l.b16 %v455
    %v1047 = vunpack.c.h.b16 %v455
    %v1048 = vunpack.c.l.b16 %v456
    %v1049 = vunpack.c.h.b16 %v456
    %v1050 = vunpack.c.l.b16 %v457
    %v1051 = vunpack.c.h.b16 %v457
    %v1052 = vunpack.c.l.b16 %v458
    %v1053 = vunpack.c.h.b16 %v458
    %v1054 = vunpack.c.l.b16 %v459
    %v1055 = vunpack.c.h.b16 %v459
    %v1056 = vunpack.c.l.b16 %v460
    %v1057 = vunpack.c.h.b16 %v460
    %v1058 = vunpack.c.l.b16 %v461
    %v1059 = vunpack.c.h.b16 %v461
    %v1060 = vunpack.c.l.b16 %v462
    %v1061 = vunpack.c.h.b16 %v462
    %v1062 = vunpack.c.l.b16 %v463
    %v1063 = vunpack.c.h.b16 %v463
    %v1064 = vunpack.c.l.b16 %v464
    %v1065 = vunpack.c.h.b16 %v464
    %v1066 = vunpack.c.l.b16 %v465
    %v1067 = vunpack.c.h.b16 %v465
    %v1068 = vunpack.c.l.b16 %v466
    %v1069 = vunpack.c.h.b16 %v466
    %v1070 = vunpack.c.l.b16 %v467
    %v1071 = vunpack.c.h.b16 %v467
    %v1072 = vunpack.c.l.b16 %v468
    %v1073 = vunpack.c.h.b16 %v468
    %v1074 = vunpack.c.l.b16 %v469
    %v1075 = vunpack.c.h.b16 %v469
    %v1076 = vunpack.c.l.b16 %v470
    %v1077 = vunpack.c.h.b16 %v470
    %v1078 = vunpack.c.l.b16 %v471
    %v1079 = vunpack.c.h.b16 %v471
    %v1080 = vunpack.c.l.b16 %v472
    %v1081 = vunpack.c.h.b16 %v472
    %v1082 = vunpack.c.l.b16 %v473
    %v1083 = vunpack.c.h.b16 %v473
    %v1084 = vunpack.c.l.b16 %v474
    %v1085 = vunpack.c.h.b16 %v474
    %v1086 = vunpack.c.l.b16 %v475
    %v1087 = vunpack.c.h.b16 %v475
    %v1088 = vunpack.c.l.b16 %v476
    %v1089 = vunpack.c.h.b16 %v476
    %v1090 = vunpack.c.l.b16 %v477
    %v1091 = vunpack.c.h.b16 %v477
    %v1092 = vunpack.c.l.b16 %v478
    %v1093 = vunpack.c.h.b16 %v478
    %v1094 = vunpack.c.l.b16 %v479
    %v1095 = vunpack.c.h.b16 %v479
    %v1096 = vunpack.c.l.b16 %v480
    %v1097 = vunpack.c.h.b16 %v480
    %v1098 = vunpack.c.l.b16 %v481
    %v1099 = vunpack.c.h.b16 %v481
    %v1100 = vunpack.c.l.b16 %v482
    %v1101 = vunpack.c.h.b16 %v482
    %v1102 = vunpack.c.l.b16 %v483
    %v1103 = vunpack.c.h.b16 %v483
    %v1104 = vunpack.c.l.b16 %v484
    %v1105 = vunpack.c.h.b16 %v484
    %v1106 = vunpack.c.l.b16 %v485
    %v1107 = vunpack.c.h.b16 %v485
    %v1108 = vunpack.c.l.b16 %v486
    %v1109 = vunpack.c.h.b16 %v486
    %v1110 = vunpack.c.l.b16 %v487
    %v1111 = vunpack.c.h.b16 %v487
    %v1112 = vunpack.c.l.b16 %v488
    %v1113 = vunpack.c.h.b16 %v488
    %v1114 = vunpack.c.l.b16 %v489
    %v1115 = vunpack.c.h.b16 %v489
    %v1116 = vunpack.c.l.b16 %v490
    %v1117 = vunpack.c.h.b16 %v490
    %v1118 = vunpack.c.l.b16 %v491
    %v1119 = vunpack.c.h.b16 %v491
    %v1120 = vunpack.c.l.b16 %v492
    %v1121 = vunpack.c.h.b16 %v492
    %v1122 = vunpack.c.l.b16 %v493
    %v1123 = vunpack.c.h.b16 %v493
    %v1124 = vunpack.c.l.b16 %v494
    %v1125 = vunpack.c.h.b16 %v494
    %v1126 = vunpack.c.l.b16 %v495
    %v1127 = vunpack.c.h.b16 %v495
    %v1128 = vunpack.c.l.b16 %v496
    %v1129 = vunpack.c.h.b16 %v496
    %v1130 = vunpack.c.l.b16 %v497
    %v1131 = vunpack.c.h.b16 %v497
    %v1132 = vunpack.c.l.b16 %v498
    %v1133 = vunpack.c.h.b16 %v498
    %v1134 = vunpack.c.l.b16 %v499
    %v1135 = vunpack.c.h.b16 %v499
    %v1136 = vunpack.c.l.b16 %v500
    %v1137 = vunpack.c.h.b16 %v500
    %v1138 = vunpack.c.l.b16 %v501
    %v1139 = vunpack.c.h.b16 %v501
    %v1140 = vunpack.c.l.b16 %v502
    %v1141 = vunpack.c.h.b16 %v502
    %v1142 = vunpack.c.l.b16 %v503
    %v1143 = vunpack.c.h.b16 %v503
    %v1144 = vunpack.c.l.b16 %v504
    %v1145 = vunpack.c.h.b16 %v504
    %v1146 = vunpack.c.l.b16 %v505
    %v1147 = vunpack.c.h.b16 %v505
    %v1148 = vunpack.c.l.b16 %v506
    %v1149 = vunpack.c.h.b16 %v506
    %v1150 = vunpack.c.l.b16 %v507
    %v1151 = vunpack.c.h.b16 %v507
    %v1152 = vunpack.c.l.b16 %v508
    %v1153 = vunpack.c.h.b16 %v508
    %v1154 = vunpack.c.l.b16 %v509
    %v1155 = vunpack.c.h.b16 %v509
    %v1156 = vunpack.c.l.b16 %v510
    %v1157 = vunpack.c.h.b16 %v510
    %v1158 = vunpack.c.l.b16 %v511
    %v1159 = vunpack.c.h.b16 %v511
    %v1160 = vunpack.c.l.b16 %v512
    %v1161 = vunpack.c.h.b16 %v512
    %v1162 = vunpack.c.l.b16 %v513
    %v1163 = vunpack.c.h.b16 %v513
    %v1164 = vunpack.c.l.b16 %v514
    %v1165 = vunpack.c.h.b16 %v514
    %v1166 = vunpack.c.l.b16 %v515
    %v1167 = vunpack.c.h.b16 %v515
    %v1168 = vunpack.c.l.b16 %v516
    %v1169 = vunpack.c.h.b16 %v516
    %v1170 = vunpack.c.l.b16 %v517
    %v1171 = vunpack.c.h.b16 %v517
    %v1172 = vunpack.c.l.b16 %v518
    %v1173 = vunpack.c.h.b16 %v518
    %v1174 = vunpack.c.l.b16 %v519
    %v1175 = vunpack.c.h.b16 %v519
    %v1176 = vunpack.c.l.b16 %v520
    %v1177 = vunpack.c.h.b16 %v520
    %v1178 = vunpack.c.l.b16 %v521
    %v1179 = vunpack.c.h.b16 %v521
    %v1180 = vunpack.c.l.b16 %v522
    %v1181 = vunpack.c.h.b16 %v522
    %v1182 = vunpack.c.l.b16 %v523
    %v1183 = vunpack.c.h.b16 %v523
    %v1184 = vunpack.c.l.b16 %v524
    %v1185 = vunpack.c.h.b16 %v524
    %v1186 = vunpack.c.l.b16 %v525
    %v1187 = vunpack.c.h.b16 %v525
    %v1188 = vunpack.c.l.b16 %v526
    %v1189 = vunpack.c.h.b16 %v526
    %v1190 = vunpack.c.l.b16 %v527
    %v1191 = vunpack.c.h.b16 %v527
    %v1192 = vunpack.c.l.b16 %v528
    %v1193 = vunpack.c.h.b16 %v528
    %v1194 = vunpack.c.l.b16 %v529
    %v1195 = vunpack.c.h.b16 %v529
    %v1196 = vunpack.c.l.b16 %v530
    %v1197 = vunpack.c.h.b16 %v530
    %v1198 = vunpack.c.l.b16 %v531
    %v1199 = vunpack.c.h.b16 %v531
    %v1200 = vunpack.c.l.b16 %v532
    %v1201 = vunpack.c.h.b16 %v532
    %v1202 = vunpack.c.l.b16 %v533
    %v1203 = vunpack.c.h.b16 %v533
    %v1204 = vunpack.c.l.b16 %v534
    %v1205 = vunpack.c.h.b16 %v534
    %v1206 = vunpack.c.l.b16 %v535
    %v1207 = vunpack.c.h.b16 %v535
    %v1208 = vunpack.c.l.b16 %v536
    %v1209 = vunpack.c.h.b16 %v536
    %v1210 = vunpack.c.l.b16 %v537
    %v1211 = vunpack.c.h.b16 %v537
    %v1212 = vunpack.c.l.b16 %v538
    %v1213 = vunpack.c.h.b16 %v538
    %v1214 = vunpack.c.l.b16 %v539
    %v1215 = vunpack.c.h.b16 %v539
    %v1216 = vunpack.c.l.b16 %v540
    %v1217 = vunpack.c.h.b16 %v540
    %v1218 = vunpack.c.l.b16 %v541
    %v1219 = vunpack.c.h.b16 %v541
    %v1220 = vunpack.c.l.b16 %v542
    %v1221 = vunpack.c.h.b16 %v542
    %v1222 = vunpack.c.l.b16 %v543
    %v1223 = vunpack.c.h.b16 %v543
    %v1224 = vunpack.c.l.b16 %v544
    %v1225 = vunpack.c.h.b16 %v544
    %v1226 = vunpack.c.l.b16 %v545
    %v1227 = vunpack.c.h.b16 %v545
    %v1228 = vunpack.c.l.b16 %v546
    %v1229 = vunpack.c.h.b16 %v546
    %v1230 = vunpack.c.l.b16 %v547
    %v1231 = vunpack.c.h.b16 %v547
    %v1232 = vunpack.c.l.b16 %v548
    %v1233 = vunpack.c.h.b16 %v548
    %v1234 = vunpack.c.l.b16 %v549
    %v1235 = vunpack.c.h.b16 %v549
    %v1236 = vunpack.c.l.b16 %v550
    %v1237 = vunpack.c.h.b16 %v550
    %v1238 = vunpack.c.l.b16 %v551
    %v1239 = vunpack.c.h.b16 %v551
    %v1240 = vunpack.c.l.b16 %v552
    %v1241 = vunpack.c.h.b16 %v552
    %v1242 = vunpack.c.l.b16 %v553
    %v1243 = vunpack.c.h.b16 %v553
    %v1244 = vunpack.c.l.b16 %v554
    %v1245 = vunpack.c.h.b16 %v554
    %v1246 = vunpack.c.l.b16 %v555
    %v1247 = vunpack.c.h.b16 %v555
    %v1248 = vunpack.c.l.b16 %v556
    %v1249 = vunpack.c.h.b16 %v556
    %v1250 = vunpack.c.l.b16 %v557
    %v1251 = vunpack.c.h.b16 %v557
    %v1252 = vunpack.c.l.b16 %v558
    %v1253 = vunpack.c.h.b16 %v558
    %v1254 = vunpack.c.l.b16 %v559
    %v1255 = vunpack.c.h.b16 %v559
    %v1256 = vunpack.c.l.b16 %v560
    %v1257 = vunpack.c.h.b16 %v560
    %v1258 = vunpack.c.l.b16 %v561
    %v1259 = vunpack.c.h.b16 %v561
    %v1260 = vunpack.c.l.b16 %v562
    %v1261 = vunpack.c.h.b16 %v562
    %v1262 = vunpack.c.l.b16 %v563
    %v1263 = vunpack.c.h.b16 %v563
    %v1264 = vunpack.c.l.b16 %v564
    %v1265 = vunpack.c.h.b16 %v564
    %v1266 = vunpack.c.l.b16 %v565
    %v1267 = vunpack.c.h.b16 %v565
    %v1268 = vunpack.c.l.b16 %v566
    %v1269 = vunpack.c.h.b16 %v566
    %v1270 = vunpack.c.l.b16 %v567
    %v1271 = vunpack.c.h.b16 %v567
    %v1272 = vunpack.c.l.b16 %v568
    %v1273 = vunpack.c.h.b16 %v568
    %v1274 = vunpack.c.l.b16 %v569
    %v1275 = vunpack.c.h.b16 %v569
    %v1276 = vunpack.c.l.b16 %v570
    %v1277 = vunpack.c.h.b16 %v570
    %v1278 = vunpack.c.l.b16 %v571
    %v1279 = vunpack.c.h.b16 %v571
    %v1280 = vunpack.c.l.b16 %v572
    %v1281 = vunpack.c.h.b16 %v572
    %v1282 = vunpack.c.l.b16 %v573
    %v1283 = vunpack.c.h.b16 %v573
    %v1284 = vunpack.c.l.b16 %v574
    %v1285 = vunpack.c.h.b16 %v574
    %v1286 = vunpack.c.l.b16 %v575
    %v1287 = vunpack.c.h.b16 %v575
    %v1288 = vunpack.c.l.b16 %v576
    %v1289 = vunpack.c.h.b16 %v576
    %v1290 = vunpack.c.l.b16 %v577
    %v1291 = vunpack.c.h.b16 %v577
    %v1292 = vunpack.c.l.b16 %v578
    %v1293 = vunpack.c.h.b16 %v578
    %v1294 = vunpack.c.l.b16 %v579
    %v1295 = vunpack.c.h.b16 %v579
    %v1296 = vunpack.c.l.b16 %v580
    %v1297 = vunpack.c.h.b16 %v580
    %v1298 = vunpack.c.l.b16 %v581
    %v1299 = vunpack.c.h.b16 %v581
    %v1300 = vunpack.c.l.b16 %v582
    %v1301 = vunpack.c.h.b16 %v582
    %v1302 = vunpack.c.l.b16 %v583
    %v1303 = vunpack.c.h.b16 %v583
    %v1304 = vunpack.c.l.b16 %v584
    %v1305 = vunpack.c.h.b16 %v584
    %v1306 = vunpack.c.l.b16 %v585
    %v1307 = vunpack.c.h.b16 %v585
    %v1308 = vunpack.c.l.b16 %v586
    %v1309 = vunpack.c.h.b16 %v586
    %v1310 = vunpack.c.l.b16 %v587
    %v1311 = vunpack.c.h.b16 %v587
    %v1312 = vunpack.c.l.b16 %v588
    %v1313 = vunpack.c.h.b16 %v588
    %v1314 = vunpack.c.l.b16 %v589
    %v1315 = vunpack.c.h.b16 %v589
    %v1316 = vunpack.c.l.b16 %v590
    %v1317 = vunpack.c.h.b16 %v590
    %v1318 = vunpack.c.l.b16 %v591
    %v1319 = vunpack.c.h.b16 %v591
    %v1320 = vunpack.c.l.b16 %v592
    %v1321 = vunpack.c.h.b16 %v592
    %v1322 = vunpack.c.l.b16 %v593
    %v1323 = vunpack.c.h.b16 %v593
    %v1324 = vunpack.c.l.b16 %v594
    %v1325 = vunpack.c.h.b16 %v594
    %v1326 = vunpack.c.l.b16 %v595
    %v1327 = vunpack.c.h.b16 %v595
    %v1328 = vunpack.c.l.b16 %v596
    %v1329 = vunpack.c.h.b16 %v596
    %v1330 = vunpack.c.l.b16 %v597
    %v1331 = vunpack.c.h.b16 %v597
    %v1332 = vunpack.c.l.b16 %v598
    %v1333 = vunpack.c.h.b16 %v598
    %v1334 = vunpack.c.l.b16 %v599
    %v1335 = vunpack.c.h.b16 %v599
    %v1336 = vunpack.c.l.b16 %v600
    %v1337 = vunpack.c.h.b16 %v600
    %v1338 = vunpack.c.l.b16 %v601
    %v1339 = vunpack.c.h.b16 %v601
    %v1340 = vunpack.c.l.b16 %v602
    %v1341 = vunpack.c.h.b16 %v602
    %v1342 = vunpack.c.l.b16 %v603
    %v1343 = vunpack.c.h.b16 %v603
    %v1344 = vunpack.c.l.b16 %v604
    %v1345 = vunpack.c.h.b16 %v604
    %v1346 = vunpack.c.l.b16 %v605
    %v1347 = vunpack.c.h.b16 %v605
    %v1348 = vunpack.c.l.b16 %v606
    %v1349 = vunpack.c.h.b16 %v606
    %v1350 = vunpack.c.l.b16 %v607
    %v1351 = vunpack.c.h.b16 %v607
    %v1352 = vunpack.c.l.b16 %v608
    %v1353 = vunpack.c.h.b16 %v608
    %v1354 = vunpack.c.l.b16 %v609
    %v1355 = vunpack.c.h.b16 %v609
    %v1356 = vunpack.c.l.b16 %v610
    %v1357 = vunpack.c.h.b16 %v610
    %v1358 = vunpack.c.l.b16 %v611
    %v1359 = vunpack.c.h.b16 %v611
    %v1360 = vunpack.c.l.b16 %v612
    %v1361 = vunpack.c.h.b16 %v612
    %v1362 = vunpack.c.l.b16 %v613
    %v1363 = vunpack.c.h.b16 %v613
    %v1364 = vunpack.c.l.b16 %v614
    %v1365 = vunpack.c.h.b16 %v614
    %v1366 = vunpack.c.l.b16 %v615
    %v1367 = vunpack.c.h.b16 %v615
    %v1368 = vunpack.c.l.b16 %v616
    %v1369 = vunpack.c.h.b16 %v616
    %v1370 = vunpack.c.l.b16 %v617
    %v1371 = vunpack.c.h.b16 %v617
    %v1372 = vunpack.c.l.b16 %v618
    %v1373 = vunpack.c.h.b16 %v618
    %v1374 = vunpack.c.l.b16 %v619
    %v1375 = vunpack.c.h.b16 %v619
    %v1376 = vunpack.c.l.b16 %v620
    %v1377 = vunpack.c.h.b16 %v620
    %v1378 = vunpack.c.l.b16 %v621
    %v1379 = vunpack.c.h.b16 %v621
    %v1380 = vunpack.c.l.b16 %v622
    %v1381 = vunpack.c.h.b16 %v622
    %v1382 = vunpack.c.l.b16 %v623
    %v1383 = vunpack.c.h.b16 %v623
    %v1384 = vunpack.c.l.b16 %v624
    %v1385 = vunpack.c.h.b16 %v624
    %v1386 = vunpack.c.l.b16 %v625
    %v1387 = vunpack.c.h.b16 %v625
    %v1388 = vunpack.c.l.b16 %v626
    %v1389 = vunpack.c.h.b16 %v626
    %v1390 = vunpack.c.l.b16 %v627
    %v1391 = vunpack.c.h.b16 %v627
    %v1392 = vunpack.c.l.b16 %v628
    %v1393 = vunpack.c.h.b16 %v628
    %v1394 = vunpack.c.l.b16 %v629
    %v1395 = vunpack.c.h.b16 %v629
    %v1396 = vunpack.c.l.b16 %v630
    %v1397 = vunpack.c.h.b16 %v630
    %v1398 = vunpack.c.l.b16 %v631
    %v1399 = vunpack.c.h.b16 %v631
    %v1400 = vunpack.c.l.b16 %v632
    %v1401 = vunpack.c.h.b16 %v632
    %v1402 = vunpack.c.l.b16 %v633
    %v1403 = vunpack.c.h.b16 %v633
    %v1404 = vunpack.c.l.b16 %v634
    %v1405 = vunpack.c.h.b16 %v634
    %v1406 = vunpack.c.l.b16 %v635
    %v1407 = vunpack.c.h.b16 %v635
    %v1408 = vunpack.c.l.b16 %v636
    %v1409 = vunpack.c.h.b16 %v636
    %v1410 = vunpack.c.l.b16 %v637
    %v1411 = vunpack.c.h.b16 %v637
    %v1412 = vunpack.c.l.b16 %v638
    %v1413 = vunpack.c.h.b16 %v638
    %v1414 = vunpack.c.l.b16 %v639
    %v1415 = vunpack.c.h.b16 %v639
    %v1416 = vunpack.c.l.b16 %v640
    %v1417 = vunpack.c.h.b16 %v640
    %v1418 = vunpack.c.l.b16 %v641
    %v1419 = vunpack.c.h.b16 %v641
    %v1420 = vunpack.c.l.b16 %v642
    %v1421 = vunpack.c.h.b16 %v642
    %v1422 = vunpack.c.l.b16 %v643
    %v1423 = vunpack.c.h.b16 %v643
    %v1424 = vunpack.c.l.b16 %v644
    %v1425 = vunpack.c.h.b16 %v644
    %v1426 = vunpack.c.l.b16 %v645
    %v1427 = vunpack.c.h.b16 %v645
    %v1428 = vunpack.c.l.b16 %v646
    %v1429 = vunpack.c.h.b16 %v646
    %v1430 = vunpack.c.l.b16 %v647
    %v1431 = vunpack.c.h.b16 %v647
    %v1432 = vunpack.c.l.b16 %v648
    %v1433 = vunpack.c.h.b16 %v648
    %v1434 = vunpack.c.l.b16 %v649
    %v1435 = vunpack.c.h.b16 %v649
    %v1436 = vunpack.c.l.b16 %v650
    %v1437 = vunpack.c.h.b16 %v650
    %v1438 = vunpack.c.l.b16 %v651
    %v1439 = vunpack.c.h.b16 %v651
    %v1440 = vunpack.c.l.b16 %v652
    %v1441 = vunpack.c.h.b16 %v652
    %v1442 = vunpack.c.l.b16 %v653
    %v1443 = vunpack.c.h.b16 %v653
    %v1444 = vunpack.c.l.b16 %v654
    %v1445 = vunpack.c.h.b16 %v654
    %v1446 = vunpack.c.l.b16 %v655
    %v1447 = vunpack.c.h.b16 %v655
    %v1448 = vunpack.c.l.b16 %v656
    %v1449 = vunpack.c.h.b16 %v656
    %v1450 = vunpack.c.l.b16 %v657
    %v1451 = vunpack.c.h.b16 %v657
    %v1452 = vunpack.c.l.b16 %v658
    %v1453 = vunpack.c.h.b16 %v658
    %v1454 = vunpack.c.l.b16 %v659
    %v1455 = vunpack.c.h.b16 %v659
    %v1456 = vunpack.c.l.b16 %v660
    %v1457 = vunpack.c.h.b16 %v660
    %v1458 = vunpack.c.l.b16 %v661
    %v1459 = vunpack.c.h.b16 %v661
    %v1460 = vunpack.c.l.b16 %v662
    %v1461 = vunpack.c.h.b16 %v662
    %v1462 = vunpack.c.l.b16 %v663
    %v1463 = vunpack.c.h.b16 %v663
    %v1464 = vunpack.c.l.b16 %v664
    %v1465 = vunpack.c.h.b16 %v664
    %v1466 = vunpack.c.l.b16 %v665
    %v1467 = vunpack.c.h.b16 %v665
    %v1468 = vunpack.c.l.b16 %v666
    %v1469 = vunpack.c.h.b16 %v666
    %v1470 = vunpack.c.l.b16 %v667
    %v1471 = vunpack.c.h.b16 %v667
    %v1472 = vunpack.c.l.b16 %v668
    %v1473 = vunpack.c.h.b16 %v668
    %v1474 = vunpack.c.l.b16 %v669
    %v1475 = vunpack.c.h.b16 %v669
    %v1476 = vunpack.c.l.b16 %v670
    %v1477 = vunpack.c.h.b16 %v670
    %v1478 = vunpack.c.l.b16 %v671
    %v1479 = vunpack.c.h.b16 %v671
    %v1480 = vunpack.c.l.b16 %v672
    %v1481 = vunpack.c.h.b16 %v672
    %v1482 = vunpack.c.l.b16 %v673
    %v1483 = vunpack.c.h.b16 %v673
    %v1484 = vpack.c.b16 %v980, %v972
    %v1485 = vpack.c.b16 %v981, %v973
    %v1486 = vpack.c.b16 %v982, %v974
    %v1487 = vpack.c.b16 %v983, %v975
    %v1488 = vpack.c.b16 %v984, %v976
    %v1489 = vpack.c.b16 %v985, %v977
    %v1490 = vpack.c.b16 %v986, %v978
    %v1491 = vpack.c.b16 %v987, %v979
    %v1492 = vpack.c.b16 %v996, %v988
    %v1493 = vpack.c.b16 %v997, %v989
    %v1494 = vpack.c.b16 %v998, %v990
    %v1495 = vpack.c.b16 %v999, %v991
    %v1496 = vpack.c.b16 %v1000, %v992
    %v1497 = vpack.c.b16 %v1001, %v993
    %v1498 = vpack.c.b16 %v1002, %v994
    %v1499 = vpack.c.b16 %v1003, %v995
    %v1500 = vpack.c.b16 %v1012, %v1004
    %v1501 = vpack.c.b16 %v1013, %v1005
    %v1502 = vpack.c.b16 %v1014, %v1006
    %v1503 = vpack.c.b16 %v1015, %v1007
    %v1504 = vpack.c.b16 %v1016, %v1008
    %v1505 = vpack.c.b16 %v1017, %v1009
    %v1506 = vpack.c.b16 %v1018, %v1010
    %v1507 = vpack.c.b16 %v1019, %v1011
    %v1508 = vpack.c.b16 %v1028, %v1020
    %v1509 = vpack.c.b16 %v1029, %v1021
    %v1510 = vpack.c.b16 %v1030, %v1022
    %v1511 = vpack.c.b16 %v1031, %v1023
    %v1512 = vpack.c.b16 %v1032, %v1024
    %v1513 = vpack.c.b16 %v1033, %v1025
    %v1514 = vpack.c.b16 %v1034, %v1026
    %v1515 = vpack.c.b16 %v1035, %v1027
    %v1516 = vpack.c.b16 %v1044, %v1036
    %v1517 = vpack.c.b16 %v1045, %v1037
    %v1518 = vpack.c.b16 %v1046, %v1038
    %v1519 = vpack.c.b16 %v1047, %v1039
    %v1520 = vpack.c.b16 %v1048, %v1040
    %v1521 = vpack.c.b16 %v1049, %v1041
    %v1522 = vpack.c.b16 %v1050, %v1042
    %v1523 = vpack.c.b16 %v1051, %v1043
    %v1524 = vpack.c.b16 %v1060, %v1052
    %v1525 = vpack.c.b16 %v1061, %v1053
    %v1526 = vpack.c.b16 %v1062, %v1054
    %v1527 = vpack.c.b16 %v1063, %v1055
    %v1528 = vpack.c.b16 %v1064, %v1056
    %v1529 = vpack.c.b16 %v1065, %v1057
    %v1530 = vpack.c.b16 %v1066, %v1058
    %v1531 = vpack.c.b16 %v1067, %v1059
    %v1532 = vpack.c.b16 %v1076, %v1068
    %v1533 = vpack.c.b16 %v1077, %v1069
    %v1534 = vpack.c.b16 %v1078, %v1070
    %v1535 = vpack.c.b16 %v1079, %v1071
    %v1536 = vpack.c.b16 %v1080, %v1072
    %v1537 = vpack.c.b16 %v1081, %v1073
    %v1538 = vpack.c.b16 %v1082, %v1074
    %v1539 = vpack.c.b16 %v1083, %v1075
    %v1540 = vpack.c.b16 %v1092, %v1084
    %v1541 = vpack.c.b16 %v1093, %v1085
    %v1542 = vpack.c.b16 %v1094, %v1086
    %v1543 = vpack.c.b16 %v1095, %v1087
    %v1544 = vpack.c.b16 %v1096, %v1088
    %v1545 = vpack.c.b16 %v1097, %v1089
    %v1546 = vpack.c.b16 %v1098, %v1090
    %v1547 = vpack.c.b16 %v1099, %v1091
    %v1548 = vpack.c.b16 %v1108, %v1100
    %v1549 = vpack.c.b16 %v1109, %v1101
    %v1550 = vpack.c.b16 %v1110, %v1102
    %v1551 = vpack.c.b16 %v1111, %v1103
    %v1552 = vpack.c.b16 %v1112, %v1104
    %v1553 = vpack.c.b16 %v1113, %v1105
    %v1554 = vpack.c.b16 %v1114, %v1106
    %v1555 = vpack.c.b16 %v1115, %v1107
    %v1556 = vpack.c.b16 %v1124, %v1116
    %v1557 = vpack.c.b16 %v1125, %v1117
    %v1558 = vpack.c.b16 %v1126, %v1118
    %v1559 = vpack.c.b16 %v1127, %v1119
    %v1560 = vpack.c.b16 %v1128, %v1120
    %v1561 = vpack.c.b16 %v1129, %v1121
    %v1562 = vpack.c.b16 %v1130, %v1122
    %v1563 = vpack.c.b16 %v1131, %v1123
    %v1564 = vpack.c.b16 %v1140, %v1132
    %v1565 = vpack.c.b16 %v1141, %v1133
    %v1566 = vpack.c.b16 %v1142, %v1134
    %v1567 = vpack.c.b16 %v1143, %v1135
    %v1568 = vpack.c.b16 %v1144, %v1136
    %v1569 = vpack.c.b16 %v1145, %v1137
    %v1570 = vpack.c.b16 %v1146, %v1138
    %v1571 = vpack.c.b16 %v1147, %v1139
    %v1572 = vpack.c.b16 %v1156, %v1148
    %v1573 = vpack.c.b16 %v1157, %v1149
    %v1574 = vpack.c.b16 %v1158, %v1150
    %v1575 = vpack.c.b16 %v1159, %v1151
    %v1576 = vpack.c.b16 %v1160, %v1152
    %v1577 = vpack.c.b16 %v1161, %v1153
    %v1578 = vpack.c.b16 %v1162, %v1154
    %v1579 = vpack.c.b16 %v1163, %v1155
    %v1580 = vpack.c.b16 %v1172, %v1164
    %v1581 = vpack.c.b16 %v1173, %v1165
    %v1582 = vpack.c.b16 %v1174, %v1166
    %v1583 = vpack.c.b16 %v1175, %v1167
    %v1584 = vpack.c.b16 %v1176, %v1168
    %v1585 = vpack.c.b16 %v1177, %v1169
    %v1586 = vpack.c.b16 %v1178, %v1170
    %v1587 = vpack.c.b16 %v1179, %v1171
    %v1588 = vpack.c.b16 %v1188, %v1180
    %v1589 = vpack.c.b16 %v1189, %v1181
    %v1590 = vpack.c.b16 %v1190, %v1182
    %v1591 = vpack.c.b16 %v1191, %v1183
    %v1592 = vpack.c.b16 %v1192, %v1184
    %v1593 = vpack.c.b16 %v1193, %v1185
    %v1594 = vpack.c.b16 %v1194, %v1186
    %v1595 = vpack.c.b16 %v1195, %v1187
    %v1596 = vpack.c.b16 %v1204, %v1196
    %v1597 = vpack.c.b16 %v1205, %v1197
    %v1598 = vpack.c.b16 %v1206, %v1198
    %v1599 = vpack.c.b16 %v1207, %v1199
    %v1600 = vpack.c.b16 %v1208, %v1200
    %v1601 = vpack.c.b16 %v1209, %v1201
    %v1602 = vpack.c.b16 %v1210, %v1202
    %v1603 = vpack.c.b16 %v1211, %v1203
    %v1604 = vpack.c.b16 %v1220, %v1212
    %v1605 = vpack.c.b16 %v1221, %v1213
    %v1606 = vpack.c.b16 %v1222, %v1214
    %v1607 = vpack.c.b16 %v1223, %v1215
    %v1608 = vpack.c.b16 %v1224, %v1216
    %v1609 = vpack.c.b16 %v1225, %v1217
    %v1610 = vpack.c.b16 %v1226, %v1218
    %v1611 = vpack.c.b16 %v1227, %v1219
    %v1612 = vpack.c.b16 %v1236, %v1228
    %v1613 = vpack.c.b16 %v1237, %v1229
    %v1614 = vpack.c.b16 %v1238, %v1230
    %v1615 = vpack.c.b16 %v1239, %v1231
    %v1616 = vpack.c.b16 %v1240, %v1232
    %v1617 = vpack.c.b16 %v1241, %v1233
    %v1618 = vpack.c.b16 %v1242, %v1234
    %v1619 = vpack.c.b16 %v1243, %v1235
    %v1620 = vpack.c.b16 %v1252, %v1244
    %v1621 = vpack.c.b16 %v1253, %v1245
    %v1622 = vpack.c.b16 %v1254, %v1246
    %v1623 = vpack.c.b16 %v1255, %v1247
    %v1624 = vpack.c.b16 %v1256, %v1248
    %v1625 = vpack.c.b16 %v1257, %v1249
    %v1626 = vpack.c.b16 %v1258, %v1250
    %v1627 = vpack.c.b16 %v1259, %v1251
    %v1628 = vpack.c.b16 %v1268, %v1260
    %v1629 = vpack.c.b16 %v1269, %v1261
    %v1630 = vpack.c.b16 %v1270, %v1262
    %v1631 = vpack.c.b16 %v1271, %v1263
    %v1632 = vpack.c.b16 %v1272, %v1264
    %v1633 = vpack.c.b16 %v1273, %v1265
    %v1634 = vpack.c.b16 %v1274, %v1266
    %v1635 = vpack.c.b16 %v1275, %v1267
    %v1636 = vpack.c.b16 %v1284, %v1276
    %v1637 = vpack.c.b16 %v1285, %v1277
    %v1638 = vpack.c.b16 %v1286, %v1278
    %v1639 = vpack.c.b16 %v1287, %v1279
    %v1640 = vpack.c.b16 %v1288, %v1280
    %v1641 = vpack.c.b16 %v1289, %v1281
    %v1642 = vpack.c.b16 %v1290, %v1282
    %v1643 = vpack.c.b16 %v1291, %v1283
    %v1644 = vpack.c.b16 %v1300, %v1292
    %v1645 = vpack.c.b16 %v1301, %v1293
    %v1646 = vpack.c.b16 %v1302, %v1294
    %v1647 = vpack.c.b16 %v1303, %v1295
    %v1648 = vpack.c.b16 %v1304, %v1296
    %v1649 = vpack.c.b16 %v1305, %v1297
    %v1650 = vpack.c.b16 %v1306, %v1298
    %v1651 = vpack.c.b16 %v1307, %v1299
    %v1652 = vpack.c.b16 %v1316, %v1308
    %v1653 = vpack.c.b16 %v1317, %v1309
    %v1654 = vpack.c.b16 %v1318, %v1310
    %v1655 = vpack.c.b16 %v1319, %v1311
    %v1656 = vpack.c.b16 %v1320, %v1312
    %v1657 = vpack.c.b16 %v1321, %v1313
    %v1658 = vpack.c.b16 %v1322, %v1314
    %v1659 = vpack.c.b16 %v1323, %v1315
    %v1660 = vpack.c.b16 %v1332, %v1324
    %v1661 = vpack.c.b16 %v1333, %v1325
    %v1662 = vpack.c.b16 %v1334, %v1326
    %v1663 = vpack.c.b16 %v1335, %v1327
    %v1664 = vpack.c.b16 %v1336, %v1328
    %v1665 = vpack.c.b16 %v1337, %v1329
    %v1666 = vpack.c.b16 %v1338, %v1330
    %v1667 = vpack.c.b16 %v1339, %v1331
    %v1668 = vpack.c.b16 %v1348, %v1340
    %v1669 = vpack.c.b16 %v1349, %v1341
    %v1670 = vpack.c.b16 %v1350, %v1342
    %v1671 = vpack.c.b16 %v1351, %v1343
    %v1672 = vpack.c.b16 %v1352, %v1344
    %v1673 = vpack.c.b16 %v1353, %v1345
    %v1674 = vpack.c.b16 %v1354, %v1346
    %v1675 = vpack.c.b16 %v1355, %v1347
    %v1676 = vpack.c.b16 %v1364, %v1356
    %v1677 = vpack.c.b16 %v1365, %v1357
    %v1678 = vpack.c.b16 %v1366, %v1358
    %v1679 = vpack.c.b16 %v1367, %v1359
    %v1680 = vpack.c.b16 %v1368, %v1360
    %v1681 = vpack.c.b16 %v1369, %v1361
    %v1682 = vpack.c.b16 %v1370, %v1362
    %v1683 = vpack.c.b16 %v1371, %v1363
    %v1684 = vpack.c.b16 %v1380, %v1372
    %v1685 = vpack.c.b16 %v1381, %v1373
    %v1686 = vpack.c.b16 %v1382, %v1374
    %v1687 = vpack.c.b16 %v1383, %v1375
    %v1688 = vpack.c.b16 %v1384, %v1376
    %v1689 = vpack.c.b16 %v1385, %v1377
    %v1690 = vpack.c.b16 %v1386, %v1378
    %v1691 = vpack.c.b16 %v1387, %v1379
    %v1692 = vpack.c.b16 %v1396, %v1388
    %v1693 = vpack.c.b16 %v1397, %v1389
    %v1694 = vpack.c.b16 %v1398, %v1390
    %v1695 = vpack.c.b16 %v1399, %v1391
    %v1696 = vpack.c.b16 %v1400, %v1392
    %v1697 = vpack.c.b16 %v1401, %v1393
    %v1698 = vpack.c.b16 %v1402, %v1394
    %v1699 = vpack.c.b16 %v1403, %v1395
    %v1700 = vpack.c.b16 %v1412, %v1404
    %v1701 = vpack.c.b16 %v1413, %v1405
    %v1702 = vpack.c.b16 %v1414, %v1406
    %v1703 = vpack.c.b16 %v1415, %v1407
    %v1704 = vpack.c.b16 %v1416, %v1408
    %v1705 = vpack.c.b16 %v1417, %v1409
    %v1706 = vpack.c.b16 %v1418, %v1410
    %v1707 = vpack.c.b16 %v1419, %v1411
    %v1708 = vpack.c.b16 %v1428, %v1420
    %v1709 = vpack.c.b16 %v1429, %v1421
    %v1710 = vpack.c.b16 %v1430, %v1422
    %v1711 = vpack.c.b16 %v1431, %v1423
    %v1712 = vpack.c.b16 %v1432, %v1424
    %v1713 = vpack.c.b16 %v1433, %v1425
    %v1714 = vpack.c.b16 %v1434, %v1426
    %v1715 = vpack.c.b16 %v1435, %v1427
    %v1716 = vpack.c.b16 %v1444, %v1436
    %v1717 = vpack.c.b16 %v1445, %v1437
    %v1718 = vpack.c.b16 %v1446, %v1438
    %v1719 = vpack.c.b16 %v1447, %v1439
    %v1720 = vpack.c.b16 %v1448, %v1440
    %v1721 = vpack.c.b16 %v1449, %v1441
    %v1722 = vpack.c.b16 %v1450, %v1442
    %v1723 = vpack.c.b16 %v1451, %v1443
    %v1724 = vpack.c.b16 %v1460, %v1452
    %v1725 = vpack.c.b16 %v1461, %v1453
    %v1726 = vpack.c.b16 %v1462, %v1454
    %v1727 = vpack.c.b16 %v1463, %v1455
    %v1728 = vpack.c.b16 %v1464, %v1456
    %v1729 = vpack.c.b16 %v1465, %v1457
    %v1730 = vpack.c.b16 %v1466, %v1458
    %v1731 = vpack.c.b16 %v1467, %v1459
    %v1732 = vpack.c.b16 %v1476, %v1468
    %v1733 = vpack.c.b16 %v1477, %v1469
    %v1734 = vpack.c.b16 %v1478, %v1470
    %v1735 = vpack.c.b16 %v1479, %v1471
    %v1736 = vpack.c.b16 %v1480, %v1472
    %v1737 = vpack.c.b16 %v1481, %v1473
    %v1738 = vpack.c.b16 %v1482, %v1474
    %v1739 = vpack.c.b16 %v1483, %v1475
    %1996 = vmatprep.subr.bf16.mxu0 %v1541
    %1997 = vmatpush1.bf16.msra.mxu0 %v1540
    %1998 = vmatprep.subr.bf16.mxu0 %v1533
    %1999 = vmatpush1.bf16.msra.mxu0 %v1532
    %2000 = vmatprep.subr.bf16.mxu0 %v1525
    %2001 = vmatpush1.bf16.msra.mxu0 %v1524
    %2002 = vmatprep.subr.bf16.mxu0 %v1517
    %2003 = vmatpush1.bf16.msra.mxu0 %v1516
    %2004 = vmatprep.subr.bf16.mxu0 %v1509
    %2005 = vmatpush1.bf16.msra.mxu0 %v1508
    %2006 = vmatprep.subr.bf16.mxu0 %v1501
    %2007 = vmatpush1.bf16.msra.mxu0 %v1500
    %2008 = vmatprep.subr.bf16.mxu0 %v1493
    %2009 = vmatpush1.bf16.msra.mxu0 %v1492
    %2010 = vmatprep.subr.bf16.mxu0 %v1485
    %2011 = vmatpush1.bf16.msra.mxu0 %v1484
    %2012 = vmatprep.subr.bf16.mxu0 %v1605
    %2013 = vmatpush2.bf16.msra.mxu0 %v1604
    %2014 = vmatprep.subr.bf16.mxu0 %v1597
    %2015 = vmatpush2.bf16.msra.mxu0 %v1596
    %2016 = vmatprep.subr.bf16.mxu0 %v1589
    %2017 = vmatpush2.bf16.msra.mxu0 %v1588
    %2018 = vmatprep.subr.bf16.mxu0 %v1581
    %2019 = vmatpush2.bf16.msra.mxu0 %v1580
    %2020 = vmatprep.subr.bf16.mxu0 %v1573
    %2021 = vmatpush2.bf16.msra.mxu0 %v1572
    %2022 = vmatprep.subr.bf16.mxu0 %v1565
    %2023 = vmatpush2.bf16.msra.mxu0 %v1564
    %2024 = vmatprep.subr.bf16.mxu0 %v1557
    %2025 = vmatpush2.bf16.msra.mxu0 %v1556
    %2026 = vmatprep.subr.bf16.mxu0 %v1549
    %2027 = vmatpush2.bf16.msra.mxu0 %v1548
    %2028 = vmatprep.mubr.bf16.mxu0 %v415
    %2029 = vmatmul.mubr.bf16.gmra.mxu0 %v414
    %v2030 = vpop.f32.mrf.mxu0
    %v2031 = vadd.f32 %v679, %v2030
    %v2032 = vpop.f32.mrf.mxu0
    %v2033 = vadd.f32 %v683, %v2032
    %v2034 = vpop.f32.mrf.mxu0
    %v2035 = vadd.f32 %v679, %v2034
    %v2036 = vpop.f32.mrf.mxu0
    %v2037 = vadd.f32 %v683, %v2036
    %2038 = vdwg.mxu0
    %2039 = vmatprep.subr.bf16.mxu0 %v1669
    %2040 = vmatpush1.bf16.msra.mxu0 %v1668
    %2041 = vmatprep.subr.bf16.mxu0 %v1661
    %2042 = vmatpush1.bf16.msra.mxu0 %v1660
    %2043 = vmatprep.subr.bf16.mxu0 %v1653
    %2044 = vmatpush1.bf16.msra.mxu0 %v1652
    %2045 = vmatprep.subr.bf16.mxu0 %v1645
    %2046 = vmatpush1.bf16.msra.mxu0 %v1644
    %2047 = vmatprep.subr.bf16.mxu0 %v1637
    %2048 = vmatpush1.bf16.msra.mxu0 %v1636
    %2049 = vmatprep.subr.bf16.mxu0 %v1629
    %2050 = vmatpush1.bf16.msra.mxu0 %v1628
    %2051 = vmatprep.subr.bf16.mxu0 %v1621
    %2052 = vmatpush1.bf16.msra.mxu0 %v1620
    %2053 = vmatprep.subr.bf16.mxu0 %v1613
    %2054 = vmatpush1.bf16.msra.mxu0 %v1612
    %2055 = vmatprep.subr.bf16.mxu0 %v1733
    %2056 = vmatpush2.bf16.msra.mxu0 %v1732
    %2057 = vmatprep.subr.bf16.mxu0 %v1725
    %2058 = vmatpush2.bf16.msra.mxu0 %v1724
    %2059 = vmatprep.subr.bf16.mxu0 %v1717
    %2060 = vmatpush2.bf16.msra.mxu0 %v1716
    %2061 = vmatprep.subr.bf16.mxu0 %v1709
    %2062 = vmatpush2.bf16.msra.mxu0 %v1708
    %2063 = vmatprep.subr.bf16.mxu0 %v1701
    %2064 = vmatpush2.bf16.msra.mxu0 %v1700
    %2065 = vmatprep.subr.bf16.mxu0 %v1693
    %2066 = vmatpush2.bf16.msra.mxu0 %v1692
    %2067 = vmatprep.subr.bf16.mxu0 %v1685
    %2068 = vmatpush2.bf16.msra.mxu0 %v1684
    %2069 = vmatprep.subr.bf16.mxu0 %v1677
    %2070 = vmatpush2.bf16.msra.mxu0 %v1676
    %2071 = vmatprep.mubr.bf16.mxu0 %v417
    %2072 = vmatmul.mubr.bf16.gmra.mxu0 %v416
    %v2073 = vpop.f32.mrf.mxu0
    %v2074 = vadd.f32 %v2031, %v2073
    %v2075 = vpop.f32.mrf.mxu0
    %v2076 = vadd.f32 %v2033, %v2075
    %v2077 = vpop.f32.mrf.mxu0
    %v2078 = vadd.f32 %v2035, %v2077
    %v2079 = vpop.f32.mrf.mxu0
    %v2080 = vadd.f32 %v2037, %v2079
    %2081 = vdwg.mxu0
    %2082 = vmatprep.subr.bf16.mxu0 %v1543
    %2083 = vmatpush1.bf16.msra.mxu0 %v1542
    %2084 = vmatprep.subr.bf16.mxu0 %v1535
    %2085 = vmatpush1.bf16.msra.mxu0 %v1534
    %2086 = vmatprep.subr.bf16.mxu0 %v1527
    %2087 = vmatpush1.bf16.msra.mxu0 %v1526
    %2088 = vmatprep.subr.bf16.mxu0 %v1519
    %2089 = vmatpush1.bf16.msra.mxu0 %v1518
    %2090 = vmatprep.subr.bf16.mxu0 %v1511
    %2091 = vmatpush1.bf16.msra.mxu0 %v1510
    %2092 = vmatprep.subr.bf16.mxu0 %v1503
    %2093 = vmatpush1.bf16.msra.mxu0 %v1502
    %2094 = vmatprep.subr.bf16.mxu0 %v1495
    %2095 = vmatpush1.bf16.msra.mxu0 %v1494
    %2096 = vmatprep.subr.bf16.mxu0 %v1487
    %2097 = vmatpush1.bf16.msra.mxu0 %v1486
    %2098 = vmatprep.subr.bf16.mxu0 %v1607
    %2099 = vmatpush2.bf16.msra.mxu0 %v1606
    %2100 = vmatprep.subr.bf16.mxu0 %v1599
    %2101 = vmatpush2.bf16.msra.mxu0 %v1598
    %2102 = vmatprep.subr.bf16.mxu0 %v1591
    %2103 = vmatpush2.bf16.msra.mxu0 %v1590
    %2104 = vmatprep.subr.bf16.mxu0 %v1583
    %2105 = vmatpush2.bf16.msra.mxu0 %v1582
    %2106 = vmatprep.subr.bf16.mxu0 %v1575
    %2107 = vmatpush2.bf16.msra.mxu0 %v1574
    %2108 = vmatprep.subr.bf16.mxu0 %v1567
    %2109 = vmatpush2.bf16.msra.mxu0 %v1566
    %2110 = vmatprep.subr.bf16.mxu0 %v1559
    %2111 = vmatpush2.bf16.msra.mxu0 %v1558
    %2112 = vmatprep.subr.bf16.mxu0 %v1551
    %2113 = vmatpush2.bf16.msra.mxu0 %v1550
    %2114 = vmatprep.mubr.bf16.mxu0 %v415
    %2115 = vmatmul.mubr.bf16.gmra.mxu0 %v414
    %v2116 = vpop.f32.mrf.mxu0
    %v2117 = vadd.f32 %v687, %v2116
    %v2118 = vpop.f32.mrf.mxu0
    %v2119 = vadd.f32 %v691, %v2118
    %v2120 = vpop.f32.mrf.mxu0
    %v2121 = vadd.f32 %v687, %v2120
    %v2122 = vpop.f32.mrf.mxu0
    %v2123 = vadd.f32 %v691, %v2122
    %2124 = vdwg.mxu0
    %2125 = vmatprep.subr.bf16.mxu0 %v1671
    %2126 = vmatpush1.bf16.msra.mxu0 %v1670
    %2127 = vmatprep.subr.bf16.mxu0 %v1663
    %2128 = vmatpush1.bf16.msra.mxu0 %v1662
    %2129 = vmatprep.subr.bf16.mxu0 %v1655
    %2130 = vmatpush1.bf16.msra.mxu0 %v1654
    %2131 = vmatprep.subr.bf16.mxu0 %v1647
    %2132 = vmatpush1.bf16.msra.mxu0 %v1646
    %2133 = vmatprep.subr.bf16.mxu0 %v1639
    %2134 = vmatpush1.bf16.msra.mxu0 %v1638
    %2135 = vmatprep.subr.bf16.mxu0 %v1631
    %2136 = vmatpush1.bf16.msra.mxu0 %v1630
    %2137 = vmatprep.subr.bf16.mxu0 %v1623
    %2138 = vmatpush1.bf16.msra.mxu0 %v1622
    %2139 = vmatprep.subr.bf16.mxu0 %v1615
    %2140 = vmatpush1.bf16.msra.mxu0 %v1614
    %2141 = vmatprep.subr.bf16.mxu0 %v1735
    %2142 = vmatpush2.bf16.msra.mxu0 %v1734
    %2143 = vmatprep.subr.bf16.mxu0 %v1727
    %2144 = vmatpush2.bf16.msra.mxu0 %v1726
    %2145 = vmatprep.subr.bf16.mxu0 %v1719
    %2146 = vmatpush2.bf16.msra.mxu0 %v1718
    %2147 = vmatprep.subr.bf16.mxu0 %v1711
    %2148 = vmatpush2.bf16.msra.mxu0 %v1710
    %2149 = vmatprep.subr.bf16.mxu0 %v1703
    %2150 = vmatpush2.bf16.msra.mxu0 %v1702
    %2151 = vmatprep.subr.bf16.mxu0 %v1695
    %2152 = vmatpush2.bf16.msra.mxu0 %v1694
    %2153 = vmatprep.subr.bf16.mxu0 %v1687
    %2154 = vmatpush2.bf16.msra.mxu0 %v1686
    %2155 = vmatprep.subr.bf16.mxu0 %v1679
    %2156 = vmatpush2.bf16.msra.mxu0 %v1678
    %2157 = vmatprep.mubr.bf16.mxu0 %v417
    %2158 = vmatmul.mubr.bf16.gmra.mxu0 %v416
    %v2159 = vpop.f32.mrf.mxu0
    %v2160 = vadd.f32 %v2117, %v2159
    %v2161 = vpop.f32.mrf.mxu0
    %v2162 = vadd.f32 %v2119, %v2161
    %v2163 = vpop.f32.mrf.mxu0
    %v2164 = vadd.f32 %v2121, %v2163
    %v2165 = vpop.f32.mrf.mxu0
    %v2166 = vadd.f32 %v2123, %v2165
    %2167 = vdwg.mxu0
    %2168 = vmatprep.subr.bf16.mxu0 %v1545
    %2169 = vmatpush1.bf16.msra.mxu0 %v1544
    %2170 = vmatprep.subr.bf16.mxu0 %v1537
    %2171 = vmatpush1.bf16.msra.mxu0 %v1536
    %2172 = vmatprep.subr.bf16.mxu0 %v1529
    %2173 = vmatpush1.bf16.msra.mxu0 %v1528
    %2174 = vmatprep.subr.bf16.mxu0 %v1521
    %2175 = vmatpush1.bf16.msra.mxu0 %v1520
    %2176 = vmatprep.subr.bf16.mxu0 %v1513
    %2177 = vmatpush1.bf16.msra.mxu0 %v1512
    %2178 = vmatprep.subr.bf16.mxu0 %v1505
    %2179 = vmatpush1.bf16.msra.mxu0 %v1504
    %2180 = vmatprep.subr.bf16.mxu0 %v1497
    %2181 = vmatpush1.bf16.msra.mxu0 %v1496
    %2182 = vmatprep.subr.bf16.mxu0 %v1489
    %2183 = vmatpush1.bf16.msra.mxu0 %v1488
    %2184 = vmatprep.subr.bf16.mxu0 %v1609
    %2185 = vmatpush2.bf16.msra.mxu0 %v1608
    %2186 = vmatprep.subr.bf16.mxu0 %v1601
    %2187 = vmatpush2.bf16.msra.mxu0 %v1600
    %2188 = vmatprep.subr.bf16.mxu0 %v1593
    %2189 = vmatpush2.bf16.msra.mxu0 %v1592
    %2190 = vmatprep.subr.bf16.mxu0 %v1585
    %2191 = vmatpush2.bf16.msra.mxu0 %v1584
    %2192 = vmatprep.subr.bf16.mxu0 %v1577
    %2193 = vmatpush2.bf16.msra.mxu0 %v1576
    %2194 = vmatprep.subr.bf16.mxu0 %v1569
    %2195 = vmatpush2.bf16.msra.mxu0 %v1568
    %2196 = vmatprep.subr.bf16.mxu0 %v1561
    %2197 = vmatpush2.bf16.msra.mxu0 %v1560
    %2198 = vmatprep.subr.bf16.mxu0 %v1553
    %2199 = vmatpush2.bf16.msra.mxu0 %v1552
    %2200 = vmatprep.mubr.bf16.mxu0 %v415
    %2201 = vmatmul.mubr.bf16.gmra.mxu0 %v414
    %v2202 = vpop.f32.mrf.mxu0
    %v2203 = vadd.f32 %v695, %v2202
    %v2204 = vpop.f32.mrf.mxu0
    %v2205 = vadd.f32 %v699, %v2204
    %v2206 = vpop.f32.mrf.mxu0
    %v2207 = vadd.f32 %v695, %v2206
    %v2208 = vpop.f32.mrf.mxu0
    %v2209 = vadd.f32 %v699, %v2208
    %2210 = vdwg.mxu0
    %2211 = vmatprep.subr.bf16.mxu0 %v1673
    %2212 = vmatpush1.bf16.msra.mxu0 %v1672
    %2213 = vmatprep.subr.bf16.mxu0 %v1665
    %2214 = vmatpush1.bf16.msra.mxu0 %v1664
    %2215 = vmatprep.subr.bf16.mxu0 %v1657
    %2216 = vmatpush1.bf16.msra.mxu0 %v1656
    %2217 = vmatprep.subr.bf16.mxu0 %v1649
    %2218 = vmatpush1.bf16.msra.mxu0 %v1648
    %2219 = vmatprep.subr.bf16.mxu0 %v1641
    %2220 = vmatpush1.bf16.msra.mxu0 %v1640
    %2221 = vmatprep.subr.bf16.mxu0 %v1633
    %2222 = vmatpush1.bf16.msra.mxu0 %v1632
    %2223 = vmatprep.subr.bf16.mxu0 %v1625
    %2224 = vmatpush1.bf16.msra.mxu0 %v1624
    %2225 = vmatprep.subr.bf16.mxu0 %v1617
    %2226 = vmatpush1.bf16.msra.mxu0 %v1616
    %2227 = vmatprep.subr.bf16.mxu0 %v1737
    %2228 = vmatpush2.bf16.msra.mxu0 %v1736
    %2229 = vmatprep.subr.bf16.mxu0 %v1729
    %2230 = vmatpush2.bf16.msra.mxu0 %v1728
    %2231 = vmatprep.subr.bf16.mxu0 %v1721
    %2232 = vmatpush2.bf16.msra.mxu0 %v1720
    %2233 = vmatprep.subr.bf16.mxu0 %v1713
    %2234 = vmatpush2.bf16.msra.mxu0 %v1712
    %2235 = vmatprep.subr.bf16.mxu0 %v1705
    %2236 = vmatpush2.bf16.msra.mxu0 %v1704
    %2237 = vmatprep.subr.bf16.mxu0 %v1697
    %2238 = vmatpush2.bf16.msra.mxu0 %v1696
    %2239 = vmatprep.subr.bf16.mxu0 %v1689
    %2240 = vmatpush2.bf16.msra.mxu0 %v1688
    %2241 = vmatprep.subr.bf16.mxu0 %v1681
    %2242 = vmatpush2.bf16.msra.mxu0 %v1680
    %2243 = vmatprep.mubr.bf16.mxu0 %v417
    %2244 = vmatmul.mubr.bf16.gmra.mxu0 %v416
    %v2245 = vpop.f32.mrf.mxu0
    %v2246 = vadd.f32 %v2203, %v2245
    %v2247 = vpop.f32.mrf.mxu0
    %v2248 = vadd.f32 %v2205, %v2247
    %v2249 = vpop.f32.mrf.mxu0
    %v2250 = vadd.f32 %v2207, %v2249
    %v2251 = vpop.f32.mrf.mxu0
    %v2252 = vadd.f32 %v2209, %v2251
    %2253 = vdwg.mxu0
    %2254 = vmatprep.subr.bf16.mxu0 %v1547
    %2255 = vmatpush1.bf16.msra.mxu0 %v1546
    %2256 = vmatprep.subr.bf16.mxu0 %v1539
    %2257 = vmatpush1.bf16.msra.mxu0 %v1538
    %2258 = vmatprep.subr.bf16.mxu0 %v1531
    %2259 = vmatpush1.bf16.msra.mxu0 %v1530
    %2260 = vmatprep.subr.bf16.mxu0 %v1523
    %2261 = vmatpush1.bf16.msra.mxu0 %v1522
    %2262 = vmatprep.subr.bf16.mxu0 %v1515
    %2263 = vmatpush1.bf16.msra.mxu0 %v1514
    %2264 = vmatprep.subr.bf16.mxu0 %v1507
    %2265 = vmatpush1.bf16.msra.mxu0 %v1506
    %2266 = vmatprep.subr.bf16.mxu0 %v1499
    %2267 = vmatpush1.bf16.msra.mxu0 %v1498
    %2268 = vmatprep.subr.bf16.mxu0 %v1491
    %2269 = vmatpush1.bf16.msra.mxu0 %v1490
    %2270 = vmatprep.subr.bf16.mxu0 %v1611
    %2271 = vmatpush2.bf16.msra.mxu0 %v1610
    %2272 = vmatprep.subr.bf16.mxu0 %v1603
    %2273 = vmatpush2.bf16.msra.mxu0 %v1602
    %2274 = vmatprep.subr.bf16.mxu0 %v1595
    %2275 = vmatpush2.bf16.msra.mxu0 %v1594
    %2276 = vmatprep.subr.bf16.mxu0 %v1587
    %2277 = vmatpush2.bf16.msra.mxu0 %v1586
    %2278 = vmatprep.subr.bf16.mxu0 %v1579
    %2279 = vmatpush2.bf16.msra.mxu0 %v1578
    %2280 = vmatprep.subr.bf16.mxu0 %v1571
    %2281 = vmatpush2.bf16.msra.mxu0 %v1570
    %2282 = vmatprep.subr.bf16.mxu0 %v1563
    %2283 = vmatpush2.bf16.msra.mxu0 %v1562
    %2284 = vmatprep.subr.bf16.mxu0 %v1555
    %2285 = vmatpush2.bf16.msra.mxu0 %v1554
    %2286 = vmatprep.mubr.bf16.mxu0 %v415
    %2287 = vmatmul.mubr.bf16.gmra.mxu0 %v414
    %v2288 = vpop.f32.mrf.mxu0
    %v2289 = vadd.f32 %v703, %v2288
    %v2290 = vpop.f32.mrf.mxu0
    %v2291 = vadd.f32 %v707, %v2290
    %v2292 = vpop.f32.mrf.mxu0
    %v2293 = vadd.f32 %v703, %v2292
    %v2294 = vpop.f32.mrf.mxu0
    %v2295 = vadd.f32 %v707, %v2294
    %2296 = vdwg.mxu0
    %2297 = vmatprep.subr.bf16.mxu0 %v1675
    %2298 = vmatpush1.bf16.msra.mxu0 %v1674
    %2299 = vmatprep.subr.bf16.mxu0 %v1667
    %2300 = vmatpush1.bf16.msra.mxu0 %v1666
    %2301 = vmatprep.subr.bf16.mxu0 %v1659
    %2302 = vmatpush1.bf16.msra.mxu0 %v1658
    %2303 = vmatprep.subr.bf16.mxu0 %v1651
    %2304 = vmatpush1.bf16.msra.mxu0 %v1650
    %2305 = vmatprep.subr.bf16.mxu0 %v1643
    %2306 = vmatpush1.bf16.msra.mxu0 %v1642
    %2307 = vmatprep.subr.bf16.mxu0 %v1635
    %2308 = vmatpush1.bf16.msra.mxu0 %v1634
    %2309 = vmatprep.subr.bf16.mxu0 %v1627
    %2310 = vmatpush1.bf16.msra.mxu0 %v1626
    %2311 = vmatprep.subr.bf16.mxu0 %v1619
    %2312 = vmatpush1.bf16.msra.mxu0 %v1618
    %2313 = vmatprep.subr.bf16.mxu0 %v1739
    %2314 = vmatpush2.bf16.msra.mxu0 %v1738
    %2315 = vmatprep.subr.bf16.mxu0 %v1731
    %2316 = vmatpush2.bf16.msra.mxu0 %v1730
    %2317 = vmatprep.subr.bf16.mxu0 %v1723
    %2318 = vmatpush2.bf16.msra.mxu0 %v1722
    %2319 = vmatprep.subr.bf16.mxu0 %v1715
    %2320 = vmatpush2.bf16.msra.mxu0 %v1714
    %2321 = vmatprep.subr.bf16.mxu0 %v1707
    %2322 = vmatpush2.bf16.msra.mxu0 %v1706
    %2323 = vmatprep.subr.bf16.mxu0 %v1699
    %2324 = vmatpush2.bf16.msra.mxu0 %v1698
    %2325 = vmatprep.subr.bf16.mxu0 %v1691
    %2326 = vmatpush2.bf16.msra.mxu0 %v1690
    %2327 = vmatprep.subr.bf16.mxu0 %v1683
    %2328 = vmatpush2.bf16.msra.mxu0 %v1682
    %2329 = vmatprep.mubr.bf16.mxu0 %v417
    %2330 = vmatmul.mubr.bf16.gmra.mxu0 %v416
    %v2331 = vpop.f32.mrf.mxu0
    %v2332 = vadd.f32 %v2289, %v2331
    %v2333 = vpop.f32.mrf.mxu0
    %v2334 = vadd.f32 %v2291, %v2333
    %v2335 = vpop.f32.mrf.mxu0
    %v2336 = vadd.f32 %v2293, %v2335
    %v2337 = vpop.f32.mrf.mxu0
    %v2338 = vadd.f32 %v2295, %v2337
    %2339 = vdwg.mxu0
    %v2340 = vmul.f32 %v2074, 0.5
    %v2341 = vmul.f32 %v2076, 0.5
    %v2342 = vmul.f32 %v2160, 0.5
    %v2343 = vmul.f32 %v2162, 0.5
    %v2344 = vmul.f32 %v2246, 0.5
    %v2345 = vmul.f32 %v2248, 0.5
    %v2346 = vmul.f32 %v2332, 0.5
    %v2347 = vmul.f32 %v2334, 0.5
    %v2348 = vmul.f32 %v2078, 0.5
    %v2349 = vmul.f32 %v2080, 0.5
    %v2350 = vmul.f32 %v2164, 0.5
    %v2351 = vmul.f32 %v2166, 0.5
    %v2352 = vmul.f32 %v2250, 0.5
    %v2353 = vmul.f32 %v2252, 0.5
    %v2354 = vmul.f32 %v2336, 0.5
    %v2355 = vmul.f32 %v2338, 0.5
    %v2356 = vmul.f32 %v2074, 0.70710677
    %v2357 = vmul.f32 %v2076, 0.70710677
    %v2358 = vmul.f32 %v2160, 0.70710677
    %v2359 = vmul.f32 %v2162, 0.70710677
    %v2360 = vmul.f32 %v2246, 0.70710677
    %v2361 = vmul.f32 %v2248, 0.70710677
    %v2362 = vmul.f32 %v2332, 0.70710677
    %v2363 = vmul.f32 %v2334, 0.70710677
    %v2364 = vmul.f32 %v2078, 0.70710677
    %v2365 = vmul.f32 %v2080, 0.70710677
    %v2366 = vmul.f32 %v2164, 0.70710677
    %v2367 = vmul.f32 %v2166, 0.70710677
    %v2368 = vmul.f32 %v2250, 0.70710677
    %v2369 = vmul.f32 %v2252, 0.70710677
    %v2370 = vmul.f32 %v2336, 0.70710677
    %v2371 = vmul.f32 %v2338, 0.70710677
    %v2372 = vand.u32 2147483647, %v2356
    %v2373 = vand.u32 2147483647, %v2357
    %v2374 = vand.u32 2147483647, %v2358
    %v2375 = vand.u32 2147483647, %v2359
    %v2376 = vand.u32 2147483647, %v2360
    %v2377 = vand.u32 2147483647, %v2361
    %v2378 = vand.u32 2147483647, %v2362
    %v2379 = vand.u32 2147483647, %v2363
    %v2380 = vand.u32 2147483647, %v2364
    %v2381 = vand.u32 2147483647, %v2365
    %v2382 = vand.u32 2147483647, %v2366
    %v2383 = vand.u32 2147483647, %v2367
    %v2384 = vand.u32 2147483647, %v2368
    %v2385 = vand.u32 2147483647, %v2369
    %v2386 = vand.u32 2147483647, %v2370
    %v2387 = vand.u32 2147483647, %v2371
    %v2388 = vmul.f32 %v2372, 0.3275911
    %v2389 = vmul.f32 %v2373, 0.3275911
    %v2390 = vmul.f32 %v2374, 0.3275911
    %v2391 = vmul.f32 %v2375, 0.3275911
    %v2392 = vmul.f32 %v2376, 0.3275911
    %v2393 = vmul.f32 %v2377, 0.3275911
    %v2394 = vmul.f32 %v2378, 0.3275911
    %v2395 = vmul.f32 %v2379, 0.3275911
    %v2396 = vmul.f32 %v2380, 0.3275911
    %v2397 = vmul.f32 %v2381, 0.3275911
    %v2398 = vmul.f32 %v2382, 0.3275911
    %v2399 = vmul.f32 %v2383, 0.3275911
    %v2400 = vmul.f32 %v2384, 0.3275911
    %v2401 = vmul.f32 %v2385, 0.3275911
    %v2402 = vmul.f32 %v2386, 0.3275911
    %v2403 = vmul.f32 %v2387, 0.3275911
    %v2404 = vadd.f32 %v2388, 1.0
    %v2405 = vadd.f32 %v2389, 1.0
    %v2406 = vadd.f32 %v2390, 1.0
    %v2407 = vadd.f32 %v2391, 1.0
    %v2408 = vadd.f32 %v2392, 1.0
    %v2409 = vadd.f32 %v2393, 1.0
    %v2410 = vadd.f32 %v2394, 1.0
    %v2411 = vadd.f32 %v2395, 1.0
    %v2412 = vadd.f32 %v2396, 1.0
    %v2413 = vadd.f32 %v2397, 1.0
    %v2414 = vadd.f32 %v2398, 1.0
    %v2415 = vadd.f32 %v2399, 1.0
    %v2416 = vadd.f32 %v2400, 1.0
    %v2417 = vadd.f32 %v2401, 1.0
    %v2418 = vadd.f32 %v2402, 1.0
    %v2419 = vadd.f32 %v2403, 1.0
    %v2420 = vrcp.pop %v2404
    %v2421 = vmul.f32 1.0, %v2420
    %v2422 = vrcp.pop %v2405
    %v2423 = vmul.f32 1.0, %v2422
    %v2424 = vrcp.pop %v2406
    %v2425 = vmul.f32 1.0, %v2424
    %v2426 = vrcp.pop %v2407
    %v2427 = vmul.f32 1.0, %v2426
    %v2428 = vrcp.pop %v2408
    %v2429 = vmul.f32 1.0, %v2428
    %v2430 = vrcp.pop %v2409
    %v2431 = vmul.f32 1.0, %v2430
    %v2432 = vrcp.pop %v2410
    %v2433 = vmul.f32 1.0, %v2432
    %v2434 = vrcp.pop %v2411
    %v2435 = vmul.f32 1.0, %v2434
    %v2436 = vrcp.pop %v2412
    %v2437 = vmul.f32 1.0, %v2436
    %v2438 = vrcp.pop %v2413
    %v2439 = vmul.f32 1.0, %v2438
    %v2440 = vrcp.pop %v2414
    %v2441 = vmul.f32 1.0, %v2440
    %v2442 = vrcp.pop %v2415
    %v2443 = vmul.f32 1.0, %v2442
    %v2444 = vrcp.pop %v2416
    %v2445 = vmul.f32 1.0, %v2444
    %v2446 = vrcp.pop %v2417
    %v2447 = vmul.f32 1.0, %v2446
    %v2448 = vrcp.pop %v2418
    %v2449 = vmul.f32 1.0, %v2448
    %v2450 = vrcp.pop %v2419
    %v2451 = vmul.f32 1.0, %v2450
    %v2452 = vmul.f32 %v2421, 1.0614054
    %v2453 = vmul.f32 %v2423, 1.0614054
    %v2454 = vmul.f32 %v2425, 1.0614054
    %v2455 = vmul.f32 %v2427, 1.0614054
    %v2456 = vmul.f32 %v2429, 1.0614054
    %v2457 = vmul.f32 %v2431, 1.0614054
    %v2458 = vmul.f32 %v2433, 1.0614054
    %v2459 = vmul.f32 %v2435, 1.0614054
    %v2460 = vmul.f32 %v2437, 1.0614054
    %v2461 = vmul.f32 %v2439, 1.0614054
    %v2462 = vmul.f32 %v2441, 1.0614054
    %v2463 = vmul.f32 %v2443, 1.0614054
    %v2464 = vmul.f32 %v2445, 1.0614054
    %v2465 = vmul.f32 %v2447, 1.0614054
    %v2466 = vmul.f32 %v2449, 1.0614054
    %v2467 = vmul.f32 %v2451, 1.0614054
    %v2468 = vadd.f32 %v2452, -1.4531521
    %v2469 = vadd.f32 %v2453, -1.4531521
    %v2470 = vadd.f32 %v2454, -1.4531521
    %v2471 = vadd.f32 %v2455, -1.4531521
    %v2472 = vadd.f32 %v2456, -1.4531521
    %v2473 = vadd.f32 %v2457, -1.4531521
    %v2474 = vadd.f32 %v2458, -1.4531521
    %v2475 = vadd.f32 %v2459, -1.4531521
    %v2476 = vadd.f32 %v2460, -1.4531521
    %v2477 = vadd.f32 %v2461, -1.4531521
    %v2478 = vadd.f32 %v2462, -1.4531521
    %v2479 = vadd.f32 %v2463, -1.4531521
    %v2480 = vadd.f32 %v2464, -1.4531521
    %v2481 = vadd.f32 %v2465, -1.4531521
    %v2482 = vadd.f32 %v2466, -1.4531521
    %v2483 = vadd.f32 %v2467, -1.4531521
    %v2484 = vmul.f32 %v2468, %v2421
    %v2485 = vmul.f32 %v2469, %v2423
    %v2486 = vmul.f32 %v2470, %v2425
    %v2487 = vmul.f32 %v2471, %v2427
    %v2488 = vmul.f32 %v2472, %v2429
    %v2489 = vmul.f32 %v2473, %v2431
    %v2490 = vmul.f32 %v2474, %v2433
    %v2491 = vmul.f32 %v2475, %v2435
    %v2492 = vmul.f32 %v2476, %v2437
    %v2493 = vmul.f32 %v2477, %v2439
    %v2494 = vmul.f32 %v2478, %v2441
    %v2495 = vmul.f32 %v2479, %v2443
    %v2496 = vmul.f32 %v2480, %v2445
    %v2497 = vmul.f32 %v2481, %v2447
    %v2498 = vmul.f32 %v2482, %v2449
    %v2499 = vmul.f32 %v2483, %v2451
    %v2500 = vadd.f32 %v2484, 1.4214138
    %v2501 = vadd.f32 %v2485, 1.4214138
    %v2502 = vadd.f32 %v2486, 1.4214138
    %v2503 = vadd.f32 %v2487, 1.4214138
    %v2504 = vadd.f32 %v2488, 1.4214138
    %v2505 = vadd.f32 %v2489, 1.4214138
    %v2506 = vadd.f32 %v2490, 1.4214138
    %v2507 = vadd.f32 %v2491, 1.4214138
    %v2508 = vadd.f32 %v2492, 1.4214138
    %v2509 = vadd.f32 %v2493, 1.4214138
    %v2510 = vadd.f32 %v2494, 1.4214138
    %v2511 = vadd.f32 %v2495, 1.4214138
    %v2512 = vadd.f32 %v2496, 1.4214138
    %v2513 = vadd.f32 %v2497, 1.4214138
    %v2514 = vadd.f32 %v2498, 1.4214138
    %v2515 = vadd.f32 %v2499, 1.4214138
    %v2516 = vmul.f32 %v2500, %v2421
    %v2517 = vmul.f32 %v2501, %v2423
    %v2518 = vmul.f32 %v2502, %v2425
    %v2519 = vmul.f32 %v2503, %v2427
    %v2520 = vmul.f32 %v2504, %v2429
    %v2521 = vmul.f32 %v2505, %v2431
    %v2522 = vmul.f32 %v2506, %v2433
    %v2523 = vmul.f32 %v2507, %v2435
    %v2524 = vmul.f32 %v2508, %v2437
    %v2525 = vmul.f32 %v2509, %v2439
    %v2526 = vmul.f32 %v2510, %v2441
    %v2527 = vmul.f32 %v2511, %v2443
    %v2528 = vmul.f32 %v2512, %v2445
    %v2529 = vmul.f32 %v2513, %v2447
    %v2530 = vmul.f32 %v2514, %v2449
    %v2531 = vmul.f32 %v2515, %v2451
    %v2532 = vadd.f32 %v2516, -0.28449672
    %v2533 = vadd.f32 %v2517, -0.28449672
    %v2534 = vadd.f32 %v2518, -0.28449672
    %v2535 = vadd.f32 %v2519, -0.28449672
    %v2536 = vadd.f32 %v2520, -0.28449672
    %v2537 = vadd.f32 %v2521, -0.28449672
    %v2538 = vadd.f32 %v2522, -0.28449672
    %v2539 = vadd.f32 %v2523, -0.28449672
    %v2540 = vadd.f32 %v2524, -0.28449672
    %v2541 = vadd.f32 %v2525, -0.28449672
    %v2542 = vadd.f32 %v2526, -0.28449672
    %v2543 = vadd.f32 %v2527, -0.28449672
    %v2544 = vadd.f32 %v2528, -0.28449672
    %v2545 = vadd.f32 %v2529, -0.28449672
    %v2546 = vadd.f32 %v2530, -0.28449672
    %v2547 = vadd.f32 %v2531, -0.28449672
    %v2548 = vmul.f32 %v2532, %v2421
    %v2549 = vmul.f32 %v2533, %v2423
    %v2550 = vmul.f32 %v2534, %v2425
    %v2551 = vmul.f32 %v2535, %v2427
    %v2552 = vmul.f32 %v2536, %v2429
    %v2553 = vmul.f32 %v2537, %v2431
    %v2554 = vmul.f32 %v2538, %v2433
    %v2555 = vmul.f32 %v2539, %v2435
    %v2556 = vmul.f32 %v2540, %v2437
    %v2557 = vmul.f32 %v2541, %v2439
    %v2558 = vmul.f32 %v2542, %v2441
    %v2559 = vmul.f32 %v2543, %v2443
    %v2560 = vmul.f32 %v2544, %v2445
    %v2561 = vmul.f32 %v2545, %v2447
    %v2562 = vmul.f32 %v2546, %v2449
    %v2563 = vmul.f32 %v2547, %v2451
    %v2564 = vadd.f32 %v2548, 0.2548296
    %v2565 = vadd.f32 %v2549, 0.2548296
    %v2566 = vadd.f32 %v2550, 0.2548296
    %v2567 = vadd.f32 %v2551, 0.2548296
    %v2568 = vadd.f32 %v2552, 0.2548296
    %v2569 = vadd.f32 %v2553, 0.2548296
    %v2570 = vadd.f32 %v2554, 0.2548296
    %v2571 = vadd.f32 %v2555, 0.2548296
    %v2572 = vadd.f32 %v2556, 0.2548296
    %v2573 = vadd.f32 %v2557, 0.2548296
    %v2574 = vadd.f32 %v2558, 0.2548296
    %v2575 = vadd.f32 %v2559, 0.2548296
    %v2576 = vadd.f32 %v2560, 0.2548296
    %v2577 = vadd.f32 %v2561, 0.2548296
    %v2578 = vadd.f32 %v2562, 0.2548296
    %v2579 = vadd.f32 %v2563, 0.2548296
    %v2580 = vmul.f32 %v2564, %v2421
    %v2581 = vmul.f32 %v2565, %v2423
    %v2582 = vmul.f32 %v2566, %v2425
    %v2583 = vmul.f32 %v2567, %v2427
    %v2584 = vmul.f32 %v2568, %v2429
    %v2585 = vmul.f32 %v2569, %v2431
    %v2586 = vmul.f32 %v2570, %v2433
    %v2587 = vmul.f32 %v2571, %v2435
    %v2588 = vmul.f32 %v2572, %v2437
    %v2589 = vmul.f32 %v2573, %v2439
    %v2590 = vmul.f32 %v2574, %v2441
    %v2591 = vmul.f32 %v2575, %v2443
    %v2592 = vmul.f32 %v2576, %v2445
    %v2593 = vmul.f32 %v2577, %v2447
    %v2594 = vmul.f32 %v2578, %v2449
    %v2595 = vmul.f32 %v2579, %v2451
    %v2596 = vsub.f32 0.0, %v2372
    %v2597 = vsub.f32 0.0, %v2373
    %v2598 = vsub.f32 0.0, %v2374
    %v2599 = vsub.f32 0.0, %v2375
    %v2600 = vsub.f32 0.0, %v2376
    %v2601 = vsub.f32 0.0, %v2377
    %v2602 = vsub.f32 0.0, %v2378
    %v2603 = vsub.f32 0.0, %v2379
    %v2604 = vsub.f32 0.0, %v2380
    %v2605 = vsub.f32 0.0, %v2381
    %v2606 = vsub.f32 0.0, %v2382
    %v2607 = vsub.f32 0.0, %v2383
    %v2608 = vsub.f32 0.0, %v2384
    %v2609 = vsub.f32 0.0, %v2385
    %v2610 = vsub.f32 0.0, %v2386
    %v2611 = vsub.f32 0.0, %v2387
    %v2612 = vmul.f32 %v2596, %v2372
    %v2613 = vmul.f32 %v2597, %v2373
    %v2614 = vmul.f32 %v2598, %v2374
    %v2615 = vmul.f32 %v2599, %v2375
    %v2616 = vmul.f32 %v2600, %v2376
    %v2617 = vmul.f32 %v2601, %v2377
    %v2618 = vmul.f32 %v2602, %v2378
    %v2619 = vmul.f32 %v2603, %v2379
    %v2620 = vmul.f32 %v2604, %v2380
    %v2621 = vmul.f32 %v2605, %v2381
    %v2622 = vmul.f32 %v2606, %v2382
    %v2623 = vmul.f32 %v2607, %v2383
    %v2624 = vmul.f32 %v2608, %v2384
    %v2625 = vmul.f32 %v2609, %v2385
    %v2626 = vmul.f32 %v2610, %v2386
    %v2627 = vmul.f32 %v2611, %v2387
    %v2628 = vmul.f32 %v2612, 1.442695
    %v2629 = vpow.pop %v2628
    %v2630 = vmul.f32 %v2613, 1.442695
    %v2631 = vpow.pop %v2630
    %v2632 = vmul.f32 %v2614, 1.442695
    %v2633 = vpow.pop %v2632
    %v2634 = vmul.f32 %v2615, 1.442695
    %v2635 = vpow.pop %v2634
    %v2636 = vmul.f32 %v2616, 1.442695
    %v2637 = vpow.pop %v2636
    %v2638 = vmul.f32 %v2617, 1.442695
    %v2639 = vpow.pop %v2638
    %v2640 = vmul.f32 %v2618, 1.442695
    %v2641 = vpow.pop %v2640
    %v2642 = vmul.f32 %v2619, 1.442695
    %v2643 = vpow.pop %v2642
    %v2644 = vmul.f32 %v2620, 1.442695
    %v2645 = vpow.pop %v2644
    %v2646 = vmul.f32 %v2621, 1.442695
    %v2647 = vpow.pop %v2646
    %v2648 = vmul.f32 %v2622, 1.442695
    %v2649 = vpow.pop %v2648
    %v2650 = vmul.f32 %v2623, 1.442695
    %v2651 = vpow.pop %v2650
    %v2652 = vmul.f32 %v2624, 1.442695
    %v2653 = vpow.pop %v2652
    %v2654 = vmul.f32 %v2625, 1.442695
    %v2655 = vpow.pop %v2654
    %v2656 = vmul.f32 %v2626, 1.442695
    %v2657 = vpow.pop %v2656
    %v2658 = vmul.f32 %v2627, 1.442695
    %v2659 = vpow.pop %v2658
    %v2660 = vmul.f32 %v2580, %v2629
    %v2661 = vmul.f32 %v2581, %v2631
    %v2662 = vmul.f32 %v2582, %v2633
    %v2663 = vmul.f32 %v2583, %v2635
    %v2664 = vmul.f32 %v2584, %v2637
    %v2665 = vmul.f32 %v2585, %v2639
    %v2666 = vmul.f32 %v2586, %v2641
    %v2667 = vmul.f32 %v2587, %v2643
    %v2668 = vmul.f32 %v2588, %v2645
    %v2669 = vmul.f32 %v2589, %v2647
    %v2670 = vmul.f32 %v2590, %v2649
    %v2671 = vmul.f32 %v2591, %v2651
    %v2672 = vmul.f32 %v2592, %v2653
    %v2673 = vmul.f32 %v2593, %v2655
    %v2674 = vmul.f32 %v2594, %v2657
    %v2675 = vmul.f32 %v2595, %v2659
    %v2676 = vsub.f32 1.0, %v2660
    %v2677 = vsub.f32 1.0, %v2661
    %v2678 = vsub.f32 1.0, %v2662
    %v2679 = vsub.f32 1.0, %v2663
    %v2680 = vsub.f32 1.0, %v2664
    %v2681 = vsub.f32 1.0, %v2665
    %v2682 = vsub.f32 1.0, %v2666
    %v2683 = vsub.f32 1.0, %v2667
    %v2684 = vsub.f32 1.0, %v2668
    %v2685 = vsub.f32 1.0, %v2669
    %v2686 = vsub.f32 1.0, %v2670
    %v2687 = vsub.f32 1.0, %v2671
    %v2688 = vsub.f32 1.0, %v2672
    %v2689 = vsub.f32 1.0, %v2673
    %v2690 = vsub.f32 1.0, %v2674
    %v2691 = vsub.f32 1.0, %v2675
    %vm2692 = vcmp.ge.f32.partialorder %v2356, 0.0
    %vm2693 = vcmp.ge.f32.partialorder %v2357, 0.0
    %vm2694 = vcmp.ge.f32.partialorder %v2358, 0.0
    %vm2695 = vcmp.ge.f32.partialorder %v2359, 0.0
    %vm2696 = vcmp.ge.f32.partialorder %v2360, 0.0
    %vm2697 = vcmp.ge.f32.partialorder %v2361, 0.0
    %vm2698 = vcmp.ge.f32.partialorder %v2362, 0.0
    %vm2699 = vcmp.ge.f32.partialorder %v2363, 0.0
    %vm2700 = vcmp.ge.f32.partialorder %v2364, 0.0
    %vm2701 = vcmp.ge.f32.partialorder %v2365, 0.0
    %vm2702 = vcmp.ge.f32.partialorder %v2366, 0.0
    %vm2703 = vcmp.ge.f32.partialorder %v2367, 0.0
    %vm2704 = vcmp.ge.f32.partialorder %v2368, 0.0
    %vm2705 = vcmp.ge.f32.partialorder %v2369, 0.0
    %vm2706 = vcmp.ge.f32.partialorder %v2370, 0.0
    %vm2707 = vcmp.ge.f32.partialorder %v2371, 0.0
    %v2708 = vsub.f32 0.0, %v2676
    %v2709 = vsub.f32 0.0, %v2677
    %v2710 = vsub.f32 0.0, %v2678
    %v2711 = vsub.f32 0.0, %v2679
    %v2712 = vsub.f32 0.0, %v2680
    %v2713 = vsub.f32 0.0, %v2681
    %v2714 = vsub.f32 0.0, %v2682
    %v2715 = vsub.f32 0.0, %v2683
    %v2716 = vsub.f32 0.0, %v2684
    %v2717 = vsub.f32 0.0, %v2685
    %v2718 = vsub.f32 0.0, %v2686
    %v2719 = vsub.f32 0.0, %v2687
    %v2720 = vsub.f32 0.0, %v2688
    %v2721 = vsub.f32 0.0, %v2689
    %v2722 = vsub.f32 0.0, %v2690
    %v2723 = vsub.f32 0.0, %v2691
    %v2724 = vsel %vm2692, %v2676, %v2708
    %v2725 = vsel %vm2693, %v2677, %v2709
    %v2726 = vsel %vm2694, %v2678, %v2710
    %v2727 = vsel %vm2695, %v2679, %v2711
    %v2728 = vsel %vm2696, %v2680, %v2712
    %v2729 = vsel %vm2697, %v2681, %v2713
    %v2730 = vsel %vm2698, %v2682, %v2714
    %v2731 = vsel %vm2699, %v2683, %v2715
    %v2732 = vsel %vm2700, %v2684, %v2716
    %v2733 = vsel %vm2701, %v2685, %v2717
    %v2734 = vsel %vm2702, %v2686, %v2718
    %v2735 = vsel %vm2703, %v2687, %v2719
    %v2736 = vsel %vm2704, %v2688, %v2720
    %v2737 = vsel %vm2705, %v2689, %v2721
    %v2738 = vsel %vm2706, %v2690, %v2722
    %v2739 = vsel %vm2707, %v2691, %v2723
    %v2740 = vadd.f32 %v2724, 1.0
    %v2741 = vadd.f32 %v2725, 1.0
    %v2742 = vadd.f32 %v2726, 1.0
    %v2743 = vadd.f32 %v2727, 1.0
    %v2744 = vadd.f32 %v2728, 1.0
    %v2745 = vadd.f32 %v2729, 1.0
    %v2746 = vadd.f32 %v2730, 1.0
    %v2747 = vadd.f32 %v2731, 1.0
    %v2748 = vadd.f32 %v2732, 1.0
    %v2749 = vadd.f32 %v2733, 1.0
    %v2750 = vadd.f32 %v2734, 1.0
    %v2751 = vadd.f32 %v2735, 1.0
    %v2752 = vadd.f32 %v2736, 1.0
    %v2753 = vadd.f32 %v2737, 1.0
    %v2754 = vadd.f32 %v2738, 1.0
    %v2755 = vadd.f32 %v2739, 1.0
    %v2756 = vmul.f32 %v2340, %v2740
    %v2757 = vmul.f32 %v2341, %v2741
    %v2758 = vmul.f32 %v2342, %v2742
    %v2759 = vmul.f32 %v2343, %v2743
    %v2760 = vmul.f32 %v2344, %v2744
    %v2761 = vmul.f32 %v2345, %v2745
    %v2762 = vmul.f32 %v2346, %v2746
    %v2763 = vmul.f32 %v2347, %v2747
    %v2764 = vmul.f32 %v2348, %v2748
    %v2765 = vmul.f32 %v2349, %v2749
    %v2766 = vmul.f32 %v2350, %v2750
    %v2767 = vmul.f32 %v2351, %v2751
    %v2768 = vmul.f32 %v2352, %v2752
    %v2769 = vmul.f32 %v2353, %v2753
    %v2770 = vmul.f32 %v2354, %v2754
    %v2771 = vmul.f32 %v2355, %v2755
    %v2772 = vpack.c.bf16 %v2764, %v2756
    %v2773 = vpack.c.bf16 %v2765, %v2757
    %v2774 = vpack.c.bf16 %v2766, %v2758
    %v2775 = vpack.c.bf16 %v2767, %v2759
    %v2776 = vpack.c.bf16 %v2768, %v2760
    %v2777 = vpack.c.bf16 %v2769, %v2761
    %v2778 = vpack.c.bf16 %v2770, %v2762
    %v2779 = vpack.c.bf16 %v2771, %v2763
    %v2788 = vunpack.c.l.b16 %v2772
    %v2789 = vunpack.c.l.b16 %v2773
    %v2790 = vunpack.c.l.b16 %v2774
    %v2791 = vunpack.c.l.b16 %v2775
    %v2792 = vunpack.c.l.b16 %v2776
    %v2793 = vunpack.c.l.b16 %v2777
    %v2794 = vunpack.c.l.b16 %v2778
    %v2795 = vunpack.c.l.b16 %v2779
    %v2796 = vunpack.c.h.b16 %v2772
    %v2797 = vunpack.c.h.b16 %v2773
    %v2798 = vunpack.c.h.b16 %v2774
    %v2799 = vunpack.c.h.b16 %v2775
    %v2800 = vunpack.c.h.b16 %v2776
    %v2801 = vunpack.c.h.b16 %v2777
    %v2802 = vunpack.c.h.b16 %v2778
    %v2803 = vunpack.c.h.b16 %v2779
    %v2804 = vpack.c.b16 %v2789, %v2788
    %v2805 = vpack.c.b16 %v2791, %v2790
    %v2806 = vpack.c.b16 %v2793, %v2792
    %v2807 = vpack.c.b16 %v2795, %v2794
    %v2808 = vpack.c.b16 %v2797, %v2796
    %v2809 = vpack.c.b16 %v2799, %v2798
    %v2810 = vpack.c.b16 %v2801, %v2800
    %v2811 = vpack.c.b16 %v2803, %v2802
    %2820 = vst [vmem:[#allocation2] sm:$0xff] %v2804
    %2821 = vst [vmem:[#allocation2 + $0x8] sm:$0xff] %v2805
    %2822 = vst [vmem:[#allocation2 + $0x10] sm:$0xff] %v2806
    %2823 = vst [vmem:[#allocation2 + $0x18] sm:$0xff] %v2807
    %2824 = vst [vmem:[#allocation2 + $0x20] sm:$0xff] %v2808
    %2825 = vst [vmem:[#allocation2 + $0x28] sm:$0xff] %v2809
    %2826 = vst [vmem:[#allocation2 + $0x30] sm:$0xff] %v2810
    %2827 = vst [vmem:[#allocation2 + $0x38] sm:$0xff] %v2811
  $region33: #{image_decoder_forward.1} parent=0 // pred_fallthru
    _
  %v2828 = vld [vmem:[#allocation2] sm:$0xff]
  %v2829 = vld [vmem:[#allocation2 + $0x8] sm:$0xff]
  %v2830 = vld [vmem:[#allocation2 + $0x10] sm:$0xff]
  %v2831 = vld [vmem:[#allocation2 + $0x18] sm:$0xff]
  %v2832 = vld [vmem:[#allocation2 + $0x20] sm:$0xff]
  %v2833 = vld [vmem:[#allocation2 + $0x28] sm:$0xff]
  %v2834 = vld [vmem:[#allocation2 + $0x30] sm:$0xff]
  %v2835 = vld [vmem:[#allocation2 + $0x38] sm:$0xff]
  %v2836 = vld [vmem:[%s5] sm:$0xff]
  %v2837 = vld [vmem:[%s5 + $0x8] sm:$0xff]
  %v2838 = vld [vmem:[%s5 + $0x10] sm:$0xff]
  %v2839 = vld [vmem:[%s5 + $0x18] sm:$0xff]
  %v2840 = vld [vmem:[%s5 + $0x20] sm:$0xff]
  %v2841 = vld [vmem:[%s5 + $0x28] sm:$0xff]
  %v2842 = vld [vmem:[%s5 + $0x30] sm:$0xff]
  %v2843 = vld [vmem:[%s5 + $0x38] sm:$0xff]
  %v2844 = vld [vmem:[%s5 + $0x40] sm:$0xff]
  %v2845 = vld [vmem:[%s5 + $0x48] sm:$0xff]
  %v2846 = vld [vmem:[%s5 + $0x50] sm:$0xff]
  %v2847 = vld [vmem:[%s5 + $0x58] sm:$0xff]
  %v2848 = vld [vmem:[%s5 + $0x60] sm:$0xff]
  %v2849 = vld [vmem:[%s5 + $0x68] sm:$0xff]
  %v2850 = vld [vmem:[%s5 + $0x70] sm:$0xff]
  %v2851 = vld [vmem:[%s5 + $0x78] sm:$0xff]
  %v2852 = vld [vmem:[%s5 + $0x80] sm:$0xff]
  %v2853 = vld [vmem:[%s5 + $0x88] sm:$0xff]
  %v2854 = vld [vmem:[%s5 + $0x90] sm:$0xff]
  %v2855 = vld [vmem:[%s5 + $0x98] sm:$0xff]
  %v2856 = vld [vmem:[%s5 + $0xa0] sm:$0xff]
  %v2857 = vld [vmem:[%s5 + $0xa8] sm:$0xff]
  %v2858 = vld [vmem:[%s5 + $0xb0] sm:$0xff]
  %v2859 = vld [vmem:[%s5 + $0xb8] sm:$0xff]
  %v2860 = vld [vmem:[%s5 + $0xc0] sm:$0xff]
  %v2861 = vld [vmem:[%s5 + $0xc8] sm:$0xff]
  %v2862 = vld [vmem:[%s5 + $0xd0] sm:$0xff]
  %v2863 = vld [vmem:[%s5 + $0xd8] sm:$0xff]
  %v2864 = vld [vmem:[%s5 + $0xe0] sm:$0xff]
  %v2865 = vld [vmem:[%s5 + $0xe8] sm:$0xff]
  %v2866 = vld [vmem:[%s5 + $0xf0] sm:$0xff]
  %v2867 = vld [vmem:[%s5 + $0xf8] sm:$0xff]
  %v2868 = vld [vmem:[%s5 + $0x100] sm:$0xff]
  %v2869 = vld [vmem:[%s5 + $0x108] sm:$0xff]
  %v2870 = vld [vmem:[%s5 + $0x110] sm:$0xff]
  %v2871 = vld [vmem:[%s5 + $0x118] sm:$0xff]
  %v2872 = vld [vmem:[%s5 + $0x120] sm:$0xff]
  %v2873 = vld [vmem:[%s5 + $0x128] sm:$0xff]
  %v2874 = vld [vmem:[%s5 + $0x130] sm:$0xff]
  %v2875 = vld [vmem:[%s5 + $0x138] sm:$0xff]
  %v2876 = vld [vmem:[%s5 + $0x140] sm:$0xff]
  %v2877 = vld [vmem:[%s5 + $0x148] sm:$0xff]
  %v2878 = vld [vmem:[%s5 + $0x150] sm:$0xff]
  %v2879 = vld [vmem:[%s5 + $0x158] sm:$0xff]
  %v2880 = vld [vmem:[%s5 + $0x160] sm:$0xff]
  %v2881 = vld [vmem:[%s5 + $0x168] sm:$0xff]
  %v2882 = vld [vmem:[%s5 + $0x170] sm:$0xff]
  %v2883 = vld [vmem:[%s5 + $0x178] sm:$0xff]
  %v2884 = vld [vmem:[%s5 + $0x180] sm:$0xff]
  %v2885 = vld [vmem:[%s5 + $0x188] sm:$0xff]
  %v2886 = vld [vmem:[%s5 + $0x190] sm:$0xff]
  %v2887 = vld [vmem:[%s5 + $0x198] sm:$0xff]
  %v2888 = vld [vmem:[%s5 + $0x1a0] sm:$0xff]
  %v2889 = vld [vmem:[%s5 + $0x1a8] sm:$0xff]
  %v2890 = vld [vmem:[%s5 + $0x1b0] sm:$0xff]
  %v2891 = vld [vmem:[%s5 + $0x1b8] sm:$0xff]
  %v2892 = vld [vmem:[%s5 + $0x1c0] sm:$0xff]
  %v2893 = vld [vmem:[%s5 + $0x1c8] sm:$0xff]
  %v2894 = vld [vmem:[%s5 + $0x1d0] sm:$0xff]
  %v2895 = vld [vmem:[%s5 + $0x1d8] sm:$0xff]
  %v2896 = vld [vmem:[%s5 + $0x1e0] sm:$0xff]
  %v2897 = vld [vmem:[%s5 + $0x1e8] sm:$0xff]
  %v2898 = vld [vmem:[%s5 + $0x1f0] sm:$0xff]
  %v2899 = vld [vmem:[%s5 + $0x1f8] sm:$0xff]
  %v2900 = vld [vmem:[%s5 + $0x200] sm:$0xff]
  %v2901 = vld [vmem:[%s5 + $0x208] sm:$0xff]
  %v2902 = vld [vmem:[%s5 + $0x210] sm:$0xff]
  %v2903 = vld [vmem:[%s5 + $0x218] sm:$0xff]
  %v2904 = vld [vmem:[%s5 + $0x220] sm:$0xff]
  %v2905 = vld [vmem:[%s5 + $0x228] sm:$0xff]
  %v2906 = vld [vmem:[%s5 + $0x230] sm:$0xff]
  %v2907 = vld [vmem:[%s5 + $0x238] sm:$0xff]
  %v2908 = vld [vmem:[%s5 + $0x240] sm:$0xff]
  %v2909 = vld [vmem:[%s5 + $0x248] sm:$0xff]
  %v2910 = vld [vmem:[%s5 + $0x250] sm:$0xff]
  %v2911 = vld [vmem:[%s5 + $0x258] sm:$0xff]
  %v2912 = vld [vmem:[%s5 + $0x260] sm:$0xff]
  %v2913 = vld [vmem:[%s5 + $0x268] sm:$0xff]
  %v2914 = vld [vmem:[%s5 + $0x270] sm:$0xff]
  %v2915 = vld [vmem:[%s5 + $0x278] sm:$0xff]
  %v2916 = vld [vmem:[%s5 + $0x280] sm:$0xff]
  %v2917 = vld [vmem:[%s5 + $0x288] sm:$0xff]
  %v2918 = vld [vmem:[%s5 + $0x290] sm:$0xff]
  %v2919 = vld [vmem:[%s5 + $0x298] sm:$0xff]
  %v2920 = vld [vmem:[%s5 + $0x2a0] sm:$0xff]
  %v2921 = vld [vmem:[%s5 + $0x2a8] sm:$0xff]
  %v2922 = vld [vmem:[%s5 + $0x2b0] sm:$0xff]
  %v2923 = vld [vmem:[%s5 + $0x2b8] sm:$0xff]
  %v2924 = vld [vmem:[%s5 + $0x2c0] sm:$0xff]
  %v2925 = vld [vmem:[%s5 + $0x2c8] sm:$0xff]
  %v2926 = vld [vmem:[%s5 + $0x2d0] sm:$0xff]
  %v2927 = vld [vmem:[%s5 + $0x2d8] sm:$0xff]
  %v2928 = vld [vmem:[%s5 + $0x2e0] sm:$0xff]
  %v2929 = vld [vmem:[%s5 + $0x2e8] sm:$0xff]
  %v2930 = vld [vmem:[%s5 + $0x2f0] sm:$0xff]
  %v2931 = vld [vmem:[%s5 + $0x2f8] sm:$0xff]
  %v2932 = vld [vmem:[%s5 + $0x300] sm:$0xff]
  %v2933 = vld [vmem:[%s5 + $0x308] sm:$0xff]
  %v2934 = vld [vmem:[%s5 + $0x310] sm:$0xff]
  %v2935 = vld [vmem:[%s5 + $0x318] sm:$0xff]
  %v2936 = vld [vmem:[%s5 + $0x320] sm:$0xff]
  %v2937 = vld [vmem:[%s5 + $0x328] sm:$0xff]
  %v2938 = vld [vmem:[%s5 + $0x330] sm:$0xff]
  %v2939 = vld [vmem:[%s5 + $0x338] sm:$0xff]
  %v2940 = vld [vmem:[%s5 + $0x340] sm:$0xff]
  %v2941 = vld [vmem:[%s5 + $0x348] sm:$0xff]
  %v2942 = vld [vmem:[%s5 + $0x350] sm:$0xff]
  %v2943 = vld [vmem:[%s5 + $0x358] sm:$0xff]
  %v2944 = vld [vmem:[%s5 + $0x360] sm:$0xff]
  %v2945 = vld [vmem:[%s5 + $0x368] sm:$0xff]
  %v2946 = vld [vmem:[%s5 + $0x370] sm:$0xff]
  %v2947 = vld [vmem:[%s5 + $0x378] sm:$0xff]
  %v2948 = vld [vmem:[%s5 + $0x380] sm:$0xff]
  %v2949 = vld [vmem:[%s5 + $0x388] sm:$0xff]
  %v2950 = vld [vmem:[%s5 + $0x390] sm:$0xff]
  %v2951 = vld [vmem:[%s5 + $0x398] sm:$0xff]
  %v2952 = vld [vmem:[%s5 + $0x3a0] sm:$0xff]
  %v2953 = vld [vmem:[%s5 + $0x3a8] sm:$0xff]
  %v2954 = vld [vmem:[%s5 + $0x3b0] sm:$0xff]
  %v2955 = vld [vmem:[%s5 + $0x3b8] sm:$0xff]
  %v2956 = vld [vmem:[%s5 + $0x3c0] sm:$0xff]
  %v2957 = vld [vmem:[%s5 + $0x3c8] sm:$0xff]
  %v2958 = vld [vmem:[%s5 + $0x3d0] sm:$0xff]
  %v2959 = vld [vmem:[%s5 + $0x3d8] sm:$0xff]
  %v2960 = vld [vmem:[%s5 + $0x3e0] sm:$0xff]
  %v2961 = vld [vmem:[%s5 + $0x3e8] sm:$0xff]
  %v2962 = vld [vmem:[%s5 + $0x3f0] sm:$0xff]
  %v2963 = vld [vmem:[%s5 + $0x3f8] sm:$0xff]
  %v2964 = vld [vmem:[%s5 + $0x400] sm:$0xff]
  %v2965 = vld [vmem:[%s5 + $0x408] sm:$0xff]
  %v2966 = vld [vmem:[%s5 + $0x410] sm:$0xff]
  %v2967 = vld [vmem:[%s5 + $0x418] sm:$0xff]
  %v2968 = vld [vmem:[%s5 + $0x420] sm:$0xff]
  %v2969 = vld [vmem:[%s5 + $0x428] sm:$0xff]
  %v2970 = vld [vmem:[%s5 + $0x430] sm:$0xff]
  %v2971 = vld [vmem:[%s5 + $0x438] sm:$0xff]
  %v2972 = vld [vmem:[%s5 + $0x440] sm:$0xff]
  %v2973 = vld [vmem:[%s5 + $0x448] sm:$0xff]
  %v2974 = vld [vmem:[%s5 + $0x450] sm:$0xff]
  %v2975 = vld [vmem:[%s5 + $0x458] sm:$0xff]
  %v2976 = vld [vmem:[%s5 + $0x460] sm:$0xff]
  %v2977 = vld [vmem:[%s5 + $0x468] sm:$0xff]
  %v2978 = vld [vmem:[%s5 + $0x470] sm:$0xff]
  %v2979 = vld [vmem:[%s5 + $0x478] sm:$0xff]
  %v2980 = vld [vmem:[%s5 + $0x480] sm:$0xff]
  %v2981 = vld [vmem:[%s5 + $0x488] sm:$0xff]
  %v2982 = vld [vmem:[%s5 + $0x490] sm:$0xff]
  %v2983 = vld [vmem:[%s5 + $0x498] sm:$0xff]
  %v2984 = vld [vmem:[%s5 + $0x4a0] sm:$0xff]
  %v2985 = vld [vmem:[%s5 + $0x4a8] sm:$0xff]
  %v2986 = vld [vmem:[%s5 + $0x4b0] sm:$0xff]
  %v2987 = vld [vmem:[%s5 + $0x4b8] sm:$0xff]
  %v2988 = vld [vmem:[%s5 + $0x4c0] sm:$0xff]
  %v2989 = vld [vmem:[%s5 + $0x4c8] sm:$0xff]
  %v2990 = vld [vmem:[%s5 + $0x4d0] sm:$0xff]
  %v2991 = vld [vmem:[%s5 + $0x4d8] sm:$0xff]
  %v2992 = vld [vmem:[%s5 + $0x4e0] sm:$0xff]
  %v2993 = vld [vmem:[%s5 + $0x4e8] sm:$0xff]
  %v2994 = vld [vmem:[%s5 + $0x4f0] sm:$0xff]
  %v2995 = vld [vmem:[%s5 + $0x4f8] sm:$0xff]
  %v2996 = vld [vmem:[%s5 + $0x500] sm:$0xff]
  %v2997 = vld [vmem:[%s5 + $0x508] sm:$0xff]
  %v2998 = vld [vmem:[%s5 + $0x510] sm:$0xff]
  %v2999 = vld [vmem:[%s5 + $0x518] sm:$0xff]
  %v3000 = vld [vmem:[%s5 + $0x520] sm:$0xff]
  %v3001 = vld [vmem:[%s5 + $0x528] sm:$0xff]
  %v3002 = vld [vmem:[%s5 + $0x530] sm:$0xff]
  %v3003 = vld [vmem:[%s5 + $0x538] sm:$0xff]
  %v3004 = vld [vmem:[%s5 + $0x540] sm:$0xff]
  %v3005 = vld [vmem:[%s5 + $0x548] sm:$0xff]
  %v3006 = vld [vmem:[%s5 + $0x550] sm:$0xff]
  %v3007 = vld [vmem:[%s5 + $0x558] sm:$0xff]
  %v3008 = vld [vmem:[%s5 + $0x560] sm:$0xff]
  %v3009 = vld [vmem:[%s5 + $0x568] sm:$0xff]
  %v3010 = vld [vmem:[%s5 + $0x570] sm:$0xff]
  %v3011 = vld [vmem:[%s5 + $0x578] sm:$0xff]
  %v3012 = vld [vmem:[%s5 + $0x580] sm:$0xff]
  %v3013 = vld [vmem:[%s5 + $0x588] sm:$0xff]
  %v3014 = vld [vmem:[%s5 + $0x590] sm:$0xff]
  %v3015 = vld [vmem:[%s5 + $0x598] sm:$0xff]
  %v3016 = vld [vmem:[%s5 + $0x5a0] sm:$0xff]
  %v3017 = vld [vmem:[%s5 + $0x5a8] sm:$0xff]
  %v3018 = vld [vmem:[%s5 + $0x5b0] sm:$0xff]
  %v3019 = vld [vmem:[%s5 + $0x5b8] sm:$0xff]
  %v3020 = vld [vmem:[%s5 + $0x5c0] sm:$0xff]
  %v3021 = vld [vmem:[%s5 + $0x5c8] sm:$0xff]
  %v3022 = vld [vmem:[%s5 + $0x5d0] sm:$0xff]
  %v3023 = vld [vmem:[%s5 + $0x5d8] sm:$0xff]
  %v3024 = vld [vmem:[%s5 + $0x5e0] sm:$0xff]
  %v3025 = vld [vmem:[%s5 + $0x5e8] sm:$0xff]
  %v3026 = vld [vmem:[%s5 + $0x5f0] sm:$0xff]
  %v3027 = vld [vmem:[%s5 + $0x5f8] sm:$0xff]
  %v3028 = vld [vmem:[%s5 + $0x600] sm:$0xff]
  %v3029 = vld [vmem:[%s5 + $0x608] sm:$0xff]
  %v3030 = vld [vmem:[%s5 + $0x610] sm:$0xff]
  %v3031 = vld [vmem:[%s5 + $0x618] sm:$0xff]
  %v3032 = vld [vmem:[%s5 + $0x620] sm:$0xff]
  %v3033 = vld [vmem:[%s5 + $0x628] sm:$0xff]
  %v3034 = vld [vmem:[%s5 + $0x630] sm:$0xff]
  %v3035 = vld [vmem:[%s5 + $0x638] sm:$0xff]
  %v3036 = vld [vmem:[%s5 + $0x640] sm:$0xff]
  %v3037 = vld [vmem:[%s5 + $0x648] sm:$0xff]
  %v3038 = vld [vmem:[%s5 + $0x650] sm:$0xff]
  %v3039 = vld [vmem:[%s5 + $0x658] sm:$0xff]
  %v3040 = vld [vmem:[%s5 + $0x660] sm:$0xff]
  %v3041 = vld [vmem:[%s5 + $0x668] sm:$0xff]
  %v3042 = vld [vmem:[%s5 + $0x670] sm:$0xff]
  %v3043 = vld [vmem:[%s5 + $0x678] sm:$0xff]
  %v3044 = vld [vmem:[%s5 + $0x680] sm:$0xff]
  %v3045 = vld [vmem:[%s5 + $0x688] sm:$0xff]
  %v3046 = vld [vmem:[%s5 + $0x690] sm:$0xff]
  %v3047 = vld [vmem:[%s5 + $0x698] sm:$0xff]
  %v3048 = vld [vmem:[%s5 + $0x6a0] sm:$0xff]
  %v3049 = vld [vmem:[%s5 + $0x6a8] sm:$0xff]
  %v3050 = vld [vmem:[%s5 + $0x6b0] sm:$0xff]
  %v3051 = vld [vmem:[%s5 + $0x6b8] sm:$0xff]
  %v3052 = vld [vmem:[%s5 + $0x6c0] sm:$0xff]
  %v3053 = vld [vmem:[%s5 + $0x6c8] sm:$0xff]
  %v3054 = vld [vmem:[%s5 + $0x6d0] sm:$0xff]
  %v3055 = vld [vmem:[%s5 + $0x6d8] sm:$0xff]
  %v3056 = vld [vmem:[%s5 + $0x6e0] sm:$0xff]
  %v3057 = vld [vmem:[%s5 + $0x6e8] sm:$0xff]
  %v3058 = vld [vmem:[%s5 + $0x6f0] sm:$0xff]
  %v3059 = vld [vmem:[%s5 + $0x6f8] sm:$0xff]
  %v3060 = vld [vmem:[%s5 + $0x700] sm:$0xff]
  %v3061 = vld [vmem:[%s5 + $0x708] sm:$0xff]
  %v3062 = vld [vmem:[%s5 + $0x710] sm:$0xff]
  %v3063 = vld [vmem:[%s5 + $0x718] sm:$0xff]
  %v3064 = vld [vmem:[%s5 + $0x720] sm:$0xff]
  %v3065 = vld [vmem:[%s5 + $0x728] sm:$0xff]
  %v3066 = vld [vmem:[%s5 + $0x730] sm:$0xff]
  %v3067 = vld [vmem:[%s5 + $0x738] sm:$0xff]
  %v3068 = vld [vmem:[%s5 + $0x740] sm:$0xff]
  %v3069 = vld [vmem:[%s5 + $0x748] sm:$0xff]
  %v3070 = vld [vmem:[%s5 + $0x750] sm:$0xff]
  %v3071 = vld [vmem:[%s5 + $0x758] sm:$0xff]
  %v3072 = vld [vmem:[%s5 + $0x760] sm:$0xff]
  %v3073 = vld [vmem:[%s5 + $0x768] sm:$0xff]
  %v3074 = vld [vmem:[%s5 + $0x770] sm:$0xff]
  %v3075 = vld [vmem:[%s5 + $0x778] sm:$0xff]
  %v3076 = vld [vmem:[%s5 + $0x780] sm:$0xff]
  %v3077 = vld [vmem:[%s5 + $0x788] sm:$0xff]
  %v3078 = vld [vmem:[%s5 + $0x790] sm:$0xff]
  %v3079 = vld [vmem:[%s5 + $0x798] sm:$0xff]
  %v3080 = vld [vmem:[%s5 + $0x7a0] sm:$0xff]
  %v3081 = vld [vmem:[%s5 + $0x7a8] sm:$0xff]
  %v3082 = vld [vmem:[%s5 + $0x7b0] sm:$0xff]
  %v3083 = vld [vmem:[%s5 + $0x7b8] sm:$0xff]
  %v3084 = vld [vmem:[%s5 + $0x7c0] sm:$0xff]
  %v3085 = vld [vmem:[%s5 + $0x7c8] sm:$0xff]
  %v3086 = vld [vmem:[%s5 + $0x7d0] sm:$0xff]
  %v3087 = vld [vmem:[%s5 + $0x7d8] sm:$0xff]
  %v3088 = vld [vmem:[%s5 + $0x7e0] sm:$0xff]
  %v3089 = vld [vmem:[%s5 + $0x7e8] sm:$0xff]
  %v3090 = vld [vmem:[%s5 + $0x7f0] sm:$0xff]
  %v3091 = vld [vmem:[%s5 + $0x7f8] sm:$0xff]
  %v3092 = vld [vmem:[%s5 + $0x800] sm:$0xff]
  %v3093 = vld [vmem:[%s5 + $0x808] sm:$0xff]
  %v3094 = vld [vmem:[%s5 + $0x810] sm:$0xff]
  %v3095 = vld [vmem:[%s5 + $0x818] sm:$0xff]
  %v3096 = vld [vmem:[%s5 + $0x820] sm:$0xff]
  %v3097 = vld [vmem:[%s5 + $0x828] sm:$0xff]
  %v3098 = vld [vmem:[%s5 + $0x830] sm:$0xff]
  %v3099 = vld [vmem:[%s5 + $0x838] sm:$0xff]
  %v3100 = vld [vmem:[%s5 + $0x840] sm:$0xff]
  %v3101 = vld [vmem:[%s5 + $0x848] sm:$0xff]
  %v3102 = vld [vmem:[%s5 + $0x850] sm:$0xff]
  %v3103 = vld [vmem:[%s5 + $0x858] sm:$0xff]
  %v3104 = vld [vmem:[%s5 + $0x860] sm:$0xff]
  %v3105 = vld [vmem:[%s5 + $0x868] sm:$0xff]
  %v3106 = vld [vmem:[%s5 + $0x870] sm:$0xff]
  %v3107 = vld [vmem:[%s5 + $0x878] sm:$0xff]
  %v3108 = vld [vmem:[%s5 + $0x880] sm:$0xff]
  %v3109 = vld [vmem:[%s5 + $0x888] sm:$0xff]
  %v3110 = vld [vmem:[%s5 + $0x890] sm:$0xff]
  %v3111 = vld [vmem:[%s5 + $0x898] sm:$0xff]
  %v3112 = vld [vmem:[%s5 + $0x8a0] sm:$0xff]
  %v3113 = vld [vmem:[%s5 + $0x8a8] sm:$0xff]
  %v3114 = vld [vmem:[%s5 + $0x8b0] sm:$0xff]
  %v3115 = vld [vmem:[%s5 + $0x8b8] sm:$0xff]
  %v3116 = vld [vmem:[%s5 + $0x8c0] sm:$0xff]
  %v3117 = vld [vmem:[%s5 + $0x8c8] sm:$0xff]
  %v3118 = vld [vmem:[%s5 + $0x8d0] sm:$0xff]
  %v3119 = vld [vmem:[%s5 + $0x8d8] sm:$0xff]
  %v3120 = vld [vmem:[%s5 + $0x8e0] sm:$0xff]
  %v3121 = vld [vmem:[%s5 + $0x8e8] sm:$0xff]
  %v3122 = vld [vmem:[%s5 + $0x8f0] sm:$0xff]
  %v3123 = vld [vmem:[%s5 + $0x8f8] sm:$0xff]
  %v3124 = vld [vmem:[%s5 + $0x900] sm:$0xff]
  %v3125 = vld [vmem:[%s5 + $0x908] sm:$0xff]
  %v3126 = vld [vmem:[%s5 + $0x910] sm:$0xff]
  %v3127 = vld [vmem:[%s5 + $0x918] sm:$0xff]
  %v3128 = vld [vmem:[%s5 + $0x920] sm:$0xff]
  %v3129 = vld [vmem:[%s5 + $0x928] sm:$0xff]
  %v3130 = vld [vmem:[%s5 + $0x930] sm:$0xff]
  %v3131 = vld [vmem:[%s5 + $0x938] sm:$0xff]
  %v3132 = vld [vmem:[%s5 + $0x940] sm:$0xff]
  %v3133 = vld [vmem:[%s5 + $0x948] sm:$0xff]
  %v3134 = vld [vmem:[%s5 + $0x950] sm:$0xff]
  %v3135 = vld [vmem:[%s5 + $0x958] sm:$0xff]
  %v3136 = vld [vmem:[%s5 + $0x960] sm:$0xff]
  %v3137 = vld [vmem:[%s5 + $0x968] sm:$0xff]
  %v3138 = vld [vmem:[%s5 + $0x970] sm:$0xff]
  %v3139 = vld [vmem:[%s5 + $0x978] sm:$0xff]
  %v3140 = vld [vmem:[%s5 + $0x980] sm:$0xff]
  %v3141 = vld [vmem:[%s5 + $0x988] sm:$0xff]
  %v3142 = vld [vmem:[%s5 + $0x990] sm:$0xff]
  %v3143 = vld [vmem:[%s5 + $0x998] sm:$0xff]
  %v3144 = vld [vmem:[%s5 + $0x9a0] sm:$0xff]
  %v3145 = vld [vmem:[%s5 + $0x9a8] sm:$0xff]
  %v3146 = vld [vmem:[%s5 + $0x9b0] sm:$0xff]
  %v3147 = vld [vmem:[%s5 + $0x9b8] sm:$0xff]
  %v3148 = vld [vmem:[%s5 + $0x9c0] sm:$0xff]
  %v3149 = vld [vmem:[%s5 + $0x9c8] sm:$0xff]
  %v3150 = vld [vmem:[%s5 + $0x9d0] sm:$0xff]
  %v3151 = vld [vmem:[%s5 + $0x9d8] sm:$0xff]
  %v3152 = vld [vmem:[%s5 + $0x9e0] sm:$0xff]
  %v3153 = vld [vmem:[%s5 + $0x9e8] sm:$0xff]
  %v3154 = vld [vmem:[%s5 + $0x9f0] sm:$0xff]
  %v3155 = vld [vmem:[%s5 + $0x9f8] sm:$0xff]
  %v3156 = vld [vmem:[%s5 + $0xa00] sm:$0xff]
  %v3157 = vld [vmem:[%s5 + $0xa08] sm:$0xff]
  %v3158 = vld [vmem:[%s5 + $0xa10] sm:$0xff]
  %v3159 = vld [vmem:[%s5 + $0xa18] sm:$0xff]
  %v3160 = vld [vmem:[%s5 + $0xa20] sm:$0xff]
  %v3161 = vld [vmem:[%s5 + $0xa28] sm:$0xff]
  %v3162 = vld [vmem:[%s5 + $0xa30] sm:$0xff]
  %v3163 = vld [vmem:[%s5 + $0xa38] sm:$0xff]
  %v3164 = vld [vmem:[%s5 + $0xa40] sm:$0xff]
  %v3165 = vld [vmem:[%s5 + $0xa48] sm:$0xff]
  %v3166 = vld [vmem:[%s5 + $0xa50] sm:$0xff]
  %v3167 = vld [vmem:[%s5 + $0xa58] sm:$0xff]
  %v3168 = vld [vmem:[%s5 + $0xa60] sm:$0xff]
  %v3169 = vld [vmem:[%s5 + $0xa68] sm:$0xff]
  %v3170 = vld [vmem:[%s5 + $0xa70] sm:$0xff]
  %v3171 = vld [vmem:[%s5 + $0xa78] sm:$0xff]
  %v3172 = vld [vmem:[%s5 + $0xa80] sm:$0xff]
  %v3173 = vld [vmem:[%s5 + $0xa88] sm:$0xff]
  %v3174 = vld [vmem:[%s5 + $0xa90] sm:$0xff]
  %v3175 = vld [vmem:[%s5 + $0xa98] sm:$0xff]
  %v3176 = vld [vmem:[%s5 + $0xaa0] sm:$0xff]
  %v3177 = vld [vmem:[%s5 + $0xaa8] sm:$0xff]
  %v3178 = vld [vmem:[%s5 + $0xab0] sm:$0xff]
  %v3179 = vld [vmem:[%s5 + $0xab8] sm:$0xff]
  %v3180 = vld [vmem:[%s5 + $0xac0] sm:$0xff]
  %v3181 = vld [vmem:[%s5 + $0xac8] sm:$0xff]
  %v3182 = vld [vmem:[%s5 + $0xad0] sm:$0xff]
  %v3183 = vld [vmem:[%s5 + $0xad8] sm:$0xff]
  %v3184 = vld [vmem:[%s5 + $0xae0] sm:$0xff]
  %v3185 = vld [vmem:[%s5 + $0xae8] sm:$0xff]
  %v3186 = vld [vmem:[%s5 + $0xaf0] sm:$0xff]
  %v3187 = vld [vmem:[%s5 + $0xaf8] sm:$0xff]
  %v3188 = vld [vmem:[%s5 + $0xb00] sm:$0xff]
  %v3189 = vld [vmem:[%s5 + $0xb08] sm:$0xff]
  %v3190 = vld [vmem:[%s5 + $0xb10] sm:$0xff]
  %v3191 = vld [vmem:[%s5 + $0xb18] sm:$0xff]
  %v3192 = vld [vmem:[%s5 + $0xb20] sm:$0xff]
  %v3193 = vld [vmem:[%s5 + $0xb28] sm:$0xff]
  %v3194 = vld [vmem:[%s5 + $0xb30] sm:$0xff]
  %v3195 = vld [vmem:[%s5 + $0xb38] sm:$0xff]
  %v3196 = vld [vmem:[%s5 + $0xb40] sm:$0xff]
  %v3197 = vld [vmem:[%s5 + $0xb48] sm:$0xff]
  %v3198 = vld [vmem:[%s5 + $0xb50] sm:$0xff]
  %v3199 = vld [vmem:[%s5 + $0xb58] sm:$0xff]
  %v3200 = vld [vmem:[%s5 + $0xb60] sm:$0xff]
  %v3201 = vld [vmem:[%s5 + $0xb68] sm:$0xff]
  %v3202 = vld [vmem:[%s5 + $0xb70] sm:$0xff]
  %v3203 = vld [vmem:[%s5 + $0xb78] sm:$0xff]
  %v3204 = vld [vmem:[%s5 + $0xb80] sm:$0xff]
  %v3205 = vld [vmem:[%s5 + $0xb88] sm:$0xff]
  %v3206 = vld [vmem:[%s5 + $0xb90] sm:$0xff]
  %v3207 = vld [vmem:[%s5 + $0xb98] sm:$0xff]
  %v3208 = vld [vmem:[%s5 + $0xba0] sm:$0xff]
  %v3209 = vld [vmem:[%s5 + $0xba8] sm:$0xff]
  %v3210 = vld [vmem:[%s5 + $0xbb0] sm:$0xff]
  %v3211 = vld [vmem:[%s5 + $0xbb8] sm:$0xff]
  %v3212 = vld [vmem:[%s5 + $0xbc0] sm:$0xff]
  %v3213 = vld [vmem:[%s5 + $0xbc8] sm:$0xff]
  %v3214 = vld [vmem:[%s5 + $0xbd0] sm:$0xff]
  %v3215 = vld [vmem:[%s5 + $0xbd8] sm:$0xff]
  %v3216 = vld [vmem:[%s5 + $0xbe0] sm:$0xff]
  %v3217 = vld [vmem:[%s5 + $0xbe8] sm:$0xff]
  %v3218 = vld [vmem:[%s5 + $0xbf0] sm:$0xff]
  %v3219 = vld [vmem:[%s5 + $0xbf8] sm:$0xff]
  %v3220 = vld [vmem:[%s6] sm:$0x3f]
  %v3222 = vlaneseq
  %v3223 = vshrl.u32 %v3222, 7
  %v3224 = vsub.s32 0, %v3223
  %v3225 = vrot.slane %v3220, %v3224
  %v3226 = vlaneseq
  %v3227 = vshrl.u32 %v3226, 7
  %v3228 = vsub.s32 1, %v3227
  %v3229 = vrot.slane %v3220, %v3228
  %v3230 = vlaneseq
  %v3231 = vshrl.u32 %v3230, 7
  %v3232 = vsub.s32 2, %v3231
  %v3233 = vrot.slane %v3220, %v3232
  %v3234 = vlaneseq
  %v3235 = vshrl.u32 %v3234, 7
  %v3236 = vsub.s32 3, %v3235
  %v3237 = vrot.slane %v3220, %v3236
  %v3238 = vlaneseq
  %v3239 = vshrl.u32 %v3238, 7
  %v3240 = vsub.s32 4, %v3239
  %v3241 = vrot.slane %v3220, %v3240
  %v3242 = vlaneseq
  %v3243 = vshrl.u32 %v3242, 7
  %v3244 = vsub.s32 5, %v3243
  %v3245 = vrot.slane %v3220, %v3244
  %v3260 = vunpack.c.l.b16 %v2828
  %v3261 = vunpack.c.h.b16 %v2828
  %v3262 = vunpack.c.l.b16 %v2829
  %v3263 = vunpack.c.h.b16 %v2829
  %v3264 = vunpack.c.l.b16 %v2830
  %v3265 = vunpack.c.h.b16 %v2830
  %v3266 = vunpack.c.l.b16 %v2831
  %v3267 = vunpack.c.h.b16 %v2831
  %v3268 = vunpack.c.l.b16 %v2832
  %v3269 = vunpack.c.h.b16 %v2832
  %v3270 = vunpack.c.l.b16 %v2833
  %v3271 = vunpack.c.h.b16 %v2833
  %v3272 = vunpack.c.l.b16 %v2834
  %v3273 = vunpack.c.h.b16 %v2834
  %v3274 = vunpack.c.l.b16 %v2835
  %v3275 = vunpack.c.h.b16 %v2835
  %v3276 = vpack.c.b16 %v3268, %v3260
  %v3277 = vpack.c.b16 %v3269, %v3261
  %v3278 = vpack.c.b16 %v3270, %v3262
  %v3279 = vpack.c.b16 %v3271, %v3263
  %v3280 = vpack.c.b16 %v3272, %v3264
  %v3281 = vpack.c.b16 %v3273, %v3265
  %v3282 = vpack.c.b16 %v3274, %v3266
  %v3283 = vpack.c.b16 %v3275, %v3267
  %v3676 = vunpack.c.l.b16 %v2836
  %v3677 = vunpack.c.h.b16 %v2836
  %v3678 = vunpack.c.l.b16 %v2837
  %v3679 = vunpack.c.h.b16 %v2837
  %v3680 = vunpack.c.l.b16 %v2838
  %v3681 = vunpack.c.h.b16 %v2838
  %v3682 = vunpack.c.l.b16 %v2839
  %v3683 = vunpack.c.h.b16 %v2839
  %v3684 = vunpack.c.l.b16 %v2840
  %v3685 = vunpack.c.h.b16 %v2840
  %v3686 = vunpack.c.l.b16 %v2841
  %v3687 = vunpack.c.h.b16 %v2841
  %v3688 = vunpack.c.l.b16 %v2842
  %v3689 = vunpack.c.h.b16 %v2842
  %v3690 = vunpack.c.l.b16 %v2843
  %v3691 = vunpack.c.h.b16 %v2843
  %v3692 = vunpack.c.l.b16 %v2844
  %v3693 = vunpack.c.h.b16 %v2844
  %v3694 = vunpack.c.l.b16 %v2845
  %v3695 = vunpack.c.h.b16 %v2845
  %v3696 = vunpack.c.l.b16 %v2846
  %v3697 = vunpack.c.h.b16 %v2846
  %v3698 = vunpack.c.l.b16 %v2847
  %v3699 = vunpack.c.h.b16 %v2847
  %v3700 = vunpack.c.l.b16 %v2848
  %v3701 = vunpack.c.h.b16 %v2848
  %v3702 = vunpack.c.l.b16 %v2849
  %v3703 = vunpack.c.h.b16 %v2849
  %v3704 = vunpack.c.l.b16 %v2850
  %v3705 = vunpack.c.h.b16 %v2850
  %v3706 = vunpack.c.l.b16 %v2851
  %v3707 = vunpack.c.h.b16 %v2851
  %v3708 = vunpack.c.l.b16 %v2852
  %v3709 = vunpack.c.h.b16 %v2852
  %v3710 = vunpack.c.l.b16 %v2853
  %v3711 = vunpack.c.h.b16 %v2853
  %v3712 = vunpack.c.l.b16 %v2854
  %v3713 = vunpack.c.h.b16 %v2854
  %v3714 = vunpack.c.l.b16 %v2855
  %v3715 = vunpack.c.h.b16 %v2855
  %v3716 = vunpack.c.l.b16 %v2856
  %v3717 = vunpack.c.h.b16 %v2856
  %v3718 = vunpack.c.l.b16 %v2857
  %v3719 = vunpack.c.h.b16 %v2857
  %v3720 = vunpack.c.l.b16 %v2858
  %v3721 = vunpack.c.h.b16 %v2858
  %v3722 = vunpack.c.l.b16 %v2859
  %v3723 = vunpack.c.h.b16 %v2859
  %v3724 = vunpack.c.l.b16 %v2860
  %v3725 = vunpack.c.h.b16 %v2860
  %v3726 = vunpack.c.l.b16 %v2861
  %v3727 = vunpack.c.h.b16 %v2861
  %v3728 = vunpack.c.l.b16 %v2862
  %v3729 = vunpack.c.h.b16 %v2862
  %v3730 = vunpack.c.l.b16 %v2863
  %v3731 = vunpack.c.h.b16 %v2863
  %v3732 = vunpack.c.l.b16 %v2864
  %v3733 = vunpack.c.h.b16 %v2864
  %v3734 = vunpack.c.l.b16 %v2865
  %v3735 = vunpack.c.h.b16 %v2865
  %v3736 = vunpack.c.l.b16 %v2866
  %v3737 = vunpack.c.h.b16 %v2866
  %v3738 = vunpack.c.l.b16 %v2867
  %v3739 = vunpack.c.h.b16 %v2867
  %v3740 = vunpack.c.l.b16 %v2868
  %v3741 = vunpack.c.h.b16 %v2868
  %v3742 = vunpack.c.l.b16 %v2869
  %v3743 = vunpack.c.h.b16 %v2869
  %v3744 = vunpack.c.l.b16 %v2870
  %v3745 = vunpack.c.h.b16 %v2870
  %v3746 = vunpack.c.l.b16 %v2871
  %v3747 = vunpack.c.h.b16 %v2871
  %v3748 = vunpack.c.l.b16 %v2872
  %v3749 = vunpack.c.h.b16 %v2872
  %v3750 = vunpack.c.l.b16 %v2873
  %v3751 = vunpack.c.h.b16 %v2873
  %v3752 = vunpack.c.l.b16 %v2874
  %v3753 = vunpack.c.h.b16 %v2874
  %v3754 = vunpack.c.l.b16 %v2875
  %v3755 = vunpack.c.h.b16 %v2875
  %v3756 = vunpack.c.l.b16 %v2876
  %v3757 = vunpack.c.h.b16 %v2876
  %v3758 = vunpack.c.l.b16 %v2877
  %v3759 = vunpack.c.h.b16 %v2877
  %v3760 = vunpack.c.l.b16 %v2878
  %v3761 = vunpack.c.h.b16 %v2878
  %v3762 = vunpack.c.l.b16 %v2879
  %v3763 = vunpack.c.h.b16 %v2879
  %v3764 = vunpack.c.l.b16 %v2880
  %v3765 = vunpack.c.h.b16 %v2880
  %v3766 = vunpack.c.l.b16 %v2881
  %v3767 = vunpack.c.h.b16 %v2881
  %v3768 = vunpack.c.l.b16 %v2882
  %v3769 = vunpack.c.h.b16 %v2882
  %v3770 = vunpack.c.l.b16 %v2883
  %v3771 = vunpack.c.h.b16 %v2883
  %v3772 = vunpack.c.l.b16 %v2884
  %v3773 = vunpack.c.h.b16 %v2884
  %v3774 = vunpack.c.l.b16 %v2885
  %v3775 = vunpack.c.h.b16 %v2885
  %v3776 = vunpack.c.l.b16 %v2886
  %v3777 = vunpack.c.h.b16 %v2886
  %v3778 = vunpack.c.l.b16 %v2887
  %v3779 = vunpack.c.h.b16 %v2887
  %v3780 = vunpack.c.l.b16 %v2888
  %v3781 = vunpack.c.h.b16 %v2888
  %v3782 = vunpack.c.l.b16 %v2889
  %v3783 = vunpack.c.h.b16 %v2889
  %v3784 = vunpack.c.l.b16 %v2890
  %v3785 = vunpack.c.h.b16 %v2890
  %v3786 = vunpack.c.l.b16 %v2891
  %v3787 = vunpack.c.h.b16 %v2891
  %v3788 = vunpack.c.l.b16 %v2892
  %v3789 = vunpack.c.h.b16 %v2892
  %v3790 = vunpack.c.l.b16 %v2893
  %v3791 = vunpack.c.h.b16 %v2893
  %v3792 = vunpack.c.l.b16 %v2894
  %v3793 = vunpack.c.h.b16 %v2894
  %v3794 = vunpack.c.l.b16 %v2895
  %v3795 = vunpack.c.h.b16 %v2895
  %v3796 = vunpack.c.l.b16 %v2896
  %v3797 = vunpack.c.h.b16 %v2896
  %v3798 = vunpack.c.l.b16 %v2897
  %v3799 = vunpack.c.h.b16 %v2897
  %v3800 = vunpack.c.l.b16 %v2898
  %v3801 = vunpack.c.h.b16 %v2898
  %v3802 = vunpack.c.l.b16 %v2899
  %v3803 = vunpack.c.h.b16 %v2899
  %v3804 = vunpack.c.l.b16 %v2900
  %v3805 = vunpack.c.h.b16 %v2900
  %v3806 = vunpack.c.l.b16 %v2901
  %v3807 = vunpack.c.h.b16 %v2901
  %v3808 = vunpack.c.l.b16 %v2902
  %v3809 = vunpack.c.h.b16 %v2902
  %v3810 = vunpack.c.l.b16 %v2903
  %v3811 = vunpack.c.h.b16 %v2903
  %v3812 = vunpack.c.l.b16 %v2904
  %v3813 = vunpack.c.h.b16 %v2904
  %v3814 = vunpack.c.l.b16 %v2905
  %v3815 = vunpack.c.h.b16 %v2905
  %v3816 = vunpack.c.l.b16 %v2906
  %v3817 = vunpack.c.h.b16 %v2906
  %v3818 = vunpack.c.l.b16 %v2907
  %v3819 = vunpack.c.h.b16 %v2907
  %v3820 = vunpack.c.l.b16 %v2908
  %v3821 = vunpack.c.h.b16 %v2908
  %v3822 = vunpack.c.l.b16 %v2909
  %v3823 = vunpack.c.h.b16 %v2909
  %v3824 = vunpack.c.l.b16 %v2910
  %v3825 = vunpack.c.h.b16 %v2910
  %v3826 = vunpack.c.l.b16 %v2911
  %v3827 = vunpack.c.h.b16 %v2911
  %v3828 = vunpack.c.l.b16 %v2912
  %v3829 = vunpack.c.h.b16 %v2912
  %v3830 = vunpack.c.l.b16 %v2913
  %v3831 = vunpack.c.h.b16 %v2913
  %v3832 = vunpack.c.l.b16 %v2914
  %v3833 = vunpack.c.h.b16 %v2914
  %v3834 = vunpack.c.l.b16 %v2915
  %v3835 = vunpack.c.h.b16 %v2915
  %v3836 = vunpack.c.l.b16 %v2916
  %v3837 = vunpack.c.h.b16 %v2916
  %v3838 = vunpack.c.l.b16 %v2917
  %v3839 = vunpack.c.h.b16 %v2917
  %v3840 = vunpack.c.l.b16 %v2918
  %v3841 = vunpack.c.h.b16 %v2918
  %v3842 = vunpack.c.l.b16 %v2919
  %v3843 = vunpack.c.h.b16 %v2919
  %v3844 = vunpack.c.l.b16 %v2920
  %v3845 = vunpack.c.h.b16 %v2920
  %v3846 = vunpack.c.l.b16 %v2921
  %v3847 = vunpack.c.h.b16 %v2921
  %v3848 = vunpack.c.l.b16 %v2922
  %v3849 = vunpack.c.h.b16 %v2922
  %v3850 = vunpack.c.l.b16 %v2923
  %v3851 = vunpack.c.h.b16 %v2923
  %v3852 = vunpack.c.l.b16 %v2924
  %v3853 = vunpack.c.h.b16 %v2924
  %v3854 = vunpack.c.l.b16 %v2925
  %v3855 = vunpack.c.h.b16 %v2925
  %v3856 = vunpack.c.l.b16 %v2926
  %v3857 = vunpack.c.h.b16 %v2926
  %v3858 = vunpack.c.l.b16 %v2927
  %v3859 = vunpack.c.h.b16 %v2927
  %v3860 = vunpack.c.l.b16 %v2928
  %v3861 = vunpack.c.h.b16 %v2928
  %v3862 = vunpack.c.l.b16 %v2929
  %v3863 = vunpack.c.h.b16 %v2929
  %v3864 = vunpack.c.l.b16 %v2930
  %v3865 = vunpack.c.h.b16 %v2930
  %v3866 = vunpack.c.l.b16 %v2931
  %v3867 = vunpack.c.h.b16 %v2931
  %v3868 = vunpack.c.l.b16 %v2932
  %v3869 = vunpack.c.h.b16 %v2932
  %v3870 = vunpack.c.l.b16 %v2933
  %v3871 = vunpack.c.h.b16 %v2933
  %v3872 = vunpack.c.l.b16 %v2934
  %v3873 = vunpack.c.h.b16 %v2934
  %v3874 = vunpack.c.l.b16 %v2935
  %v3875 = vunpack.c.h.b16 %v2935
  %v3876 = vunpack.c.l.b16 %v2936
  %v3877 = vunpack.c.h.b16 %v2936
  %v3878 = vunpack.c.l.b16 %v2937
  %v3879 = vunpack.c.h.b16 %v2937
  %v3880 = vunpack.c.l.b16 %v2938
  %v3881 = vunpack.c.h.b16 %v2938
  %v3882 = vunpack.c.l.b16 %v2939
  %v3883 = vunpack.c.h.b16 %v2939
  %v3884 = vunpack.c.l.b16 %v2940
  %v3885 = vunpack.c.h.b16 %v2940
  %v3886 = vunpack.c.l.b16 %v2941
  %v3887 = vunpack.c.h.b16 %v2941
  %v3888 = vunpack.c.l.b16 %v2942
  %v3889 = vunpack.c.h.b16 %v2942
  %v3890 = vunpack.c.l.b16 %v2943
  %v3891 = vunpack.c.h.b16 %v2943
  %v3892 = vunpack.c.l.b16 %v2944
  %v3893 = vunpack.c.h.b16 %v2944
  %v3894 = vunpack.c.l.b16 %v2945
  %v3895 = vunpack.c.h.b16 %v2945
  %v3896 = vunpack.c.l.b16 %v2946
  %v3897 = vunpack.c.h.b16 %v2946
  %v3898 = vunpack.c.l.b16 %v2947
  %v3899 = vunpack.c.h.b16 %v2947
  %v3900 = vunpack.c.l.b16 %v2948
  %v3901 = vunpack.c.h.b16 %v2948
  %v3902 = vunpack.c.l.b16 %v2949
  %v3903 = vunpack.c.h.b16 %v2949
  %v3904 = vunpack.c.l.b16 %v2950
  %v3905 = vunpack.c.h.b16 %v2950
  %v3906 = vunpack.c.l.b16 %v2951
  %v3907 = vunpack.c.h.b16 %v2951
  %v3908 = vunpack.c.l.b16 %v2952
  %v3909 = vunpack.c.h.b16 %v2952
  %v3910 = vunpack.c.l.b16 %v2953
  %v3911 = vunpack.c.h.b16 %v2953
  %v3912 = vunpack.c.l.b16 %v2954
  %v3913 = vunpack.c.h.b16 %v2954
  %v3914 = vunpack.c.l.b16 %v2955
  %v3915 = vunpack.c.h.b16 %v2955
  %v3916 = vunpack.c.l.b16 %v2956
  %v3917 = vunpack.c.h.b16 %v2956
  %v3918 = vunpack.c.l.b16 %v2957
  %v3919 = vunpack.c.h.b16 %v2957
  %v3920 = vunpack.c.l.b16 %v2958
  %v3921 = vunpack.c.h.b16 %v2958
  %v3922 = vunpack.c.l.b16 %v2959
  %v3923 = vunpack.c.h.b16 %v2959
  %v3924 = vunpack.c.l.b16 %v2960
  %v3925 = vunpack.c.h.b16 %v2960
  %v3926 = vunpack.c.l.b16 %v2961
  %v3927 = vunpack.c.h.b16 %v2961
  %v3928 = vunpack.c.l.b16 %v2962
  %v3929 = vunpack.c.h.b16 %v2962
  %v3930 = vunpack.c.l.b16 %v2963
  %v3931 = vunpack.c.h.b16 %v2963
  %v3932 = vunpack.c.l.b16 %v2964
  %v3933 = vunpack.c.h.b16 %v2964
  %v3934 = vunpack.c.l.b16 %v2965
  %v3935 = vunpack.c.h.b16 %v2965
  %v3936 = vunpack.c.l.b16 %v2966
  %v3937 = vunpack.c.h.b16 %v2966
  %v3938 = vunpack.c.l.b16 %v2967
  %v3939 = vunpack.c.h.b16 %v2967
  %v3940 = vunpack.c.l.b16 %v2968
  %v3941 = vunpack.c.h.b16 %v2968
  %v3942 = vunpack.c.l.b16 %v2969
  %v3943 = vunpack.c.h.b16 %v2969
  %v3944 = vunpack.c.l.b16 %v2970
  %v3945 = vunpack.c.h.b16 %v2970
  %v3946 = vunpack.c.l.b16 %v2971
  %v3947 = vunpack.c.h.b16 %v2971
  %v3948 = vunpack.c.l.b16 %v2972
  %v3949 = vunpack.c.h.b16 %v2972
  %v3950 = vunpack.c.l.b16 %v2973
  %v3951 = vunpack.c.h.b16 %v2973
  %v3952 = vunpack.c.l.b16 %v2974
  %v3953 = vunpack.c.h.b16 %v2974
  %v3954 = vunpack.c.l.b16 %v2975
  %v3955 = vunpack.c.h.b16 %v2975
  %v3956 = vunpack.c.l.b16 %v2976
  %v3957 = vunpack.c.h.b16 %v2976
  %v3958 = vunpack.c.l.b16 %v2977
  %v3959 = vunpack.c.h.b16 %v2977
  %v3960 = vunpack.c.l.b16 %v2978
  %v3961 = vunpack.c.h.b16 %v2978
  %v3962 = vunpack.c.l.b16 %v2979
  %v3963 = vunpack.c.h.b16 %v2979
  %v3964 = vunpack.c.l.b16 %v2980
  %v3965 = vunpack.c.h.b16 %v2980
  %v3966 = vunpack.c.l.b16 %v2981
  %v3967 = vunpack.c.h.b16 %v2981
  %v3968 = vunpack.c.l.b16 %v2982
  %v3969 = vunpack.c.h.b16 %v2982
  %v3970 = vunpack.c.l.b16 %v2983
  %v3971 = vunpack.c.h.b16 %v2983
  %v3972 = vunpack.c.l.b16 %v2984
  %v3973 = vunpack.c.h.b16 %v2984
  %v3974 = vunpack.c.l.b16 %v2985
  %v3975 = vunpack.c.h.b16 %v2985
  %v3976 = vunpack.c.l.b16 %v2986
  %v3977 = vunpack.c.h.b16 %v2986
  %v3978 = vunpack.c.l.b16 %v2987
  %v3979 = vunpack.c.h.b16 %v2987
  %v3980 = vunpack.c.l.b16 %v2988
  %v3981 = vunpack.c.h.b16 %v2988
  %v3982 = vunpack.c.l.b16 %v2989
  %v3983 = vunpack.c.h.b16 %v2989
  %v3984 = vunpack.c.l.b16 %v2990
  %v3985 = vunpack.c.h.b16 %v2990
  %v3986 = vunpack.c.l.b16 %v2991
  %v3987 = vunpack.c.h.b16 %v2991
  %v3988 = vunpack.c.l.b16 %v2992
  %v3989 = vunpack.c.h.b16 %v2992
  %v3990 = vunpack.c.l.b16 %v2993
  %v3991 = vunpack.c.h.b16 %v2993
  %v3992 = vunpack.c.l.b16 %v2994
  %v3993 = vunpack.c.h.b16 %v2994
  %v3994 = vunpack.c.l.b16 %v2995
  %v3995 = vunpack.c.h.b16 %v2995
  %v3996 = vunpack.c.l.b16 %v2996
  %v3997 = vunpack.c.h.b16 %v2996
  %v3998 = vunpack.c.l.b16 %v2997
  %v3999 = vunpack.c.h.b16 %v2997
  %v4000 = vunpack.c.l.b16 %v2998
  %v4001 = vunpack.c.h.b16 %v2998
  %v4002 = vunpack.c.l.b16 %v2999
  %v4003 = vunpack.c.h.b16 %v2999
  %v4004 = vunpack.c.l.b16 %v3000
  %v4005 = vunpack.c.h.b16 %v3000
  %v4006 = vunpack.c.l.b16 %v3001
  %v4007 = vunpack.c.h.b16 %v3001
  %v4008 = vunpack.c.l.b16 %v3002
  %v4009 = vunpack.c.h.b16 %v3002
  %v4010 = vunpack.c.l.b16 %v3003
  %v4011 = vunpack.c.h.b16 %v3003
  %v4012 = vunpack.c.l.b16 %v3004
  %v4013 = vunpack.c.h.b16 %v3004
  %v4014 = vunpack.c.l.b16 %v3005
  %v4015 = vunpack.c.h.b16 %v3005
  %v4016 = vunpack.c.l.b16 %v3006
  %v4017 = vunpack.c.h.b16 %v3006
  %v4018 = vunpack.c.l.b16 %v3007
  %v4019 = vunpack.c.h.b16 %v3007
  %v4020 = vunpack.c.l.b16 %v3008
  %v4021 = vunpack.c.h.b16 %v3008
  %v4022 = vunpack.c.l.b16 %v3009
  %v4023 = vunpack.c.h.b16 %v3009
  %v4024 = vunpack.c.l.b16 %v3010
  %v4025 = vunpack.c.h.b16 %v3010
  %v4026 = vunpack.c.l.b16 %v3011
  %v4027 = vunpack.c.h.b16 %v3011
  %v4028 = vunpack.c.l.b16 %v3012
  %v4029 = vunpack.c.h.b16 %v3012
  %v4030 = vunpack.c.l.b16 %v3013
  %v4031 = vunpack.c.h.b16 %v3013
  %v4032 = vunpack.c.l.b16 %v3014
  %v4033 = vunpack.c.h.b16 %v3014
  %v4034 = vunpack.c.l.b16 %v3015
  %v4035 = vunpack.c.h.b16 %v3015
  %v4036 = vunpack.c.l.b16 %v3016
  %v4037 = vunpack.c.h.b16 %v3016
  %v4038 = vunpack.c.l.b16 %v3017
  %v4039 = vunpack.c.h.b16 %v3017
  %v4040 = vunpack.c.l.b16 %v3018
  %v4041 = vunpack.c.h.b16 %v3018
  %v4042 = vunpack.c.l.b16 %v3019
  %v4043 = vunpack.c.h.b16 %v3019
  %v4044 = vunpack.c.l.b16 %v3020
  %v4045 = vunpack.c.h.b16 %v3020
  %v4046 = vunpack.c.l.b16 %v3021
  %v4047 = vunpack.c.h.b16 %v3021
  %v4048 = vunpack.c.l.b16 %v3022
  %v4049 = vunpack.c.h.b16 %v3022
  %v4050 = vunpack.c.l.b16 %v3023
  %v4051 = vunpack.c.h.b16 %v3023
  %v4052 = vunpack.c.l.b16 %v3024
  %v4053 = vunpack.c.h.b16 %v3024
  %v4054 = vunpack.c.l.b16 %v3025
  %v4055 = vunpack.c.h.b16 %v3025
  %v4056 = vunpack.c.l.b16 %v3026
  %v4057 = vunpack.c.h.b16 %v3026
  %v4058 = vunpack.c.l.b16 %v3027
  %v4059 = vunpack.c.h.b16 %v3027
  %v4060 = vunpack.c.l.b16 %v3028
  %v4061 = vunpack.c.h.b16 %v3028
  %v4062 = vunpack.c.l.b16 %v3029
  %v4063 = vunpack.c.h.b16 %v3029
  %v4064 = vunpack.c.l.b16 %v3030
  %v4065 = vunpack.c.h.b16 %v3030
  %v4066 = vunpack.c.l.b16 %v3031
  %v4067 = vunpack.c.h.b16 %v3031
  %v4068 = vunpack.c.l.b16 %v3032
  %v4069 = vunpack.c.h.b16 %v3032
  %v4070 = vunpack.c.l.b16 %v3033
  %v4071 = vunpack.c.h.b16 %v3033
  %v4072 = vunpack.c.l.b16 %v3034
  %v4073 = vunpack.c.h.b16 %v3034
  %v4074 = vunpack.c.l.b16 %v3035
  %v4075 = vunpack.c.h.b16 %v3035
  %v4076 = vunpack.c.l.b16 %v3036
  %v4077 = vunpack.c.h.b16 %v3036
  %v4078 = vunpack.c.l.b16 %v3037
  %v4079 = vunpack.c.h.b16 %v3037
  %v4080 = vunpack.c.l.b16 %v3038
  %v4081 = vunpack.c.h.b16 %v3038
  %v4082 = vunpack.c.l.b16 %v3039
  %v4083 = vunpack.c.h.b16 %v3039
  %v4084 = vunpack.c.l.b16 %v3040
  %v4085 = vunpack.c.h.b16 %v3040
  %v4086 = vunpack.c.l.b16 %v3041
  %v4087 = vunpack.c.h.b16 %v3041
  %v4088 = vunpack.c.l.b16 %v3042
  %v4089 = vunpack.c.h.b16 %v3042
  %v4090 = vunpack.c.l.b16 %v3043
  %v4091 = vunpack.c.h.b16 %v3043
  %v4092 = vunpack.c.l.b16 %v3044
  %v4093 = vunpack.c.h.b16 %v3044
  %v4094 = vunpack.c.l.b16 %v3045
  %v4095 = vunpack.c.h.b16 %v3045
  %v4096 = vunpack.c.l.b16 %v3046
  %v4097 = vunpack.c.h.b16 %v3046
  %v4098 = vunpack.c.l.b16 %v3047
  %v4099 = vunpack.c.h.b16 %v3047
  %v4100 = vunpack.c.l.b16 %v3048
  %v4101 = vunpack.c.h.b16 %v3048
  %v4102 = vunpack.c.l.b16 %v3049
  %v4103 = vunpack.c.h.b16 %v3049
  %v4104 = vunpack.c.l.b16 %v3050
  %v4105 = vunpack.c.h.b16 %v3050
  %v4106 = vunpack.c.l.b16 %v3051
  %v4107 = vunpack.c.h.b16 %v3051
  %v4108 = vunpack.c.l.b16 %v3052
  %v4109 = vunpack.c.h.b16 %v3052
  %v4110 = vunpack.c.l.b16 %v3053
  %v4111 = vunpack.c.h.b16 %v3053
  %v4112 = vunpack.c.l.b16 %v3054
  %v4113 = vunpack.c.h.b16 %v3054
  %v4114 = vunpack.c.l.b16 %v3055
  %v4115 = vunpack.c.h.b16 %v3055
  %v4116 = vunpack.c.l.b16 %v3056
  %v4117 = vunpack.c.h.b16 %v3056
  %v4118 = vunpack.c.l.b16 %v3057
  %v4119 = vunpack.c.h.b16 %v3057
  %v4120 = vunpack.c.l.b16 %v3058
  %v4121 = vunpack.c.h.b16 %v3058
  %v4122 = vunpack.c.l.b16 %v3059
  %v4123 = vunpack.c.h.b16 %v3059
  %v4124 = vunpack.c.l.b16 %v3060
  %v4125 = vunpack.c.h.b16 %v3060
  %v4126 = vunpack.c.l.b16 %v3061
  %v4127 = vunpack.c.h.b16 %v3061
  %v4128 = vunpack.c.l.b16 %v3062
  %v4129 = vunpack.c.h.b16 %v3062
  %v4130 = vunpack.c.l.b16 %v3063
  %v4131 = vunpack.c.h.b16 %v3063
  %v4132 = vunpack.c.l.b16 %v3064
  %v4133 = vunpack.c.h.b16 %v3064
  %v4134 = vunpack.c.l.b16 %v3065
  %v4135 = vunpack.c.h.b16 %v3065
  %v4136 = vunpack.c.l.b16 %v3066
  %v4137 = vunpack.c.h.b16 %v3066
  %v4138 = vunpack.c.l.b16 %v3067
  %v4139 = vunpack.c.h.b16 %v3067
  %v4140 = vunpack.c.l.b16 %v3068
  %v4141 = vunpack.c.h.b16 %v3068
  %v4142 = vunpack.c.l.b16 %v3069
  %v4143 = vunpack.c.h.b16 %v3069
  %v4144 = vunpack.c.l.b16 %v3070
  %v4145 = vunpack.c.h.b16 %v3070
  %v4146 = vunpack.c.l.b16 %v3071
  %v4147 = vunpack.c.h.b16 %v3071
  %v4148 = vunpack.c.l.b16 %v3072
  %v4149 = vunpack.c.h.b16 %v3072
  %v4150 = vunpack.c.l.b16 %v3073
  %v4151 = vunpack.c.h.b16 %v3073
  %v4152 = vunpack.c.l.b16 %v3074
  %v4153 = vunpack.c.h.b16 %v3074
  %v4154 = vunpack.c.l.b16 %v3075
  %v4155 = vunpack.c.h.b16 %v3075
  %v4156 = vunpack.c.l.b16 %v3076
  %v4157 = vunpack.c.h.b16 %v3076
  %v4158 = vunpack.c.l.b16 %v3077
  %v4159 = vunpack.c.h.b16 %v3077
  %v4160 = vunpack.c.l.b16 %v3078
  %v4161 = vunpack.c.h.b16 %v3078
  %v4162 = vunpack.c.l.b16 %v3079
  %v4163 = vunpack.c.h.b16 %v3079
  %v4164 = vunpack.c.l.b16 %v3080
  %v4165 = vunpack.c.h.b16 %v3080
  %v4166 = vunpack.c.l.b16 %v3081
  %v4167 = vunpack.c.h.b16 %v3081
  %v4168 = vunpack.c.l.b16 %v3082
  %v4169 = vunpack.c.h.b16 %v3082
  %v4170 = vunpack.c.l.b16 %v3083
  %v4171 = vunpack.c.h.b16 %v3083
  %v4172 = vunpack.c.l.b16 %v3084
  %v4173 = vunpack.c.h.b16 %v3084
  %v4174 = vunpack.c.l.b16 %v3085
  %v4175 = vunpack.c.h.b16 %v3085
  %v4176 = vunpack.c.l.b16 %v3086
  %v4177 = vunpack.c.h.b16 %v3086
  %v4178 = vunpack.c.l.b16 %v3087
  %v4179 = vunpack.c.h.b16 %v3087
  %v4180 = vunpack.c.l.b16 %v3088
  %v4181 = vunpack.c.h.b16 %v3088
  %v4182 = vunpack.c.l.b16 %v3089
  %v4183 = vunpack.c.h.b16 %v3089
  %v4184 = vunpack.c.l.b16 %v3090
  %v4185 = vunpack.c.h.b16 %v3090
  %v4186 = vunpack.c.l.b16 %v3091
  %v4187 = vunpack.c.h.b16 %v3091
  %v4188 = vunpack.c.l.b16 %v3092
  %v4189 = vunpack.c.h.b16 %v3092
  %v4190 = vunpack.c.l.b16 %v3093
  %v4191 = vunpack.c.h.b16 %v3093
  %v4192 = vunpack.c.l.b16 %v3094
  %v4193 = vunpack.c.h.b16 %v3094
  %v4194 = vunpack.c.l.b16 %v3095
  %v4195 = vunpack.c.h.b16 %v3095
  %v4196 = vunpack.c.l.b16 %v3096
  %v4197 = vunpack.c.h.b16 %v3096
  %v4198 = vunpack.c.l.b16 %v3097
  %v4199 = vunpack.c.h.b16 %v3097
  %v4200 = vunpack.c.l.b16 %v3098
  %v4201 = vunpack.c.h.b16 %v3098
  %v4202 = vunpack.c.l.b16 %v3099
  %v4203 = vunpack.c.h.b16 %v3099
  %v4204 = vunpack.c.l.b16 %v3100
  %v4205 = vunpack.c.h.b16 %v3100
  %v4206 = vunpack.c.l.b16 %v3101
  %v4207 = vunpack.c.h.b16 %v3101
  %v4208 = vunpack.c.l.b16 %v3102
  %v4209 = vunpack.c.h.b16 %v3102
  %v4210 = vunpack.c.l.b16 %v3103
  %v4211 = vunpack.c.h.b16 %v3103
  %v4212 = vunpack.c.l.b16 %v3104
  %v4213 = vunpack.c.h.b16 %v3104
  %v4214 = vunpack.c.l.b16 %v3105
  %v4215 = vunpack.c.h.b16 %v3105
  %v4216 = vunpack.c.l.b16 %v3106
  %v4217 = vunpack.c.h.b16 %v3106
  %v4218 = vunpack.c.l.b16 %v3107
  %v4219 = vunpack.c.h.b16 %v3107
  %v4220 = vunpack.c.l.b16 %v3108
  %v4221 = vunpack.c.h.b16 %v3108
  %v4222 = vunpack.c.l.b16 %v3109
  %v4223 = vunpack.c.h.b16 %v3109
  %v4224 = vunpack.c.l.b16 %v3110
  %v4225 = vunpack.c.h.b16 %v3110
  %v4226 = vunpack.c.l.b16 %v3111
  %v4227 = vunpack.c.h.b16 %v3111
  %v4228 = vunpack.c.l.b16 %v3112
  %v4229 = vunpack.c.h.b16 %v3112
  %v4230 = vunpack.c.l.b16 %v3113
  %v4231 = vunpack.c.h.b16 %v3113
  %v4232 = vunpack.c.l.b16 %v3114
  %v4233 = vunpack.c.h.b16 %v3114
  %v4234 = vunpack.c.l.b16 %v3115
  %v4235 = vunpack.c.h.b16 %v3115
  %v4236 = vunpack.c.l.b16 %v3116
  %v4237 = vunpack.c.h.b16 %v3116
  %v4238 = vunpack.c.l.b16 %v3117
  %v4239 = vunpack.c.h.b16 %v3117
  %v4240 = vunpack.c.l.b16 %v3118
  %v4241 = vunpack.c.h.b16 %v3118
  %v4242 = vunpack.c.l.b16 %v3119
  %v4243 = vunpack.c.h.b16 %v3119
  %v4244 = vunpack.c.l.b16 %v3120
  %v4245 = vunpack.c.h.b16 %v3120
  %v4246 = vunpack.c.l.b16 %v3121
  %v4247 = vunpack.c.h.b16 %v3121
  %v4248 = vunpack.c.l.b16 %v3122
  %v4249 = vunpack.c.h.b16 %v3122
  %v4250 = vunpack.c.l.b16 %v3123
  %v4251 = vunpack.c.h.b16 %v3123
  %v4252 = vunpack.c.l.b16 %v3124
  %v4253 = vunpack.c.h.b16 %v3124
  %v4254 = vunpack.c.l.b16 %v3125
  %v4255 = vunpack.c.h.b16 %v3125
  %v4256 = vunpack.c.l.b16 %v3126
  %v4257 = vunpack.c.h.b16 %v3126
  %v4258 = vunpack.c.l.b16 %v3127
  %v4259 = vunpack.c.h.b16 %v3127
  %v4260 = vunpack.c.l.b16 %v3128
  %v4261 = vunpack.c.h.b16 %v3128
  %v4262 = vunpack.c.l.b16 %v3129
  %v4263 = vunpack.c.h.b16 %v3129
  %v4264 = vunpack.c.l.b16 %v3130
  %v4265 = vunpack.c.h.b16 %v3130
  %v4266 = vunpack.c.l.b16 %v3131
  %v4267 = vunpack.c.h.b16 %v3131
  %v4268 = vunpack.c.l.b16 %v3132
  %v4269 = vunpack.c.h.b16 %v3132
  %v4270 = vunpack.c.l.b16 %v3133
  %v4271 = vunpack.c.h.b16 %v3133
  %v4272 = vunpack.c.l.b16 %v3134
  %v4273 = vunpack.c.h.b16 %v3134
  %v4274 = vunpack.c.l.b16 %v3135
  %v4275 = vunpack.c.h.b16 %v3135
  %v4276 = vunpack.c.l.b16 %v3136
  %v4277 = vunpack.c.h.b16 %v3136
  %v4278 = vunpack.c.l.b16 %v3137
  %v4279 = vunpack.c.h.b16 %v3137
  %v4280 = vunpack.c.l.b16 %v3138
  %v4281 = vunpack.c.h.b16 %v3138
  %v4282 = vunpack.c.l.b16 %v3139
  %v4283 = vunpack.c.h.b16 %v3139
  %v4284 = vunpack.c.l.b16 %v3140
  %v4285 = vunpack.c.h.b16 %v3140
  %v4286 = vunpack.c.l.b16 %v3141
  %v4287 = vunpack.c.h.b16 %v3141
  %v4288 = vunpack.c.l.b16 %v3142
  %v4289 = vunpack.c.h.b16 %v3142
  %v4290 = vunpack.c.l.b16 %v3143
  %v4291 = vunpack.c.h.b16 %v3143
  %v4292 = vunpack.c.l.b16 %v3144
  %v4293 = vunpack.c.h.b16 %v3144
  %v4294 = vunpack.c.l.b16 %v3145
  %v4295 = vunpack.c.h.b16 %v3145
  %v4296 = vunpack.c.l.b16 %v3146
  %v4297 = vunpack.c.h.b16 %v3146
  %v4298 = vunpack.c.l.b16 %v3147
  %v4299 = vunpack.c.h.b16 %v3147
  %v4300 = vunpack.c.l.b16 %v3148
  %v4301 = vunpack.c.h.b16 %v3148
  %v4302 = vunpack.c.l.b16 %v3149
  %v4303 = vunpack.c.h.b16 %v3149
  %v4304 = vunpack.c.l.b16 %v3150
  %v4305 = vunpack.c.h.b16 %v3150
  %v4306 = vunpack.c.l.b16 %v3151
  %v4307 = vunpack.c.h.b16 %v3151
  %v4308 = vunpack.c.l.b16 %v3152
  %v4309 = vunpack.c.h.b16 %v3152
  %v4310 = vunpack.c.l.b16 %v3153
  %v4311 = vunpack.c.h.b16 %v3153
  %v4312 = vunpack.c.l.b16 %v3154
  %v4313 = vunpack.c.h.b16 %v3154
  %v4314 = vunpack.c.l.b16 %v3155
  %v4315 = vunpack.c.h.b16 %v3155
  %v4316 = vunpack.c.l.b16 %v3156
  %v4317 = vunpack.c.h.b16 %v3156
  %v4318 = vunpack.c.l.b16 %v3157
  %v4319 = vunpack.c.h.b16 %v3157
  %v4320 = vunpack.c.l.b16 %v3158
  %v4321 = vunpack.c.h.b16 %v3158
  %v4322 = vunpack.c.l.b16 %v3159
  %v4323 = vunpack.c.h.b16 %v3159
  %v4324 = vunpack.c.l.b16 %v3160
  %v4325 = vunpack.c.h.b16 %v3160
  %v4326 = vunpack.c.l.b16 %v3161
  %v4327 = vunpack.c.h.b16 %v3161
  %v4328 = vunpack.c.l.b16 %v3162
  %v4329 = vunpack.c.h.b16 %v3162
  %v4330 = vunpack.c.l.b16 %v3163
  %v4331 = vunpack.c.h.b16 %v3163
  %v4332 = vunpack.c.l.b16 %v3164
  %v4333 = vunpack.c.h.b16 %v3164
  %v4334 = vunpack.c.l.b16 %v3165
  %v4335 = vunpack.c.h.b16 %v3165
  %v4336 = vunpack.c.l.b16 %v3166
  %v4337 = vunpack.c.h.b16 %v3166
  %v4338 = vunpack.c.l.b16 %v3167
  %v4339 = vunpack.c.h.b16 %v3167
  %v4340 = vunpack.c.l.b16 %v3168
  %v4341 = vunpack.c.h.b16 %v3168
  %v4342 = vunpack.c.l.b16 %v3169
  %v4343 = vunpack.c.h.b16 %v3169
  %v4344 = vunpack.c.l.b16 %v3170
  %v4345 = vunpack.c.h.b16 %v3170
  %v4346 = vunpack.c.l.b16 %v3171
  %v4347 = vunpack.c.h.b16 %v3171
  %v4348 = vunpack.c.l.b16 %v3172
  %v4349 = vunpack.c.h.b16 %v3172
  %v4350 = vunpack.c.l.b16 %v3173
  %v4351 = vunpack.c.h.b16 %v3173
  %v4352 = vunpack.c.l.b16 %v3174
  %v4353 = vunpack.c.h.b16 %v3174
  %v4354 = vunpack.c.l.b16 %v3175
  %v4355 = vunpack.c.h.b16 %v3175
  %v4356 = vunpack.c.l.b16 %v3176
  %v4357 = vunpack.c.h.b16 %v3176
  %v4358 = vunpack.c.l.b16 %v3177
  %v4359 = vunpack.c.h.b16 %v3177
  %v4360 = vunpack.c.l.b16 %v3178
  %v4361 = vunpack.c.h.b16 %v3178
  %v4362 = vunpack.c.l.b16 %v3179
  %v4363 = vunpack.c.h.b16 %v3179
  %v4364 = vunpack.c.l.b16 %v3180
  %v4365 = vunpack.c.h.b16 %v3180
  %v4366 = vunpack.c.l.b16 %v3181
  %v4367 = vunpack.c.h.b16 %v3181
  %v4368 = vunpack.c.l.b16 %v3182
  %v4369 = vunpack.c.h.b16 %v3182
  %v4370 = vunpack.c.l.b16 %v3183
  %v4371 = vunpack.c.h.b16 %v3183
  %v4372 = vunpack.c.l.b16 %v3184
  %v4373 = vunpack.c.h.b16 %v3184
  %v4374 = vunpack.c.l.b16 %v3185
  %v4375 = vunpack.c.h.b16 %v3185
  %v4376 = vunpack.c.l.b16 %v3186
  %v4377 = vunpack.c.h.b16 %v3186
  %v4378 = vunpack.c.l.b16 %v3187
  %v4379 = vunpack.c.h.b16 %v3187
  %v4380 = vunpack.c.l.b16 %v3188
  %v4381 = vunpack.c.h.b16 %v3188
  %v4382 = vunpack.c.l.b16 %v3189
  %v4383 = vunpack.c.h.b16 %v3189
  %v4384 = vunpack.c.l.b16 %v3190
  %v4385 = vunpack.c.h.b16 %v3190
  %v4386 = vunpack.c.l.b16 %v3191
  %v4387 = vunpack.c.h.b16 %v3191
  %v4388 = vunpack.c.l.b16 %v3192
  %v4389 = vunpack.c.h.b16 %v3192
  %v4390 = vunpack.c.l.b16 %v3193
  %v4391 = vunpack.c.h.b16 %v3193
  %v4392 = vunpack.c.l.b16 %v3194
  %v4393 = vunpack.c.h.b16 %v3194
  %v4394 = vunpack.c.l.b16 %v3195
  %v4395 = vunpack.c.h.b16 %v3195
  %v4396 = vunpack.c.l.b16 %v3196
  %v4397 = vunpack.c.h.b16 %v3196
  %v4398 = vunpack.c.l.b16 %v3197
  %v4399 = vunpack.c.h.b16 %v3197
  %v4400 = vunpack.c.l.b16 %v3198
  %v4401 = vunpack.c.h.b16 %v3198
  %v4402 = vunpack.c.l.b16 %v3199
  %v4403 = vunpack.c.h.b16 %v3199
  %v4404 = vunpack.c.l.b16 %v3200
  %v4405 = vunpack.c.h.b16 %v3200
  %v4406 = vunpack.c.l.b16 %v3201
  %v4407 = vunpack.c.h.b16 %v3201
  %v4408 = vunpack.c.l.b16 %v3202
  %v4409 = vunpack.c.h.b16 %v3202
  %v4410 = vunpack.c.l.b16 %v3203
  %v4411 = vunpack.c.h.b16 %v3203
  %v4412 = vunpack.c.l.b16 %v3204
  %v4413 = vunpack.c.h.b16 %v3204
  %v4414 = vunpack.c.l.b16 %v3205
  %v4415 = vunpack.c.h.b16 %v3205
  %v4416 = vunpack.c.l.b16 %v3206
  %v4417 = vunpack.c.h.b16 %v3206
  %v4418 = vunpack.c.l.b16 %v3207
  %v4419 = vunpack.c.h.b16 %v3207
  %v4420 = vunpack.c.l.b16 %v3208
  %v4421 = vunpack.c.h.b16 %v3208
  %v4422 = vunpack.c.l.b16 %v3209
  %v4423 = vunpack.c.h.b16 %v3209
  %v4424 = vunpack.c.l.b16 %v3210
  %v4425 = vunpack.c.h.b16 %v3210
  %v4426 = vunpack.c.l.b16 %v3211
  %v4427 = vunpack.c.h.b16 %v3211
  %v4428 = vunpack.c.l.b16 %v3212
  %v4429 = vunpack.c.h.b16 %v3212
  %v4430 = vunpack.c.l.b16 %v3213
  %v4431 = vunpack.c.h.b16 %v3213
  %v4432 = vunpack.c.l.b16 %v3214
  %v4433 = vunpack.c.h.b16 %v3214
  %v4434 = vunpack.c.l.b16 %v3215
  %v4435 = vunpack.c.h.b16 %v3215
  %v4436 = vunpack.c.l.b16 %v3216
  %v4437 = vunpack.c.h.b16 %v3216
  %v4438 = vunpack.c.l.b16 %v3217
  %v4439 = vunpack.c.h.b16 %v3217
  %v4440 = vunpack.c.l.b16 %v3218
  %v4441 = vunpack.c.h.b16 %v3218
  %v4442 = vunpack.c.l.b16 %v3219
  %v4443 = vunpack.c.h.b16 %v3219
  %v4444 = vpack.c.b16 %v3682, %v3676
  %v4445 = vpack.c.b16 %v3683, %v3677
  %v4446 = vpack.c.b16 %v3684, %v3678
  %v4447 = vpack.c.b16 %v3685, %v3679
  %v4448 = vpack.c.b16 %v3686, %v3680
  %v4449 = vpack.c.b16 %v3687, %v3681
  %v4450 = vpack.c.b16 %v3694, %v3688
  %v4451 = vpack.c.b16 %v3695, %v3689
  %v4452 = vpack.c.b16 %v3696, %v3690
  %v4453 = vpack.c.b16 %v3697, %v3691
  %v4454 = vpack.c.b16 %v3698, %v3692
  %v4455 = vpack.c.b16 %v3699, %v3693
  %v4456 = vpack.c.b16 %v3706, %v3700
  %v4457 = vpack.c.b16 %v3707, %v3701
  %v4458 = vpack.c.b16 %v3708, %v3702
  %v4459 = vpack.c.b16 %v3709, %v3703
  %v4460 = vpack.c.b16 %v3710, %v3704
  %v4461 = vpack.c.b16 %v3711, %v3705
  %v4462 = vpack.c.b16 %v3718, %v3712
  %v4463 = vpack.c.b16 %v3719, %v3713
  %v4464 = vpack.c.b16 %v3720, %v3714
  %v4465 = vpack.c.b16 %v3721, %v3715
  %v4466 = vpack.c.b16 %v3722, %v3716
  %v4467 = vpack.c.b16 %v3723, %v3717
  %v4468 = vpack.c.b16 %v3730, %v3724
  %v4469 = vpack.c.b16 %v3731, %v3725
  %v4470 = vpack.c.b16 %v3732, %v3726
  %v4471 = vpack.c.b16 %v3733, %v3727
  %v4472 = vpack.c.b16 %v3734, %v3728
  %v4473 = vpack.c.b16 %v3735, %v3729
  %v4474 = vpack.c.b16 %v3742, %v3736
  %v4475 = vpack.c.b16 %v3743, %v3737
  %v4476 = vpack.c.b16 %v3744, %v3738
  %v4477 = vpack.c.b16 %v3745, %v3739
  %v4478 = vpack.c.b16 %v3746, %v3740
  %v4479 = vpack.c.b16 %v3747, %v3741
  %v4480 = vpack.c.b16 %v3754, %v3748
  %v4481 = vpack.c.b16 %v3755, %v3749
  %v4482 = vpack.c.b16 %v3756, %v3750
  %v4483 = vpack.c.b16 %v3757, %v3751
  %v4484 = vpack.c.b16 %v3758, %v3752
  %v4485 = vpack.c.b16 %v3759, %v3753
  %v4486 = vpack.c.b16 %v3766, %v3760
  %v4487 = vpack.c.b16 %v3767, %v3761
  %v4488 = vpack.c.b16 %v3768, %v3762
  %v4489 = vpack.c.b16 %v3769, %v3763
  %v4490 = vpack.c.b16 %v3770, %v3764
  %v4491 = vpack.c.b16 %v3771, %v3765
  %v4492 = vpack.c.b16 %v3778, %v3772
  %v4493 = vpack.c.b16 %v3779, %v3773
  %v4494 = vpack.c.b16 %v3780, %v3774
  %v4495 = vpack.c.b16 %v3781, %v3775
  %v4496 = vpack.c.b16 %v3782, %v3776
  %v4497 = vpack.c.b16 %v3783, %v3777
  %v4498 = vpack.c.b16 %v3790, %v3784
  %v4499 = vpack.c.b16 %v3791, %v3785
  %v4500 = vpack.c.b16 %v3792, %v3786
  %v4501 = vpack.c.b16 %v3793, %v3787
  %v4502 = vpack.c.b16 %v3794, %v3788
  %v4503 = vpack.c.b16 %v3795, %v3789
  %v4504 = vpack.c.b16 %v3802, %v3796
  %v4505 = vpack.c.b16 %v3803, %v3797
  %v4506 = vpack.c.b16 %v3804, %v3798
  %v4507 = vpack.c.b16 %v3805, %v3799
  %v4508 = vpack.c.b16 %v3806, %v3800
  %v4509 = vpack.c.b16 %v3807, %v3801
  %v4510 = vpack.c.b16 %v3814, %v3808
  %v4511 = vpack.c.b16 %v3815, %v3809
  %v4512 = vpack.c.b16 %v3816, %v3810
  %v4513 = vpack.c.b16 %v3817, %v3811
  %v4514 = vpack.c.b16 %v3818, %v3812
  %v4515 = vpack.c.b16 %v3819, %v3813
  %v4516 = vpack.c.b16 %v3826, %v3820
  %v4517 = vpack.c.b16 %v3827, %v3821
  %v4518 = vpack.c.b16 %v3828, %v3822
  %v4519 = vpack.c.b16 %v3829, %v3823
  %v4520 = vpack.c.b16 %v3830, %v3824
  %v4521 = vpack.c.b16 %v3831, %v3825
  %v4522 = vpack.c.b16 %v3838, %v3832
  %v4523 = vpack.c.b16 %v3839, %v3833
  %v4524 = vpack.c.b16 %v3840, %v3834
  %v4525 = vpack.c.b16 %v3841, %v3835
  %v4526 = vpack.c.b16 %v3842, %v3836
  %v4527 = vpack.c.b16 %v3843, %v3837
  %v4528 = vpack.c.b16 %v3850, %v3844
  %v4529 = vpack.c.b16 %v3851, %v3845
  %v4530 = vpack.c.b16 %v3852, %v3846
  %v4531 = vpack.c.b16 %v3853, %v3847
  %v4532 = vpack.c.b16 %v3854, %v3848
  %v4533 = vpack.c.b16 %v3855, %v3849
  %v4534 = vpack.c.b16 %v3862, %v3856
  %v4535 = vpack.c.b16 %v3863, %v3857
  %v4536 = vpack.c.b16 %v3864, %v3858
  %v4537 = vpack.c.b16 %v3865, %v3859
  %v4538 = vpack.c.b16 %v3866, %v3860
  %v4539 = vpack.c.b16 %v3867, %v3861
  %v4540 = vpack.c.b16 %v3874, %v3868
  %v4541 = vpack.c.b16 %v3875, %v3869
  %v4542 = vpack.c.b16 %v3876, %v3870
  %v4543 = vpack.c.b16 %v3877, %v3871
  %v4544 = vpack.c.b16 %v3878, %v3872
  %v4545 = vpack.c.b16 %v3879, %v3873
  %v4546 = vpack.c.b16 %v3886, %v3880
  %v4547 = vpack.c.b16 %v3887, %v3881
  %v4548 = vpack.c.b16 %v3888, %v3882
  %v4549 = vpack.c.b16 %v3889, %v3883
  %v4550 = vpack.c.b16 %v3890, %v3884
  %v4551 = vpack.c.b16 %v3891, %v3885
  %v4552 = vpack.c.b16 %v3898, %v3892
  %v4553 = vpack.c.b16 %v3899, %v3893
  %v4554 = vpack.c.b16 %v3900, %v3894
  %v4555 = vpack.c.b16 %v3901, %v3895
  %v4556 = vpack.c.b16 %v3902, %v3896
  %v4557 = vpack.c.b16 %v3903, %v3897
  %v4558 = vpack.c.b16 %v3910, %v3904
  %v4559 = vpack.c.b16 %v3911, %v3905
  %v4560 = vpack.c.b16 %v3912, %v3906
  %v4561 = vpack.c.b16 %v3913, %v3907
  %v4562 = vpack.c.b16 %v3914, %v3908
  %v4563 = vpack.c.b16 %v3915, %v3909
  %v4564 = vpack.c.b16 %v3922, %v3916
  %v4565 = vpack.c.b16 %v3923, %v3917
  %v4566 = vpack.c.b16 %v3924, %v3918
  %v4567 = vpack.c.b16 %v3925, %v3919
  %v4568 = vpack.c.b16 %v3926, %v3920
  %v4569 = vpack.c.b16 %v3927, %v3921
  %v4570 = vpack.c.b16 %v3934, %v3928
  %v4571 = vpack.c.b16 %v3935, %v3929
  %v4572 = vpack.c.b16 %v3936, %v3930
  %v4573 = vpack.c.b16 %v3937, %v3931
  %v4574 = vpack.c.b16 %v3938, %v3932
  %v4575 = vpack.c.b16 %v3939, %v3933
  %v4576 = vpack.c.b16 %v3946, %v3940
  %v4577 = vpack.c.b16 %v3947, %v3941
  %v4578 = vpack.c.b16 %v3948, %v3942
  %v4579 = vpack.c.b16 %v3949, %v3943
  %v4580 = vpack.c.b16 %v3950, %v3944
  %v4581 = vpack.c.b16 %v3951, %v3945
  %v4582 = vpack.c.b16 %v3958, %v3952
  %v4583 = vpack.c.b16 %v3959, %v3953
  %v4584 = vpack.c.b16 %v3960, %v3954
  %v4585 = vpack.c.b16 %v3961, %v3955
  %v4586 = vpack.c.b16 %v3962, %v3956
  %v4587 = vpack.c.b16 %v3963, %v3957
  %v4588 = vpack.c.b16 %v3970, %v3964
  %v4589 = vpack.c.b16 %v3971, %v3965
  %v4590 = vpack.c.b16 %v3972, %v3966
  %v4591 = vpack.c.b16 %v3973, %v3967
  %v4592 = vpack.c.b16 %v3974, %v3968
  %v4593 = vpack.c.b16 %v3975, %v3969
  %v4594 = vpack.c.b16 %v3982, %v3976
  %v4595 = vpack.c.b16 %v3983, %v3977
  %v4596 = vpack.c.b16 %v3984, %v3978
  %v4597 = vpack.c.b16 %v3985, %v3979
  %v4598 = vpack.c.b16 %v3986, %v3980
  %v4599 = vpack.c.b16 %v3987, %v3981
  %v4600 = vpack.c.b16 %v3994, %v3988
  %v4601 = vpack.c.b16 %v3995, %v3989
  %v4602 = vpack.c.b16 %v3996, %v3990
  %v4603 = vpack.c.b16 %v3997, %v3991
  %v4604 = vpack.c.b16 %v3998, %v3992
  %v4605 = vpack.c.b16 %v3999, %v3993
  %v4606 = vpack.c.b16 %v4006, %v4000
  %v4607 = vpack.c.b16 %v4007, %v4001
  %v4608 = vpack.c.b16 %v4008, %v4002
  %v4609 = vpack.c.b16 %v4009, %v4003
  %v4610 = vpack.c.b16 %v4010, %v4004
  %v4611 = vpack.c.b16 %v4011, %v4005
  %v4612 = vpack.c.b16 %v4018, %v4012
  %v4613 = vpack.c.b16 %v4019, %v4013
  %v4614 = vpack.c.b16 %v4020, %v4014
  %v4615 = vpack.c.b16 %v4021, %v4015
  %v4616 = vpack.c.b16 %v4022, %v4016
  %v4617 = vpack.c.b16 %v4023, %v4017
  %v4618 = vpack.c.b16 %v4030, %v4024
  %v4619 = vpack.c.b16 %v4031, %v4025
  %v4620 = vpack.c.b16 %v4032, %v4026
  %v4621 = vpack.c.b16 %v4033, %v4027
  %v4622 = vpack.c.b16 %v4034, %v4028
  %v4623 = vpack.c.b16 %v4035, %v4029
  %v4624 = vpack.c.b16 %v4042, %v4036
  %v4625 = vpack.c.b16 %v4043, %v4037
  %v4626 = vpack.c.b16 %v4044, %v4038
  %v4627 = vpack.c.b16 %v4045, %v4039
  %v4628 = vpack.c.b16 %v4046, %v4040
  %v4629 = vpack.c.b16 %v4047, %v4041
  %v4630 = vpack.c.b16 %v4054, %v4048
  %v4631 = vpack.c.b16 %v4055, %v4049
  %v4632 = vpack.c.b16 %v4056, %v4050
  %v4633 = vpack.c.b16 %v4057, %v4051
  %v4634 = vpack.c.b16 %v4058, %v4052
  %v4635 = vpack.c.b16 %v4059, %v4053
  %v4636 = vpack.c.b16 %v4066, %v4060
  %v4637 = vpack.c.b16 %v4067, %v4061
  %v4638 = vpack.c.b16 %v4068, %v4062
  %v4639 = vpack.c.b16 %v4069, %v4063
  %v4640 = vpack.c.b16 %v4070, %v4064
  %v4641 = vpack.c.b16 %v4071, %v4065
  %v4642 = vpack.c.b16 %v4078, %v4072
  %v4643 = vpack.c.b16 %v4079, %v4073
  %v4644 = vpack.c.b16 %v4080, %v4074
  %v4645 = vpack.c.b16 %v4081, %v4075
  %v4646 = vpack.c.b16 %v4082, %v4076
  %v4647 = vpack.c.b16 %v4083, %v4077
  %v4648 = vpack.c.b16 %v4090, %v4084
  %v4649 = vpack.c.b16 %v4091, %v4085
  %v4650 = vpack.c.b16 %v4092, %v4086
  %v4651 = vpack.c.b16 %v4093, %v4087
  %v4652 = vpack.c.b16 %v4094, %v4088
  %v4653 = vpack.c.b16 %v4095, %v4089
  %v4654 = vpack.c.b16 %v4102, %v4096
  %v4655 = vpack.c.b16 %v4103, %v4097
  %v4656 = vpack.c.b16 %v4104, %v4098
  %v4657 = vpack.c.b16 %v4105, %v4099
  %v4658 = vpack.c.b16 %v4106, %v4100
  %v4659 = vpack.c.b16 %v4107, %v4101
  %v4660 = vpack.c.b16 %v4114, %v4108
  %v4661 = vpack.c.b16 %v4115, %v4109
  %v4662 = vpack.c.b16 %v4116, %v4110
  %v4663 = vpack.c.b16 %v4117, %v4111
  %v4664 = vpack.c.b16 %v4118, %v4112
  %v4665 = vpack.c.b16 %v4119, %v4113
  %v4666 = vpack.c.b16 %v4126, %v4120
  %v4667 = vpack.c.b16 %v4127, %v4121
  %v4668 = vpack.c.b16 %v4128, %v4122
  %v4669 = vpack.c.b16 %v4129, %v4123
  %v4670 = vpack.c.b16 %v4130, %v4124
  %v4671 = vpack.c.b16 %v4131, %v4125
  %v4672 = vpack.c.b16 %v4138, %v4132
  %v4673 = vpack.c.b16 %v4139, %v4133
  %v4674 = vpack.c.b16 %v4140, %v4134
  %v4675 = vpack.c.b16 %v4141, %v4135
  %v4676 = vpack.c.b16 %v4142, %v4136
  %v4677 = vpack.c.b16 %v4143, %v4137
  %v4678 = vpack.c.b16 %v4150, %v4144
  %v4679 = vpack.c.b16 %v4151, %v4145
  %v4680 = vpack.c.b16 %v4152, %v4146
  %v4681 = vpack.c.b16 %v4153, %v4147
  %v4682 = vpack.c.b16 %v4154, %v4148
  %v4683 = vpack.c.b16 %v4155, %v4149
  %v4684 = vpack.c.b16 %v4162, %v4156
  %v4685 = vpack.c.b16 %v4163, %v4157
  %v4686 = vpack.c.b16 %v4164, %v4158
  %v4687 = vpack.c.b16 %v4165, %v4159
  %v4688 = vpack.c.b16 %v4166, %v4160
  %v4689 = vpack.c.b16 %v4167, %v4161
  %v4690 = vpack.c.b16 %v4174, %v4168
  %v4691 = vpack.c.b16 %v4175, %v4169
  %v4692 = vpack.c.b16 %v4176, %v4170
  %v4693 = vpack.c.b16 %v4177, %v4171
  %v4694 = vpack.c.b16 %v4178, %v4172
  %v4695 = vpack.c.b16 %v4179, %v4173
  %v4696 = vpack.c.b16 %v4186, %v4180
  %v4697 = vpack.c.b16 %v4187, %v4181
  %v4698 = vpack.c.b16 %v4188, %v4182
  %v4699 = vpack.c.b16 %v4189, %v4183
  %v4700 = vpack.c.b16 %v4190, %v4184
  %v4701 = vpack.c.b16 %v4191, %v4185
  %v4702 = vpack.c.b16 %v4198, %v4192
  %v4703 = vpack.c.b16 %v4199, %v4193
  %v4704 = vpack.c.b16 %v4200, %v4194
  %v4705 = vpack.c.b16 %v4201, %v4195
  %v4706 = vpack.c.b16 %v4202, %v4196
  %v4707 = vpack.c.b16 %v4203, %v4197
  %v4708 = vpack.c.b16 %v4210, %v4204
  %v4709 = vpack.c.b16 %v4211, %v4205
  %v4710 = vpack.c.b16 %v4212, %v4206
  %v4711 = vpack.c.b16 %v4213, %v4207
  %v4712 = vpack.c.b16 %v4214, %v4208
  %v4713 = vpack.c.b16 %v4215, %v4209
  %v4714 = vpack.c.b16 %v4222, %v4216
  %v4715 = vpack.c.b16 %v4223, %v4217
  %v4716 = vpack.c.b16 %v4224, %v4218
  %v4717 = vpack.c.b16 %v4225, %v4219
  %v4718 = vpack.c.b16 %v4226, %v4220
  %v4719 = vpack.c.b16 %v4227, %v4221
  %v4720 = vpack.c.b16 %v4234, %v4228
  %v4721 = vpack.c.b16 %v4235, %v4229
  %v4722 = vpack.c.b16 %v4236, %v4230
  %v4723 = vpack.c.b16 %v4237, %v4231
  %v4724 = vpack.c.b16 %v4238, %v4232
  %v4725 = vpack.c.b16 %v4239, %v4233
  %v4726 = vpack.c.b16 %v4246, %v4240
  %v4727 = vpack.c.b16 %v4247, %v4241
  %v4728 = vpack.c.b16 %v4248, %v4242
  %v4729 = vpack.c.b16 %v4249, %v4243
  %v4730 = vpack.c.b16 %v4250, %v4244
  %v4731 = vpack.c.b16 %v4251, %v4245
  %v4732 = vpack.c.b16 %v4258, %v4252
  %v4733 = vpack.c.b16 %v4259, %v4253
  %v4734 = vpack.c.b16 %v4260, %v4254
  %v4735 = vpack.c.b16 %v4261, %v4255
  %v4736 = vpack.c.b16 %v4262, %v4256
  %v4737 = vpack.c.b16 %v4263, %v4257
  %v4738 = vpack.c.b16 %v4270, %v4264
  %v4739 = vpack.c.b16 %v4271, %v4265
  %v4740 = vpack.c.b16 %v4272, %v4266
  %v4741 = vpack.c.b16 %v4273, %v4267
  %v4742 = vpack.c.b16 %v4274, %v4268
  %v4743 = vpack.c.b16 %v4275, %v4269
  %v4744 = vpack.c.b16 %v4282, %v4276
  %v4745 = vpack.c.b16 %v4283, %v4277
  %v4746 = vpack.c.b16 %v4284, %v4278
  %v4747 = vpack.c.b16 %v4285, %v4279
  %v4748 = vpack.c.b16 %v4286, %v4280
  %v4749 = vpack.c.b16 %v4287, %v4281
  %v4750 = vpack.c.b16 %v4294, %v4288
  %v4751 = vpack.c.b16 %v4295, %v4289
  %v4752 = vpack.c.b16 %v4296, %v4290
  %v4753 = vpack.c.b16 %v4297, %v4291
  %v4754 = vpack.c.b16 %v4298, %v4292
  %v4755 = vpack.c.b16 %v4299, %v4293
  %v4756 = vpack.c.b16 %v4306, %v4300
  %v4757 = vpack.c.b16 %v4307, %v4301
  %v4758 = vpack.c.b16 %v4308, %v4302
  %v4759 = vpack.c.b16 %v4309, %v4303
  %v4760 = vpack.c.b16 %v4310, %v4304
  %v4761 = vpack.c.b16 %v4311, %v4305
  %v4762 = vpack.c.b16 %v4318, %v4312
  %v4763 = vpack.c.b16 %v4319, %v4313
  %v4764 = vpack.c.b16 %v4320, %v4314
  %v4765 = vpack.c.b16 %v4321, %v4315
  %v4766 = vpack.c.b16 %v4322, %v4316
  %v4767 = vpack.c.b16 %v4323, %v4317
  %v4768 = vpack.c.b16 %v4330, %v4324
  %v4769 = vpack.c.b16 %v4331, %v4325
  %v4770 = vpack.c.b16 %v4332, %v4326
  %v4771 = vpack.c.b16 %v4333, %v4327
  %v4772 = vpack.c.b16 %v4334, %v4328
  %v4773 = vpack.c.b16 %v4335, %v4329
  %v4774 = vpack.c.b16 %v4342, %v4336
  %v4775 = vpack.c.b16 %v4343, %v4337
  %v4776 = vpack.c.b16 %v4344, %v4338
  %v4777 = vpack.c.b16 %v4345, %v4339
  %v4778 = vpack.c.b16 %v4346, %v4340
  %v4779 = vpack.c.b16 %v4347, %v4341
  %v4780 = vpack.c.b16 %v4354, %v4348
  %v4781 = vpack.c.b16 %v4355, %v4349
  %v4782 = vpack.c.b16 %v4356, %v4350
  %v4783 = vpack.c.b16 %v4357, %v4351
  %v4784 = vpack.c.b16 %v4358, %v4352
  %v4785 = vpack.c.b16 %v4359, %v4353
  %v4786 = vpack.c.b16 %v4366, %v4360
  %v4787 = vpack.c.b16 %v4367, %v4361
  %v4788 = vpack.c.b16 %v4368, %v4362
  %v4789 = vpack.c.b16 %v4369, %v4363
  %v4790 = vpack.c.b16 %v4370, %v4364
  %v4791 = vpack.c.b16 %v4371, %v4365
  %v4792 = vpack.c.b16 %v4378, %v4372
  %v4793 = vpack.c.b16 %v4379, %v4373
  %v4794 = vpack.c.b16 %v4380, %v4374
  %v4795 = vpack.c.b16 %v4381, %v4375
  %v4796 = vpack.c.b16 %v4382, %v4376
  %v4797 = vpack.c.b16 %v4383, %v4377
  %v4798 = vpack.c.b16 %v4390, %v4384
  %v4799 = vpack.c.b16 %v4391, %v4385
  %v4800 = vpack.c.b16 %v4392, %v4386
  %v4801 = vpack.c.b16 %v4393, %v4387
  %v4802 = vpack.c.b16 %v4394, %v4388
  %v4803 = vpack.c.b16 %v4395, %v4389
  %v4804 = vpack.c.b16 %v4402, %v4396
  %v4805 = vpack.c.b16 %v4403, %v4397
  %v4806 = vpack.c.b16 %v4404, %v4398
  %v4807 = vpack.c.b16 %v4405, %v4399
  %v4808 = vpack.c.b16 %v4406, %v4400
  %v4809 = vpack.c.b16 %v4407, %v4401
  %v4810 = vpack.c.b16 %v4414, %v4408
  %v4811 = vpack.c.b16 %v4415, %v4409
  %v4812 = vpack.c.b16 %v4416, %v4410
  %v4813 = vpack.c.b16 %v4417, %v4411
  %v4814 = vpack.c.b16 %v4418, %v4412
  %v4815 = vpack.c.b16 %v4419, %v4413
  %v4816 = vpack.c.b16 %v4426, %v4420
  %v4817 = vpack.c.b16 %v4427, %v4421
  %v4818 = vpack.c.b16 %v4428, %v4422
  %v4819 = vpack.c.b16 %v4429, %v4423
  %v4820 = vpack.c.b16 %v4430, %v4424
  %v4821 = vpack.c.b16 %v4431, %v4425
  %v4822 = vpack.c.b16 %v4438, %v4432
  %v4823 = vpack.c.b16 %v4439, %v4433
  %v4824 = vpack.c.b16 %v4440, %v4434
  %v4825 = vpack.c.b16 %v4441, %v4435
  %v4826 = vpack.c.b16 %v4442, %v4436
  %v4827 = vpack.c.b16 %v4443, %v4437
  %5212 = vmatprep.subr.bf16.mxu0 %v4487
  %5213 = vmatpush1.bf16.msra.mxu0 %v4486
  %5214 = vmatprep.subr.bf16.mxu0 %v4481
  %5215 = vmatpush1.bf16.msra.mxu0 %v4480
  %5216 = vmatprep.subr.bf16.mxu0 %v4475
  %5217 = vmatpush1.bf16.msra.mxu0 %v4474
  %5218 = vmatprep.subr.bf16.mxu0 %v4469
  %5219 = vmatpush1.bf16.msra.mxu0 %v4468
  %5220 = vmatprep.subr.bf16.mxu0 %v4463
  %5221 = vmatpush1.bf16.msra.mxu0 %v4462
  %5222 = vmatprep.subr.bf16.mxu0 %v4457
  %5223 = vmatpush1.bf16.msra.mxu0 %v4456
  %5224 = vmatprep.subr.bf16.mxu0 %v4451
  %5225 = vmatpush1.bf16.msra.mxu0 %v4450
  %5226 = vmatprep.subr.bf16.mxu0 %v4445
  %5227 = vmatpush1.bf16.msra.mxu0 %v4444
  %5228 = vmatprep.subr.bf16.mxu0 %v4535
  %5229 = vmatpush2.bf16.msra.mxu0 %v4534
  %5230 = vmatprep.subr.bf16.mxu0 %v4529
  %5231 = vmatpush2.bf16.msra.mxu0 %v4528
  %5232 = vmatprep.subr.bf16.mxu0 %v4523
  %5233 = vmatpush2.bf16.msra.mxu0 %v4522
  %5234 = vmatprep.subr.bf16.mxu0 %v4517
  %5235 = vmatpush2.bf16.msra.mxu0 %v4516
  %5236 = vmatprep.subr.bf16.mxu0 %v4511
  %5237 = vmatpush2.bf16.msra.mxu0 %v4510
  %5238 = vmatprep.subr.bf16.mxu0 %v4505
  %5239 = vmatpush2.bf16.msra.mxu0 %v4504
  %5240 = vmatprep.subr.bf16.mxu0 %v4499
  %5241 = vmatpush2.bf16.msra.mxu0 %v4498
  %5242 = vmatprep.subr.bf16.mxu0 %v4493
  %5243 = vmatpush2.bf16.msra.mxu0 %v4492
  %5244 = vmatprep.mubr.bf16.mxu0 %v3277
  %5245 = vmatmul.mubr.bf16.gmra.mxu0 %v3276
  %v5246 = vpop.f32.mrf.mxu0
  %v5247 = vadd.f32 %v3225, %v5246
  %v5248 = vpop.f32.mrf.mxu0
  %v5249 = vadd.f32 %v3229, %v5248
  %v5250 = vpop.f32.mrf.mxu0
  %v5251 = vadd.f32 %v3225, %v5250
  %v5252 = vpop.f32.mrf.mxu0
  %v5253 = vadd.f32 %v3229, %v5252
  %5254 = vdwg.mxu0
  %5255 = vmatprep.subr.bf16.mxu0 %v4583
  %5256 = vmatpush1.bf16.msra.mxu0 %v4582
  %5257 = vmatprep.subr.bf16.mxu0 %v4577
  %5258 = vmatpush1.bf16.msra.mxu0 %v4576
  %5259 = vmatprep.subr.bf16.mxu0 %v4571
  %5260 = vmatpush1.bf16.msra.mxu0 %v4570
  %5261 = vmatprep.subr.bf16.mxu0 %v4565
  %5262 = vmatpush1.bf16.msra.mxu0 %v4564
  %5263 = vmatprep.subr.bf16.mxu0 %v4559
  %5264 = vmatpush1.bf16.msra.mxu0 %v4558
  %5265 = vmatprep.subr.bf16.mxu0 %v4553
  %5266 = vmatpush1.bf16.msra.mxu0 %v4552
  %5267 = vmatprep.subr.bf16.mxu0 %v4547
  %5268 = vmatpush1.bf16.msra.mxu0 %v4546
  %5269 = vmatprep.subr.bf16.mxu0 %v4541
  %5270 = vmatpush1.bf16.msra.mxu0 %v4540
  %5271 = vmatprep.subr.bf16.mxu0 %v4631
  %5272 = vmatpush2.bf16.msra.mxu0 %v4630
  %5273 = vmatprep.subr.bf16.mxu0 %v4625
  %5274 = vmatpush2.bf16.msra.mxu0 %v4624
  %5275 = vmatprep.subr.bf16.mxu0 %v4619
  %5276 = vmatpush2.bf16.msra.mxu0 %v4618
  %5277 = vmatprep.subr.bf16.mxu0 %v4613
  %5278 = vmatpush2.bf16.msra.mxu0 %v4612
  %5279 = vmatprep.subr.bf16.mxu0 %v4607
  %5280 = vmatpush2.bf16.msra.mxu0 %v4606
  %5281 = vmatprep.subr.bf16.mxu0 %v4601
  %5282 = vmatpush2.bf16.msra.mxu0 %v4600
  %5283 = vmatprep.subr.bf16.mxu0 %v4595
  %5284 = vmatpush2.bf16.msra.mxu0 %v4594
  %5285 = vmatprep.subr.bf16.mxu0 %v4589
  %5286 = vmatpush2.bf16.msra.mxu0 %v4588
  %5287 = vmatprep.mubr.bf16.mxu0 %v3279
  %5288 = vmatmul.mubr.bf16.gmra.mxu0 %v3278
  %v5289 = vpop.f32.mrf.mxu0
  %v5290 = vadd.f32 %v5247, %v5289
  %v5291 = vpop.f32.mrf.mxu0
  %v5292 = vadd.f32 %v5249, %v5291
  %v5293 = vpop.f32.mrf.mxu0
  %v5294 = vadd.f32 %v5251, %v5293
  %v5295 = vpop.f32.mrf.mxu0
  %v5296 = vadd.f32 %v5253, %v5295
  %5297 = vdwg.mxu0
  %5298 = vmatprep.subr.bf16.mxu0 %v4679
  %5299 = vmatpush1.bf16.msra.mxu0 %v4678
  %5300 = vmatprep.subr.bf16.mxu0 %v4673
  %5301 = vmatpush1.bf16.msra.mxu0 %v4672
  %5302 = vmatprep.subr.bf16.mxu0 %v4667
  %5303 = vmatpush1.bf16.msra.mxu0 %v4666
  %5304 = vmatprep.subr.bf16.mxu0 %v4661
  %5305 = vmatpush1.bf16.msra.mxu0 %v4660
  %5306 = vmatprep.subr.bf16.mxu0 %v4655
  %5307 = vmatpush1.bf16.msra.mxu0 %v4654
  %5308 = vmatprep.subr.bf16.mxu0 %v4649
  %5309 = vmatpush1.bf16.msra.mxu0 %v4648
  %5310 = vmatprep.subr.bf16.mxu0 %v4643
  %5311 = vmatpush1.bf16.msra.mxu0 %v4642
  %5312 = vmatprep.subr.bf16.mxu0 %v4637
  %5313 = vmatpush1.bf16.msra.mxu0 %v4636
  %5314 = vmatprep.subr.bf16.mxu0 %v4727
  %5315 = vmatpush2.bf16.msra.mxu0 %v4726
  %5316 = vmatprep.subr.bf16.mxu0 %v4721
  %5317 = vmatpush2.bf16.msra.mxu0 %v4720
  %5318 = vmatprep.subr.bf16.mxu0 %v4715
  %5319 = vmatpush2.bf16.msra.mxu0 %v4714
  %5320 = vmatprep.subr.bf16.mxu0 %v4709
  %5321 = vmatpush2.bf16.msra.mxu0 %v4708
  %5322 = vmatprep.subr.bf16.mxu0 %v4703
  %5323 = vmatpush2.bf16.msra.mxu0 %v4702
  %5324 = vmatprep.subr.bf16.mxu0 %v4697
  %5325 = vmatpush2.bf16.msra.mxu0 %v4696
  %5326 = vmatprep.subr.bf16.mxu0 %v4691
  %5327 = vmatpush2.bf16.msra.mxu0 %v4690
  %5328 = vmatprep.subr.bf16.mxu0 %v4685
  %5329 = vmatpush2.bf16.msra.mxu0 %v4684
  %5330 = vmatprep.mubr.bf16.mxu0 %v3281
  %5331 = vmatmul.mubr.bf16.gmra.mxu0 %v3280
  %v5332 = vpop.f32.mrf.mxu0
  %v5333 = vadd.f32 %v5290, %v5332
  %v5334 = vpop.f32.mrf.mxu0
  %v5335 = vadd.f32 %v5292, %v5334
  %v5336 = vpop.f32.mrf.mxu0
  %v5337 = vadd.f32 %v5294, %v5336
  %v5338 = vpop.f32.mrf.mxu0
  %v5339 = vadd.f32 %v5296, %v5338
  %5340 = vdwg.mxu0
  %5341 = vmatprep.subr.bf16.mxu0 %v4775
  %5342 = vmatpush1.bf16.msra.mxu0 %v4774
  %5343 = vmatprep.subr.bf16.mxu0 %v4769
  %5344 = vmatpush1.bf16.msra.mxu0 %v4768
  %5345 = vmatprep.subr.bf16.mxu0 %v4763
  %5346 = vmatpush1.bf16.msra.mxu0 %v4762
  %5347 = vmatprep.subr.bf16.mxu0 %v4757
  %5348 = vmatpush1.bf16.msra.mxu0 %v4756
  %5349 = vmatprep.subr.bf16.mxu0 %v4751
  %5350 = vmatpush1.bf16.msra.mxu0 %v4750
  %5351 = vmatprep.subr.bf16.mxu0 %v4745
  %5352 = vmatpush1.bf16.msra.mxu0 %v4744
  %5353 = vmatprep.subr.bf16.mxu0 %v4739
  %5354 = vmatpush1.bf16.msra.mxu0 %v4738
  %5355 = vmatprep.subr.bf16.mxu0 %v4733
  %5356 = vmatpush1.bf16.msra.mxu0 %v4732
  %5357 = vmatprep.subr.bf16.mxu0 %v4823
  %5358 = vmatpush2.bf16.msra.mxu0 %v4822
  %5359 = vmatprep.subr.bf16.mxu0 %v4817
  %5360 = vmatpush2.bf16.msra.mxu0 %v4816
  %5361 = vmatprep.subr.bf16.mxu0 %v4811
  %5362 = vmatpush2.bf16.msra.mxu0 %v4810
  %5363 = vmatprep.subr.bf16.mxu0 %v4805
  %5364 = vmatpush2.bf16.msra.mxu0 %v4804
  %5365 = vmatprep.subr.bf16.mxu0 %v4799
  %5366 = vmatpush2.bf16.msra.mxu0 %v4798
  %5367 = vmatprep.subr.bf16.mxu0 %v4793
  %5368 = vmatpush2.bf16.msra.mxu0 %v4792
  %5369 = vmatprep.subr.bf16.mxu0 %v4787
  %5370 = vmatpush2.bf16.msra.mxu0 %v4786
  %5371 = vmatprep.subr.bf16.mxu0 %v4781
  %5372 = vmatpush2.bf16.msra.mxu0 %v4780
  %5373 = vmatprep.mubr.bf16.mxu0 %v3283
  %5374 = vmatmul.mubr.bf16.gmra.mxu0 %v3282
  %v5375 = vpop.f32.mrf.mxu0
  %v5376 = vadd.f32 %v5333, %v5375
  %v5377 = vpop.f32.mrf.mxu0
  %v5378 = vadd.f32 %v5335, %v5377
  %v5379 = vpop.f32.mrf.mxu0
  %v5380 = vadd.f32 %v5337, %v5379
  %v5381 = vpop.f32.mrf.mxu0
  %v5382 = vadd.f32 %v5339, %v5381
  %5383 = vdwg.mxu0
  %5384 = vmatprep.subr.bf16.mxu0 %v4489
  %5385 = vmatpush1.bf16.msra.mxu0 %v4488
  %5386 = vmatprep.subr.bf16.mxu0 %v4483
  %5387 = vmatpush1.bf16.msra.mxu0 %v4482
  %5388 = vmatprep.subr.bf16.mxu0 %v4477
  %5389 = vmatpush1.bf16.msra.mxu0 %v4476
  %5390 = vmatprep.subr.bf16.mxu0 %v4471
  %5391 = vmatpush1.bf16.msra.mxu0 %v4470
  %5392 = vmatprep.subr.bf16.mxu0 %v4465
  %5393 = vmatpush1.bf16.msra.mxu0 %v4464
  %5394 = vmatprep.subr.bf16.mxu0 %v4459
  %5395 = vmatpush1.bf16.msra.mxu0 %v4458
  %5396 = vmatprep.subr.bf16.mxu0 %v4453
  %5397 = vmatpush1.bf16.msra.mxu0 %v4452
  %5398 = vmatprep.subr.bf16.mxu0 %v4447
  %5399 = vmatpush1.bf16.msra.mxu0 %v4446
  %5400 = vmatprep.subr.bf16.mxu0 %v4537
  %5401 = vmatpush2.bf16.msra.mxu0 %v4536
  %5402 = vmatprep.subr.bf16.mxu0 %v4531
  %5403 = vmatpush2.bf16.msra.mxu0 %v4530
  %5404 = vmatprep.subr.bf16.mxu0 %v4525
  %5405 = vmatpush2.bf16.msra.mxu0 %v4524
  %5406 = vmatprep.subr.bf16.mxu0 %v4519
  %5407 = vmatpush2.bf16.msra.mxu0 %v4518
  %5408 = vmatprep.subr.bf16.mxu0 %v4513
  %5409 = vmatpush2.bf16.msra.mxu0 %v4512
  %5410 = vmatprep.subr.bf16.mxu0 %v4507
  %5411 = vmatpush2.bf16.msra.mxu0 %v4506
  %5412 = vmatprep.subr.bf16.mxu0 %v4501
  %5413 = vmatpush2.bf16.msra.mxu0 %v4500
  %5414 = vmatprep.subr.bf16.mxu0 %v4495
  %5415 = vmatpush2.bf16.msra.mxu0 %v4494
  %5416 = vmatprep.mubr.bf16.mxu0 %v3277
  %5417 = vmatmul.mubr.bf16.gmra.mxu0 %v3276
  %v5418 = vpop.f32.mrf.mxu0
  %v5419 = vadd.f32 %v3233, %v5418
  %v5420 = vpop.f32.mrf.mxu0
  %v5421 = vadd.f32 %v3237, %v5420
  %v5422 = vpop.f32.mrf.mxu0
  %v5423 = vadd.f32 %v3233, %v5422
  %v5424 = vpop.f32.mrf.mxu0
  %v5425 = vadd.f32 %v3237, %v5424
  %5426 = vdwg.mxu0
  %5427 = vmatprep.subr.bf16.mxu0 %v4585
  %5428 = vmatpush1.bf16.msra.mxu0 %v4584
  %5429 = vmatprep.subr.bf16.mxu0 %v4579
  %5430 = vmatpush1.bf16.msra.mxu0 %v4578
  %5431 = vmatprep.subr.bf16.mxu0 %v4573
  %5432 = vmatpush1.bf16.msra.mxu0 %v4572
  %5433 = vmatprep.subr.bf16.mxu0 %v4567
  %5434 = vmatpush1.bf16.msra.mxu0 %v4566
  %5435 = vmatprep.subr.bf16.mxu0 %v4561
  %5436 = vmatpush1.bf16.msra.mxu0 %v4560
  %5437 = vmatprep.subr.bf16.mxu0 %v4555
  %5438 = vmatpush1.bf16.msra.mxu0 %v4554
  %5439 = vmatprep.subr.bf16.mxu0 %v4549
  %5440 = vmatpush1.bf16.msra.mxu0 %v4548
  %5441 = vmatprep.subr.bf16.mxu0 %v4543
  %5442 = vmatpush1.bf16.msra.mxu0 %v4542
  %5443 = vmatprep.subr.bf16.mxu0 %v4633
  %5444 = vmatpush2.bf16.msra.mxu0 %v4632
  %5445 = vmatprep.subr.bf16.mxu0 %v4627
  %5446 = vmatpush2.bf16.msra.mxu0 %v4626
  %5447 = vmatprep.subr.bf16.mxu0 %v4621
  %5448 = vmatpush2.bf16.msra.mxu0 %v4620
  %5449 = vmatprep.subr.bf16.mxu0 %v4615
  %5450 = vmatpush2.bf16.msra.mxu0 %v4614
  %5451 = vmatprep.subr.bf16.mxu0 %v4609
  %5452 = vmatpush2.bf16.msra.mxu0 %v4608
  %5453 = vmatprep.subr.bf16.mxu0 %v4603
  %5454 = vmatpush2.bf16.msra.mxu0 %v4602
  %5455 = vmatprep.subr.bf16.mxu0 %v4597
  %5456 = vmatpush2.bf16.msra.mxu0 %v4596
  %5457 = vmatprep.subr.bf16.mxu0 %v4591
  %5458 = vmatpush2.bf16.msra.mxu0 %v4590
  %5459 = vmatprep.mubr.bf16.mxu0 %v3279
  %5460 = vmatmul.mubr.bf16.gmra.mxu0 %v3278
  %v5461 = vpop.f32.mrf.mxu0
  %v5462 = vadd.f32 %v5419, %v5461
  %v5463 = vpop.f32.mrf.mxu0
  %v5464 = vadd.f32 %v5421, %v5463
  %v5465 = vpop.f32.mrf.mxu0
  %v5466 = vadd.f32 %v5423, %v5465
  %v5467 = vpop.f32.mrf.mxu0
  %v5468 = vadd.f32 %v5425, %v5467
  %5469 = vdwg.mxu0
  %5470 = vmatprep.subr.bf16.mxu0 %v4681
  %5471 = vmatpush1.bf16.msra.mxu0 %v4680
  %5472 = vmatprep.subr.bf16.mxu0 %v4675
  %5473 = vmatpush1.bf16.msra.mxu0 %v4674
  %5474 = vmatprep.subr.bf16.mxu0 %v4669
  %5475 = vmatpush1.bf16.msra.mxu0 %v4668
  %5476 = vmatprep.subr.bf16.mxu0 %v4663
  %5477 = vmatpush1.bf16.msra.mxu0 %v4662
  %5478 = vmatprep.subr.bf16.mxu0 %v4657
  %5479 = vmatpush1.bf16.msra.mxu0 %v4656
  %5480 = vmatprep.subr.bf16.mxu0 %v4651
  %5481 = vmatpush1.bf16.msra.mxu0 %v4650
  %5482 = vmatprep.subr.bf16.mxu0 %v4645
  %5483 = vmatpush1.bf16.msra.mxu0 %v4644
  %5484 = vmatprep.subr.bf16.mxu0 %v4639
  %5485 = vmatpush1.bf16.msra.mxu0 %v4638
  %5486 = vmatprep.subr.bf16.mxu0 %v4729
  %5487 = vmatpush2.bf16.msra.mxu0 %v4728
  %5488 = vmatprep.subr.bf16.mxu0 %v4723
  %5489 = vmatpush2.bf16.msra.mxu0 %v4722
  %5490 = vmatprep.subr.bf16.mxu0 %v4717
  %5491 = vmatpush2.bf16.msra.mxu0 %v4716
  %5492 = vmatprep.subr.bf16.mxu0 %v4711
  %5493 = vmatpush2.bf16.msra.mxu0 %v4710
  %5494 = vmatprep.subr.bf16.mxu0 %v4705
  %5495 = vmatpush2.bf16.msra.mxu0 %v4704
  %5496 = vmatprep.subr.bf16.mxu0 %v4699
  %5497 = vmatpush2.bf16.msra.mxu0 %v4698
  %5498 = vmatprep.subr.bf16.mxu0 %v4693
  %5499 = vmatpush2.bf16.msra.mxu0 %v4692
  %5500 = vmatprep.subr.bf16.mxu0 %v4687
  %5501 = vmatpush2.bf16.msra.mxu0 %v4686
  %5502 = vmatprep.mubr.bf16.mxu0 %v3281
  %5503 = vmatmul.mubr.bf16.gmra.mxu0 %v3280
  %v5504 = vpop.f32.mrf.mxu0
  %v5505 = vadd.f32 %v5462, %v5504
  %v5506 = vpop.f32.mrf.mxu0
  %v5507 = vadd.f32 %v5464, %v5506
  %v5508 = vpop.f32.mrf.mxu0
  %v5509 = vadd.f32 %v5466, %v5508
  %v5510 = vpop.f32.mrf.mxu0
  %v5511 = vadd.f32 %v5468, %v5510
  %5512 = vdwg.mxu0
  %5513 = vmatprep.subr.bf16.mxu0 %v4777
  %5514 = vmatpush1.bf16.msra.mxu0 %v4776
  %5515 = vmatprep.subr.bf16.mxu0 %v4771
  %5516 = vmatpush1.bf16.msra.mxu0 %v4770
  %5517 = vmatprep.subr.bf16.mxu0 %v4765
  %5518 = vmatpush1.bf16.msra.mxu0 %v4764
  %5519 = vmatprep.subr.bf16.mxu0 %v4759
  %5520 = vmatpush1.bf16.msra.mxu0 %v4758
  %5521 = vmatprep.subr.bf16.mxu0 %v4753
  %5522 = vmatpush1.bf16.msra.mxu0 %v4752
  %5523 = vmatprep.subr.bf16.mxu0 %v4747
  %5524 = vmatpush1.bf16.msra.mxu0 %v4746
  %5525 = vmatprep.subr.bf16.mxu0 %v4741
  %5526 = vmatpush1.bf16.msra.mxu0 %v4740
  %5527 = vmatprep.subr.bf16.mxu0 %v4735
  %5528 = vmatpush1.bf16.msra.mxu0 %v4734
  %5529 = vmatprep.subr.bf16.mxu0 %v4825
  %5530 = vmatpush2.bf16.msra.mxu0 %v4824
  %5531 = vmatprep.subr.bf16.mxu0 %v4819
  %5532 = vmatpush2.bf16.msra.mxu0 %v4818
  %5533 = vmatprep.subr.bf16.mxu0 %v4813
  %5534 = vmatpush2.bf16.msra.mxu0 %v4812
  %5535 = vmatprep.subr.bf16.mxu0 %v4807
  %5536 = vmatpush2.bf16.msra.mxu0 %v4806
  %5537 = vmatprep.subr.bf16.mxu0 %v4801
  %5538 = vmatpush2.bf16.msra.mxu0 %v4800
  %5539 = vmatprep.subr.bf16.mxu0 %v4795
  %5540 = vmatpush2.bf16.msra.mxu0 %v4794
  %5541 = vmatprep.subr.bf16.mxu0 %v4789
  %5542 = vmatpush2.bf16.msra.mxu0 %v4788
  %5543 = vmatprep.subr.bf16.mxu0 %v4783
  %5544 = vmatpush2.bf16.msra.mxu0 %v4782
  %5545 = vmatprep.mubr.bf16.mxu0 %v3283
  %5546 = vmatmul.mubr.bf16.gmra.mxu0 %v3282
  %v5547 = vpop.f32.mrf.mxu0
  %v5548 = vadd.f32 %v5505, %v5547
  %v5549 = vpop.f32.mrf.mxu0
  %v5550 = vadd.f32 %v5507, %v5549
  %v5551 = vpop.f32.mrf.mxu0
  %v5552 = vadd.f32 %v5509, %v5551
  %v5553 = vpop.f32.mrf.mxu0
  %v5554 = vadd.f32 %v5511, %v5553
  %5555 = vdwg.mxu0
  %5556 = vmatprep.subr.bf16.mxu0 %v4491
  %5557 = vmatpush1.bf16.msra.mxu0 %v4490
  %5558 = vmatprep.subr.bf16.mxu0 %v4485
  %5559 = vmatpush1.bf16.msra.mxu0 %v4484
  %5560 = vmatprep.subr.bf16.mxu0 %v4479
  %5561 = vmatpush1.bf16.msra.mxu0 %v4478
  %5562 = vmatprep.subr.bf16.mxu0 %v4473
  %5563 = vmatpush1.bf16.msra.mxu0 %v4472
  %5564 = vmatprep.subr.bf16.mxu0 %v4467
  %5565 = vmatpush1.bf16.msra.mxu0 %v4466
  %5566 = vmatprep.subr.bf16.mxu0 %v4461
  %5567 = vmatpush1.bf16.msra.mxu0 %v4460
  %5568 = vmatprep.subr.bf16.mxu0 %v4455
  %5569 = vmatpush1.bf16.msra.mxu0 %v4454
  %5570 = vmatprep.subr.bf16.mxu0 %v4449
  %5571 = vmatpush1.bf16.msra.mxu0 %v4448
  %5572 = vmatprep.subr.bf16.mxu0 %v4539
  %5573 = vmatpush2.bf16.msra.mxu0 %v4538
  %5574 = vmatprep.subr.bf16.mxu0 %v4533
  %5575 = vmatpush2.bf16.msra.mxu0 %v4532
  %5576 = vmatprep.subr.bf16.mxu0 %v4527
  %5577 = vmatpush2.bf16.msra.mxu0 %v4526
  %5578 = vmatprep.subr.bf16.mxu0 %v4521
  %5579 = vmatpush2.bf16.msra.mxu0 %v4520
  %5580 = vmatprep.subr.bf16.mxu0 %v4515
  %5581 = vmatpush2.bf16.msra.mxu0 %v4514
  %5582 = vmatprep.subr.bf16.mxu0 %v4509
  %5583 = vmatpush2.bf16.msra.mxu0 %v4508
  %5584 = vmatprep.subr.bf16.mxu0 %v4503
  %5585 = vmatpush2.bf16.msra.mxu0 %v4502
  %5586 = vmatprep.subr.bf16.mxu0 %v4497
  %5587 = vmatpush2.bf16.msra.mxu0 %v4496
  %5588 = vmatprep.mubr.bf16.mxu0 %v3277
  %5589 = vmatmul.mubr.bf16.gmra.mxu0 %v3276
  %v5590 = vpop.f32.mrf.mxu0
  %v5591 = vadd.f32 %v3241, %v5590
  %v5592 = vpop.f32.mrf.mxu0
  %v5593 = vadd.f32 %v3245, %v5592
  %v5594 = vpop.f32.mrf.mxu0
  %v5595 = vadd.f32 %v3241, %v5594
  %v5596 = vpop.f32.mrf.mxu0
  %v5597 = vadd.f32 %v3245, %v5596
  %5598 = vdwg.mxu0
  %5599 = vmatprep.subr.bf16.mxu0 %v4587
  %5600 = vmatpush1.bf16.msra.mxu0 %v4586
  %5601 = vmatprep.subr.bf16.mxu0 %v4581
  %5602 = vmatpush1.bf16.msra.mxu0 %v4580
  %5603 = vmatprep.subr.bf16.mxu0 %v4575
  %5604 = vmatpush1.bf16.msra.mxu0 %v4574
  %5605 = vmatprep.subr.bf16.mxu0 %v4569
  %5606 = vmatpush1.bf16.msra.mxu0 %v4568
  %5607 = vmatprep.subr.bf16.mxu0 %v4563
  %5608 = vmatpush1.bf16.msra.mxu0 %v4562
  %5609 = vmatprep.subr.bf16.mxu0 %v4557
  %5610 = vmatpush1.bf16.msra.mxu0 %v4556
  %5611 = vmatprep.subr.bf16.mxu0 %v4551
  %5612 = vmatpush1.bf16.msra.mxu0 %v4550
  %5613 = vmatprep.subr.bf16.mxu0 %v4545
  %5614 = vmatpush1.bf16.msra.mxu0 %v4544
  %5615 = vmatprep.subr.bf16.mxu0 %v4635
  %5616 = vmatpush2.bf16.msra.mxu0 %v4634
  %5617 = vmatprep.subr.bf16.mxu0 %v4629
  %5618 = vmatpush2.bf16.msra.mxu0 %v4628
  %5619 = vmatprep.subr.bf16.mxu0 %v4623
  %5620 = vmatpush2.bf16.msra.mxu0 %v4622
  %5621 = vmatprep.subr.bf16.mxu0 %v4617
  %5622 = vmatpush2.bf16.msra.mxu0 %v4616
  %5623 = vmatprep.subr.bf16.mxu0 %v4611
  %5624 = vmatpush2.bf16.msra.mxu0 %v4610
  %5625 = vmatprep.subr.bf16.mxu0 %v4605
  %5626 = vmatpush2.bf16.msra.mxu0 %v4604
  %5627 = vmatprep.subr.bf16.mxu0 %v4599
  %5628 = vmatpush2.bf16.msra.mxu0 %v4598
  %5629 = vmatprep.subr.bf16.mxu0 %v4593
  %5630 = vmatpush2.bf16.msra.mxu0 %v4592
  %5631 = vmatprep.mubr.bf16.mxu0 %v3279
  %5632 = vmatmul.mubr.bf16.gmra.mxu0 %v3278
  %v5633 = vpop.f32.mrf.mxu0
  %v5634 = vadd.f32 %v5591, %v5633
  %v5635 = vpop.f32.mrf.mxu0
  %v5636 = vadd.f32 %v5593, %v5635
  %v5637 = vpop.f32.mrf.mxu0
  %v5638 = vadd.f32 %v5595, %v5637
  %v5639 = vpop.f32.mrf.mxu0
  %v5640 = vadd.f32 %v5597, %v5639
  %5641 = vdwg.mxu0
  %5642 = vmatprep.subr.bf16.mxu0 %v4683
  %5643 = vmatpush1.bf16.msra.mxu0 %v4682
  %5644 = vmatprep.subr.bf16.mxu0 %v4677
  %5645 = vmatpush1.bf16.msra.mxu0 %v4676
  %5646 = vmatprep.subr.bf16.mxu0 %v4671
  %5647 = vmatpush1.bf16.msra.mxu0 %v4670
  %5648 = vmatprep.subr.bf16.mxu0 %v4665
  %5649 = vmatpush1.bf16.msra.mxu0 %v4664
  %5650 = vmatprep.subr.bf16.mxu0 %v4659
  %5651 = vmatpush1.bf16.msra.mxu0 %v4658
  %5652 = vmatprep.subr.bf16.mxu0 %v4653
  %5653 = vmatpush1.bf16.msra.mxu0 %v4652
  %5654 = vmatprep.subr.bf16.mxu0 %v4647
  %5655 = vmatpush1.bf16.msra.mxu0 %v4646
  %5656 = vmatprep.subr.bf16.mxu0 %v4641
  %5657 = vmatpush1.bf16.msra.mxu0 %v4640
  %5658 = vmatprep.subr.bf16.mxu0 %v4731
  %5659 = vmatpush2.bf16.msra.mxu0 %v4730
  %5660 = vmatprep.subr.bf16.mxu0 %v4725
  %5661 = vmatpush2.bf16.msra.mxu0 %v4724
  %5662 = vmatprep.subr.bf16.mxu0 %v4719
  %5663 = vmatpush2.bf16.msra.mxu0 %v4718
  %5664 = vmatprep.subr.bf16.mxu0 %v4713
  %5665 = vmatpush2.bf16.msra.mxu0 %v4712
  %5666 = vmatprep.subr.bf16.mxu0 %v4707
  %5667 = vmatpush2.bf16.msra.mxu0 %v4706
  %5668 = vmatprep.subr.bf16.mxu0 %v4701
  %5669 = vmatpush2.bf16.msra.mxu0 %v4700
  %5670 = vmatprep.subr.bf16.mxu0 %v4695
  %5671 = vmatpush2.bf16.msra.mxu0 %v4694
  %5672 = vmatprep.subr.bf16.mxu0 %v4689
  %5673 = vmatpush2.bf16.msra.mxu0 %v4688
  %5674 = vmatprep.mubr.bf16.mxu0 %v3281
  %5675 = vmatmul.mubr.bf16.gmra.mxu0 %v3280
  %v5676 = vpop.f32.mrf.mxu0
  %v5677 = vadd.f32 %v5634, %v5676
  %v5678 = vpop.f32.mrf.mxu0
  %v5679 = vadd.f32 %v5636, %v5678
  %v5680 = vpop.f32.mrf.mxu0
  %v5681 = vadd.f32 %v5638, %v5680
  %v5682 = vpop.f32.mrf.mxu0
  %v5683 = vadd.f32 %v5640, %v5682
  %5684 = vdwg.mxu0
  %5685 = vmatprep.subr.bf16.mxu0 %v4779
  %5686 = vmatpush1.bf16.msra.mxu0 %v4778
  %5687 = vmatprep.subr.bf16.mxu0 %v4773
  %5688 = vmatpush1.bf16.msra.mxu0 %v4772
  %5689 = vmatprep.subr.bf16.mxu0 %v4767
  %5690 = vmatpush1.bf16.msra.mxu0 %v4766
  %5691 = vmatprep.subr.bf16.mxu0 %v4761
  %5692 = vmatpush1.bf16.msra.mxu0 %v4760
  %5693 = vmatprep.subr.bf16.mxu0 %v4755
  %5694 = vmatpush1.bf16.msra.mxu0 %v4754
  %5695 = vmatprep.subr.bf16.mxu0 %v4749
  %5696 = vmatpush1.bf16.msra.mxu0 %v4748
  %5697 = vmatprep.subr.bf16.mxu0 %v4743
  %5698 = vmatpush1.bf16.msra.mxu0 %v4742
  %5699 = vmatprep.subr.bf16.mxu0 %v4737
  %5700 = vmatpush1.bf16.msra.mxu0 %v4736
  %5701 = vmatprep.subr.bf16.mxu0 %v4827
  %5702 = vmatpush2.bf16.msra.mxu0 %v4826
  %5703 = vmatprep.subr.bf16.mxu0 %v4821
  %5704 = vmatpush2.bf16.msra.mxu0 %v4820
  %5705 = vmatprep.subr.bf16.mxu0 %v4815
  %5706 = vmatpush2.bf16.msra.mxu0 %v4814
  %5707 = vmatprep.subr.bf16.mxu0 %v4809
  %5708 = vmatpush2.bf16.msra.mxu0 %v4808
  %5709 = vmatprep.subr.bf16.mxu0 %v4803
  %5710 = vmatpush2.bf16.msra.mxu0 %v4802
  %5711 = vmatprep.subr.bf16.mxu0 %v4797
  %5712 = vmatpush2.bf16.msra.mxu0 %v4796
  %5713 = vmatprep.subr.bf16.mxu0 %v4791
  %5714 = vmatpush2.bf16.msra.mxu0 %v4790
  %5715 = vmatprep.subr.bf16.mxu0 %v4785
  %5716 = vmatpush2.bf16.msra.mxu0 %v4784
  %5717 = vmatprep.mubr.bf16.mxu0 %v3283
  %5718 = vmatmul.mubr.bf16.gmra.mxu0 %v3282
  %v5719 = vpop.f32.mrf.mxu0
  %v5720 = vadd.f32 %v5677, %v5719
  %v5721 = vpop.f32.mrf.mxu0
  %v5722 = vadd.f32 %v5679, %v5721
  %v5723 = vpop.f32.mrf.mxu0
  %v5724 = vadd.f32 %v5681, %v5723
  %v5725 = vpop.f32.mrf.mxu0
  %v5726 = vadd.f32 %v5683, %v5725
  %5727 = vdwg.mxu0
  %v5728 = vxor.u32 %v5376, 2147483648
  %v5729 = vxor.u32 %v5378, 2147483648
  %v5730 = vxor.u32 %v5548, 2147483648
  %v5731 = vxor.u32 %v5550, 2147483648
  %v5732 = vxor.u32 %v5720, 2147483648
  %v5733 = vxor.u32 %v5722, 2147483648
  %v5734 = vxor.u32 %v5380, 2147483648
  %v5735 = vxor.u32 %v5382, 2147483648
  %v5736 = vxor.u32 %v5552, 2147483648
  %v5737 = vxor.u32 %v5554, 2147483648
  %v5738 = vxor.u32 %v5724, 2147483648
  %v5739 = vxor.u32 %v5726, 2147483648
  %v5740 = vmul.f32 %v5728, 1.442695
  %v5741 = vpow.pop %v5740
  %v5742 = vmul.f32 %v5729, 1.442695
  %v5743 = vpow.pop %v5742
  %v5744 = vmul.f32 %v5730, 1.442695
  %v5745 = vpow.pop %v5744
  %v5746 = vmul.f32 %v5731, 1.442695
  %v5747 = vpow.pop %v5746
  %v5748 = vmul.f32 %v5732, 1.442695
  %v5749 = vpow.pop %v5748
  %v5750 = vmul.f32 %v5733, 1.442695
  %v5751 = vpow.pop %v5750
  %v5752 = vmul.f32 %v5734, 1.442695
  %v5753 = vpow.pop %v5752
  %v5754 = vmul.f32 %v5735, 1.442695
  %v5755 = vpow.pop %v5754
  %v5756 = vmul.f32 %v5736, 1.442695
  %v5757 = vpow.pop %v5756
  %v5758 = vmul.f32 %v5737, 1.442695
  %v5759 = vpow.pop %v5758
  %v5760 = vmul.f32 %v5738, 1.442695
  %v5761 = vpow.pop %v5760
  %v5762 = vmul.f32 %v5739, 1.442695
  %v5763 = vpow.pop %v5762
  %v5764 = vadd.f32 %v5741, 1.0
  %v5765 = vadd.f32 %v5743, 1.0
  %v5766 = vadd.f32 %v5745, 1.0
  %v5767 = vadd.f32 %v5747, 1.0
  %v5768 = vadd.f32 %v5749, 1.0
  %v5769 = vadd.f32 %v5751, 1.0
  %v5770 = vadd.f32 %v5753, 1.0
  %v5771 = vadd.f32 %v5755, 1.0
  %v5772 = vadd.f32 %v5757, 1.0
  %v5773 = vadd.f32 %v5759, 1.0
  %v5774 = vadd.f32 %v5761, 1.0
  %v5775 = vadd.f32 %v5763, 1.0
  %v5776 = vrcp.pop %v5764
  %v5777 = vmul.f32 1.0, %v5776
  %v5778 = vrcp.pop %v5765
  %v5779 = vmul.f32 1.0, %v5778
  %v5780 = vrcp.pop %v5766
  %v5781 = vmul.f32 1.0, %v5780
  %v5782 = vrcp.pop %v5767
  %v5783 = vmul.f32 1.0, %v5782
  %v5784 = vrcp.pop %v5768
  %v5785 = vmul.f32 1.0, %v5784
  %v5786 = vrcp.pop %v5769
  %v5787 = vmul.f32 1.0, %v5786
  %v5788 = vrcp.pop %v5770
  %v5789 = vmul.f32 1.0, %v5788
  %v5790 = vrcp.pop %v5771
  %v5791 = vmul.f32 1.0, %v5790
  %v5792 = vrcp.pop %v5772
  %v5793 = vmul.f32 1.0, %v5792
  %v5794 = vrcp.pop %v5773
  %v5795 = vmul.f32 1.0, %v5794
  %v5796 = vrcp.pop %v5774
  %v5797 = vmul.f32 1.0, %v5796
  %v5798 = vrcp.pop %v5775
  %v5799 = vmul.f32 1.0, %v5798
  %5800 = vst [vmem:[%s7] sm:$0xff] %v5777
  %5801 = vst [vmem:[%s7 + $0x8] sm:$0xff] %v5779
  %5802 = vst [vmem:[%s7 + $0x10] sm:$0xff] %v5781
  %5803 = vst [vmem:[%s7 + $0x18] sm:$0xff] %v5783
  %5804 = vst [vmem:[%s7 + $0x20] sm:$0xff] %v5785
  %5805 = vst [vmem:[%s7 + $0x28] sm:$0xff] %v5787
  %5806 = vst [vmem:[%s7 + $0x30] sm:$0xff] %v5789
  %5807 = vst [vmem:[%s7 + $0x38] sm:$0xff] %v5791
  %5808 = vst [vmem:[%s7 + $0x40] sm:$0xff] %v5793
  %5809 = vst [vmem:[%s7 + $0x48] sm:$0xff] %v5795
  %5810 = vst [vmem:[%s7 + $0x50] sm:$0xff] %v5797
  %5811 = vst [vmem:[%s7 + $0x58] sm:$0xff] %v5799
  // Predicated region
  $region34: #{image_decoder_forward.1} parent=0 // pred_check
    _
  $region35: #{image_decoder_forward.1} parent=0 // pred_check_branch
    %5813 = sbr.rel (0) target = $region37
  $region36: #{image_decoder_forward.1} parent=0 // pred_region
    _
  $region37: #{image_decoder_forward.1} parent=0 // pred_fallthru
    _
  // Predicated region
  $region38: #{image_decoder_forward.1} parent=0 // pred_check
    _
  $region39: #{image_decoder_forward.1} parent=0 // pred_check_branch
    %5815 = sbr.rel (0) target = $region41
  $region40: #{image_decoder_forward.1} parent=0 // pred_region
    _
  $region41: #{image_decoder_forward.1} parent=0 // pred_fallthru
    _

</llo_original>
